<compile_context>
chip_gen: v7x
topology: tpu7x:2x2x1
jax: 0.10.0
libtpu: 0.0.40
codegen_flags: <defaults>
</compile_context>

<pallas_src>
import functools

import jax
import jax.numpy as jnp
from jax.experimental import pallas as pl
from jax.experimental.pallas import tpu as pltpu

EPS = 1e-5            # nn.BatchNorm2d default eps
LANE = 128            # pad Cout / contraction dims to this (lane-dense tiles)
TILE_M = 512          # rows (N*Ho*Wo) per grid step


def _round_up(x, m):
    return (x + m - 1) // m * m


# ----------------------------- Pallas kernels ------------------------------
# Pass 1: conv-as-matmul on the MXU (bf16 operands, f32 accumulation) plus
# per-channel sum / sum-of-squares accumulated across the M grid axis.
# The sublane reductions go to the XLU, a different bundle slot than the MXU,
# so they ride along nearly free.

def _mm_stats_kernel(p_ref, w_ref, y_ref, sum_ref, sq_ref):
    @pl.when(pl.program_id(0) == 0)
    def _init():
        sum_ref[...] = jnp.zeros_like(sum_ref)
        sq_ref[...] = jnp.zeros_like(sq_ref)

    y = jnp.dot(p_ref[...], w_ref[...], preferred_element_type=jnp.float32)
    y_ref[...] = y.astype(y_ref.dtype)               # pre-BN activation
    sum_ref[...] += jnp.sum(y, axis=0, keepdims=True)
    sq_ref[...] += jnp.sum(y * y, axis=0, keepdims=True)


def _mm_stats_fused_kernel(p_ref, w_ref, psc_ref, wsc_ref,
                           y_ref, ysc_ref, sum_ref, sq_ref, sumsc_ref, sqsc_ref):
    # conv2 matmul + fused 1x1 projection-shortcut matmul over the same row
    # tile (the second matmul rides the already-loaded rows).
    @pl.when(pl.program_id(0) == 0)
    def _init():
        for r in (sum_ref, sq_ref, sumsc_ref, sqsc_ref):
            r[...] = jnp.zeros_like(r)

    y = jnp.dot(p_ref[...], w_ref[...], preferred_element_type=jnp.float32)
    ysc = jnp.dot(psc_ref[...], wsc_ref[...], preferred_element_type=jnp.float32)
    y_ref[...] = y.astype(y_ref.dtype)
    ysc_ref[...] = ysc.astype(ysc_ref.dtype)
    sum_ref[...] += jnp.sum(y, axis=0, keepdims=True)
    sq_ref[...] += jnp.sum(y * y, axis=0, keepdims=True)
    sumsc_ref[...] += jnp.sum(ysc, axis=0, keepdims=True)
    sqsc_ref[...] += jnp.sum(ysc * ysc, axis=0, keepdims=True)


# Pass 2: BatchNorm folded to one per-channel FMA (+ ReLU / residual add).

def _scale_shift_kernel(y_ref, s_ref, t_ref, o_ref, *, relu):
    y = y_ref[...].astype(jnp.float32) * s_ref[...] + t_ref[...]
    if relu:
        y = jnp.maximum(y, 0.0)
    o_ref[...] = y.astype(o_ref.dtype)


def _scale_shift_add_relu_kernel(y_ref, s1_ref, t1_ref, r_ref, s2_ref, t2_ref,
                                 o_ref):
    y = y_ref[...].astype(jnp.float32) * s1_ref[...] + t1_ref[...]
    r = r_ref[...].astype(jnp.float32) * s2_ref[...] + t2_ref[...]
    o_ref[...] = jnp.maximum(y + r, 0.0).astype(o_ref.dtype)


def _scale_shift_add_relu_id_kernel(y_ref, s_ref, t_ref, r_ref, o_ref):
    # Identity shortcut: residual added raw (no per-channel FMA on it).
    y = y_ref[...].astype(jnp.float32) * s_ref[...] + t_ref[...]
    o_ref[...] = jnp.maximum(y + r_ref[...].astype(jnp.float32), 0.0
                             ).astype(o_ref.dtype)


# ----------------------------- pallas_call wrappers -------------------------

def _tiled(tile_m, cols):
    return pl.BlockSpec((tile_m, cols), lambda i: (i, 0))


def _whole(rows, cols):
    return pl.BlockSpec((rows, cols), lambda i: (0, 0))


def _matmul_stats(patches, w_mat, tile_m, *, y_dtype=jnp.float32):
    m_pad, kp = patches.shape
    cp = w_mat.shape[1]
    stat = jax.ShapeDtypeStruct((1, cp), jnp.float32)
    return pl.pallas_call(
        _mm_stats_kernel,
        grid=(m_pad // tile_m,),
        in_specs=[_tiled(tile_m, kp), _whole(kp, cp)],
        out_specs=[_tiled(tile_m, cp), _whole(1, cp), _whole(1, cp)],
        out_shape=[jax.ShapeDtypeStruct((m_pad, cp), y_dtype), stat, stat],
        compiler_params=pltpu.CompilerParams(
            dimension_semantics=("arbitrary",)),      # stats accumulate over M
    )(patches, w_mat)


def _matmul_stats_fused(p2, w2, psc, wsc, tile_m):
    m_pad, k2p = p2.shape
    kscp = psc.shape[1]
    cp = w2.shape[1]
    stat = jax.ShapeDtypeStruct((1, cp), jnp.float32)
    ybuf = jax.ShapeDtypeStruct((m_pad, cp), jnp.float32)
    return pl.pallas_call(
        _mm_stats_fused_kernel,
        grid=(m_pad // tile_m,),
        in_specs=[_tiled(tile_m, k2p), _whole(k2p, cp),
                  _tiled(tile_m, kscp), _whole(kscp, cp)],
        out_specs=[_tiled(tile_m, cp), _tiled(tile_m, cp),
                   _whole(1, cp), _whole(1, cp), _whole(1, cp), _whole(1, cp)],
        out_shape=[ybuf, ybuf, stat, stat, stat, stat],
        compiler_params=pltpu.CompilerParams(
            dimension_semantics=("arbitrary",)),
    )(p2, w2, psc, wsc)


def _apply_bn(y, scale, shift, tile_m, *, relu, out_dtype=jnp.float32):
    m_pad, cp = y.shape
    return pl.pallas_call(
        functools.partial(_scale_shift_kernel, relu=relu),
        grid=(m_pad // tile_m,),
        in_specs=[_tiled(tile_m, cp), _whole(1, cp), _whole(1, cp)],
        out_specs=_tiled(tile_m, cp),
        out_shape=jax.ShapeDtypeStruct((m_pad, cp), out_dtype),
        compiler_params=pltpu.CompilerParams(
            dimension_semantics=("parallel",)),       # shards across v7x's 2 TCs
    )(y, scale, shift)


def _apply_bn_add_relu(y, s1, t1, res, s2, t2, tile_m):
    m_pad, cp = y.shape
    return pl.pallas_call(
        _scale_shift_add_relu_kernel,
        grid=(m_pad // tile_m,),
        in_specs=[_tiled(tile_m, cp), _whole(1, cp), _whole(1, cp),
                  _tiled(tile_m, cp), _whole(1, cp), _whole(1, cp)],
        out_specs=_tiled(tile_m, cp),
        out_shape=jax.ShapeDtypeStruct((m_pad, cp), jnp.float32),
        compiler_params=pltpu.CompilerParams(
            dimension_semantics=("parallel",)),
    )(y, s1, t1, res, s2, t2)


def _apply_bn_add_relu_identity(y, s1, t1, res, tile_m):
    m_pad, cp = y.shape
    return pl.pallas_call(
        _scale_shift_add_relu_id_kernel,
        grid=(m_pad // tile_m,),
        in_specs=[_tiled(tile_m, cp), _whole(1, cp), _whole(1, cp),
                  _tiled(tile_m, cp)],
        out_specs=_tiled(tile_m, cp),
        out_shape=jax.ShapeDtypeStruct((m_pad, cp), jnp.float32),
        compiler_params=pltpu.CompilerParams(
            dimension_semantics=("parallel",)),
    )(y, s1, t1, res)


# ------------------------------- JAX glue ----------------------------------

def _im2col(x_nhwc, ksize, stride, padding):
    n, h, w, c = x_nhwc.shape
    xp = jnp.pad(x_nhwc, ((0, 0), (padding, padding), (padding, padding), (0, 0)))
    ho = (h + 2 * padding - ksize) // stride + 1
    wo = (w + 2 * padding - ksize) // stride + 1
    cols = []
    for dy in range(ksize):
        for dx in range(ksize):
            cols.append(xp[:, dy:dy + stride * ho:stride, dx:dx + stride * wo:stride, :])
    patches = jnp.concatenate(cols, axis=-1)  # (N, Ho, Wo, K*K*C), order (dy, dx, c)
    return patches.reshape(n * ho * wo, ksize * ksize * c), (n, ho, wo)


def _pad_cast(mat, rows, cols, dtype):
    r, c = mat.shape
    return jnp.pad(mat, ((0, rows - r), (0, cols - c))).astype(dtype)


def _w_mat(w_oihw, kp, cp):
    # (Cout, Cin, Kh, Kw) -> (Kh*Kw*Cin, Cout), matching im2col's (dy, dx, c)
    # order; zero-padded to (kp, cp) and cast to bf16 for the MXU.
    co, ci, kh, kw = w_oihw.shape
    m = jnp.transpose(w_oihw, (2, 3, 1, 0)).reshape(kh * kw * ci, co)
    return _pad_cast(m.astype(jnp.float32), kp, cp, jnp.bfloat16)


def _bn_fold(s, sq, m_true, gamma, beta):
    # Fold training-mode BatchNorm (biased variance) into per-channel scale/shift.
    cp = s.shape[1]
    c = gamma.shape[0]
    mean = s / m_true
    var = jnp.maximum(sq / m_true - mean * mean, 0.0)
    g = jnp.pad(gamma.astype(jnp.float32), (0, cp - c)).reshape(1, cp)
    b = jnp.pad(beta.astype(jnp.float32), (0, cp - c)).reshape(1, cp)
    scale = g * jax.lax.rsqrt(var + EPS)
    shift = b - mean * scale
    return scale, shift


@functools.partial(jax.jit, static_argnames="stride")
def residual_block_forward(x_nchw, params, stride=1):
    # NOTE: conv biases are intentionally ignored: a per-channel constant added
    # before training-mode BN cancels exactly in the mean subtraction, so
    # dropping it is output-preserving dead-compute removal.
    x = jnp.transpose(x_nchw, (0, 2, 3, 1)).astype(jnp.float32)   # -> NHWC
    n, h, w, cin = x.shape
    cout = params["conv1_w"].shape[0]
    cp = _round_up(cout, LANE)

    # conv1 (3x3, stride, pad 1) + bn1 + relu
    p1, (_, ho, wo) = _im2col(x, 3, stride, 1)
    m = n * ho * wo
    tile_m = min(TILE_M, _round_up(m, 16))
    m_pad = _round_up(m, tile_m)
    k1p = _round_up(p1.shape[1], LANE)
    # y1 (pre-BN) emitted in bf16: stats are taken from the exact f32 MXU
    # accumulator in-kernel, and y1 only feeds bf16 consumers downstream.
    y1, s1sum, s1sq = _matmul_stats(_pad_cast(p1, m_pad, k1p, jnp.bfloat16),
                                    _w_mat(params["conv1_w"], k1p, cp), tile_m,
                                    y_dtype=jnp.bfloat16)
    sc1, sh1 = _bn_fold(s1sum, s1sq, m, params["bn1_gamma"], params["bn1_beta"])
    # out1 emitted in bf16: it only feeds conv2's (already bf16) MXU operands.
    out1 = _apply_bn(y1, sc1, sh1, tile_m, relu=True, out_dtype=jnp.bfloat16)

    # conv2 patches (3x3, stride 1, pad 1) built from out1
    out1_nhwc = out1[:m, :cout].reshape(n, ho, wo, cout)
    p2, _ = _im2col(out1_nhwc, 3, 1, 1)
    k2p = _round_up(p2.shape[1], LANE)
    p2b = _pad_cast(p2, m_pad, k2p, jnp.bfloat16)
    w2 = _w_mat(params["conv2_w"], k2p, cp)

    if stride != 1 or cin != cout:
        # Projection shortcut: 1x1 conv + BN fused into conv2's two passes.
        psc = x[:, ::stride, ::stride, :].reshape(m, cin)
        kscp = _round_up(cin, LANE)
        y2, ysc, s2sum, s2sq, scsum, scsq = _matmul_stats_fused(
            p2b, w2,
            _pad_cast(psc, m_pad, kscp, jnp.bfloat16),
            _w_mat(params["sc_w"], kscp, cp), tile_m)
        sc2, sh2 = _bn_fold(s2sum, s2sq, m, params["bn2_gamma"], params["bn2_beta"])
        scs, shs = _bn_fold(scsum, scsq, m, params["bn_sc_gamma"], params["bn_sc_beta"])
        out = _apply_bn_add_relu(y2, sc2, sh2, ysc, scs, shs, tile_m)
    else:
        # Identity shortcut: residual is x itself, added raw.
        y2, s2sum, s2sq = _matmul_stats(p2b, w2, tile_m)
        sc2, sh2 = _bn_fold(s2sum, s2sq, m, params["bn2_gamma"], params["bn2_beta"])
        res = _pad_cast(x.reshape(m, cin), m_pad, cp, jnp.float32)
        out = _apply_bn_add_relu_identity(y2, sc2, sh2, res, tile_m)

    out_nhwc = out[:m, :cout].reshape(n, ho, wo, cout)
    return jnp.transpose(out_nhwc, (0, 3, 1, 2))  # -> NCHW


# --------------------------- pure-JAX reference -----------------------------

def _ref_forward(x_nchw, params, stride=1):
    def conv(x, w, b, s, p):
        y = jax.lax.conv_general_dilated(
            x, w, (s, s), [(p, p), (p, p)],
            dimension_numbers=("NCHW", "OIHW", "NCHW"),
            precision=jax.lax.Precision.HIGHEST)
        return y + b.reshape(1, -1, 1, 1)

    def bn(y, g, bt):
        mean = y.mean(axis=(0, 2, 3), keepdims=True)
        var = jnp.square(y - mean).mean(axis=(0, 2, 3), keepdims=True)
        return (y - mean) * jax.lax.rsqrt(var + EPS) * g.reshape(1, -1, 1, 1) \
               + bt.reshape(1, -1, 1, 1)

    out = jax.nn.relu(bn(conv(x_nchw, params["conv1_w"], params["conv1_b"], stride, 1),
                         params["bn1_gamma"], params["bn1_beta"]))
    out = bn(conv(out, params["conv2_w"], params["conv2_b"], 1, 1),
             params["bn2_gamma"], params["bn2_beta"])
    cin = x_nchw.shape[1]
    cout = params["conv1_w"].shape[0]
    if stride != 1 or cin != cout:
        sc = bn(conv(x_nchw, params["sc_w"], params["sc_b"], stride, 0),
                params["bn_sc_gamma"], params["bn_sc_beta"])
    else:
        sc = x_nchw
    return jax.nn.relu(out + sc)


# ---------------------------------- main ------------------------------------

def make_params(key, cin, cout, stride):
    ks = jax.random.split(key, 6)
    params = {
        "conv1_w": 0.1 * jax.random.normal(ks[0], (cout, cin, 3, 3), jnp.float32),
        "conv1_b": 0.1 * jax.random.normal(ks[1], (cout,), jnp.float32),
        "bn1_gamma": jnp.ones((cout,), jnp.float32),
        "bn1_beta": jnp.zeros((cout,), jnp.float32),
        "conv2_w": 0.1 * jax.random.normal(ks[2], (cout, cout, 3, 3), jnp.float32),
        "conv2_b": 0.1 * jax.random.normal(ks[3], (cout,), jnp.float32),
        "bn2_gamma": jnp.ones((cout,), jnp.float32),
        "bn2_beta": jnp.zeros((cout,), jnp.float32),
    }
    if stride != 1 or cin != cout:
        params.update({
            "sc_w": 0.1 * jax.random.normal(ks[4], (cout, cin, 1, 1), jnp.float32),
            "sc_b": 0.1 * jax.random.normal(ks[5], (cout,), jnp.float32),
            "bn_sc_gamma": jnp.ones((cout,), jnp.float32),
            "bn_sc_beta": jnp.zeros((cout,), jnp.float32),
        })
    return params


if __name__ == "__main__":
    key = jax.random.PRNGKey(0)
    kx1, kp1, kx2, kp2 = jax.random.split(key, 4)

    # bf16 MXU operands (per perf guidance) vs a float32 reference -> relaxed tol.
    RTOL = ATOL = 2e-2

    # Case 1: projection shortcut (cin != cout) -- exercises the fused 1x1 path.
    N, CIN, COUT, H, W, STRIDE = 2, 4, 8, 16, 16, 1
    x1 = jax.random.normal(kx1, (N, CIN, H, W), jnp.float32)
    params1 = make_params(kp1, CIN, COUT, STRIDE)
    out1 = jax.block_until_ready(residual_block_forward(x1, params1, stride=STRIDE))
    ref1 = jax.block_until_ready(_ref_forward(x1, params1, stride=STRIDE))
    assert out1.shape == ref1.shape == (N, COUT, H // STRIDE, W // STRIDE)
    assert jnp.allclose(out1, ref1, rtol=RTOL, atol=ATOL), \
        float(jnp.max(jnp.abs(out1 - ref1)))

    # Case 2: identity shortcut (cin == cout, stride 1).
    x2 = jax.random.normal(kx2, (N, COUT, H, W), jnp.float32)
    params2 = make_params(kp2, COUT, COUT, 1)
    out2 = jax.block_until_ready(residual_block_forward(x2, params2, stride=1))
    ref2 = jax.block_until_ready(_ref_forward(x2, params2, stride=1))
    assert out2.shape == ref2.shape == (N, COUT, H, W)
    assert jnp.allclose(out2, ref2, rtol=RTOL, atol=ATOL), \
        float(jnp.max(jnp.abs(out2 - ref2)))

    print("KERNEL_OK")
</pallas_src>

<mosaic_0001>
module attributes {stable_mosaic.version = 11 : i64} {
  func.func @_mm_stats_kernel(%arg0: i32, %arg1: memref<512x128xbf16, #tpu.memory_space<vmem>>, %arg2: memref<128x128xbf16, #tpu.memory_space<vmem>>, %arg3: memref<512x128xbf16, #tpu.memory_space<vmem>>, %arg4: memref<1x128xf32, #tpu.memory_space<vmem>>, %arg5: memref<1x128xf32, #tpu.memory_space<vmem>>) attributes {dimension_semantics = [#tpu.dimension_semantics<arbitrary>], iteration_bounds = array<i64: 1>, scalar_prefetch = 0 : i64, scratch_operands = 0 : i64, tpu.core_type = #tpu.core_type<tc>, window_params = [{transform_indices = @transform_0, window_bounds = array<i64: 512, 128>}, {pipeline_mode = #tpu.pipeline_mode<synchronous>, transform_indices = @transform_1, window_bounds = array<i64: 128, 128>}, {transform_indices = @transform_2, window_bounds = array<i64: 512, 128>}, {pipeline_mode = #tpu.pipeline_mode<synchronous>, transform_indices = @transform_3, window_bounds = array<i64: 1, 128>}, {pipeline_mode = #tpu.pipeline_mode<synchronous>, transform_indices = @transform_4, window_bounds = array<i64: 1, 128>}]} {
    %c0_i32 = arith.constant 0 : i32
    %0 = arith.cmpi eq, %arg0, %c0_i32 : i32
    %1 = arith.extui %0 : i1 to i32
    %c0_i32_0 = arith.constant 0 : i32
    %2 = arith.cmpi ne, %1, %c0_i32_0 : i32
    scf.if %2 {
      %cst_16 = arith.constant 0.000000e+00 : f32
      %19 = vector.broadcast %cst_16 : f32 to vector<1x128xf32>
      %c0_17 = arith.constant 0 : index
      %c0_18 = arith.constant 0 : index
      %20 = vector.load %arg4[%c0_17, %c0_18] : memref<1x128xf32, #tpu.memory_space<vmem>>, vector<1x128xf32>
      tpu.vector_store %arg4[%c0_17, %c0_18], %19 {strides = array<i32>} : memref<1x128xf32, #tpu.memory_space<vmem>>, vector<1x128xf32>,
      %cst_19 = arith.constant 0.000000e+00 : f32
      %21 = vector.broadcast %cst_19 : f32 to vector<1x128xf32>
      %c0_20 = arith.constant 0 : index
      %c0_21 = arith.constant 0 : index
      %22 = vector.load %arg5[%c0_20, %c0_21] : memref<1x128xf32, #tpu.memory_space<vmem>>, vector<1x128xf32>
      tpu.vector_store %arg5[%c0_20, %c0_21], %21 {strides = array<i32>} : memref<1x128xf32, #tpu.memory_space<vmem>>, vector<1x128xf32>,
    } else {
    }
    %c0 = arith.constant 0 : index
    %c0_1 = arith.constant 0 : index
    %3 = vector.load %arg1[%c0, %c0_1] : memref<512x128xbf16, #tpu.memory_space<vmem>>, vector<512x128xbf16>
    %c0_2 = arith.constant 0 : index
    %c0_3 = arith.constant 0 : index
    %4 = vector.load %arg2[%c0_2, %c0_3] : memref<128x128xbf16, #tpu.memory_space<vmem>>, vector<128x128xbf16>
    %cst = arith.constant dense<0.000000e+00> : vector<512x128xf32>
    %5 = tpu.matmul %3, %4, %cst {dimension_numbers = #tpu.dot_dimension_numbers<[1], [0], [0], [1], [0, 0, 1, 1], [], []>} : vector<512x128xbf16>, vector<128x128xbf16>, vector<512x128xf32> -> vector<512x128xf32>
    %6 = arith.truncf %5 : vector<512x128xf32> to vector<512x128xbf16>
    %c0_4 = arith.constant 0 : index
    %c0_5 = arith.constant 0 : index
    %7 = vector.load %arg3[%c0_4, %c0_5] : memref<512x128xbf16, #tpu.memory_space<vmem>>, vector<512x128xbf16>
    tpu.vector_store %arg3[%c0_4, %c0_5], %6 {strides = array<i32>} : memref<512x128xbf16, #tpu.memory_space<vmem>>, vector<512x128xbf16>,
    %c0_6 = arith.constant 0 : index
    %c0_7 = arith.constant 0 : index
    %8 = vector.load %arg4[%c0_6, %c0_7] : memref<1x128xf32, #tpu.memory_space<vmem>>, vector<1x128xf32>
    %cst_8 = arith.constant dense<0.000000e+00> : vector<128xf32>
    %9 = vector.multi_reduction <add>, %5, %cst_8 [0] : vector<512x128xf32> to vector<128xf32>
    %10 = vector.shape_cast %9 : vector<128xf32> to vector<1x128xf32>
    %11 = arith.addf %8, %10 : vector<1x128xf32>
    %c0_9 = arith.constant 0 : index
    %c0_10 = arith.constant 0 : index
    %12 = vector.load %arg4[%c0_9, %c0_10] : memref<1x128xf32, #tpu.memory_space<vmem>>, vector<1x128xf32>
    tpu.vector_store %arg4[%c0_9, %c0_10], %11 {strides = array<i32>} : memref<1x128xf32, #tpu.memory_space<vmem>>, vector<1x128xf32>,
    %c0_11 = arith.constant 0 : index
    %c0_12 = arith.constant 0 : index
    %13 = vector.load %arg5[%c0_11, %c0_12] : memref<1x128xf32, #tpu.memory_space<vmem>>, vector<1x128xf32>
    %14 = arith.mulf %5, %5 : vector<512x128xf32>
    %cst_13 = arith.constant dense<0.000000e+00> : vector<128xf32>
    %15 = vector.multi_reduction <add>, %14, %cst_13 [0] : vector<512x128xf32> to vector<128xf32>
    %16 = vector.shape_cast %15 : vector<128xf32> to vector<1x128xf32>
    %17 = arith.addf %13, %16 : vector<1x128xf32>
    %c0_14 = arith.constant 0 : index
    %c0_15 = arith.constant 0 : index
    %18 = vector.load %arg5[%c0_14, %c0_15] : memref<1x128xf32, #tpu.memory_space<vmem>>, vector<1x128xf32>
    tpu.vector_store %arg5[%c0_14, %c0_15], %17 {strides = array<i32>} : memref<1x128xf32, #tpu.memory_space<vmem>>, vector<1x128xf32>,
    return
  }
  func.func @transform_0(%arg0: i32) -> (i32, i32) {
    %c0_i32 = arith.constant 0 : i32
    %c0_i32_0 = arith.constant 0 : i32
    return %arg0, %c0_i32 : i32, i32
  }
  func.func @transform_1(%arg0: i32) -> (i32, i32) {
    %c0_i32 = arith.constant 0 : i32
    %c0_i32_0 = arith.constant 0 : i32
    %c0_i32_1 = arith.constant 0 : i32
    return %c0_i32, %c0_i32_0 : i32, i32
  }
  func.func @transform_2(%arg0: i32) -> (i32, i32) {
    %c0_i32 = arith.constant 0 : i32
    %c0_i32_0 = arith.constant 0 : i32
    return %arg0, %c0_i32 : i32, i32
  }
  func.func @transform_3(%arg0: i32) -> (i32, i32) {
    %c0_i32 = arith.constant 0 : i32
    %c0_i32_0 = arith.constant 0 : i32
    %c0_i32_1 = arith.constant 0 : i32
    return %c0_i32, %c0_i32_0 : i32, i32
  }
  func.func @transform_4(%arg0: i32) -> (i32, i32) {
    %c0_i32 = arith.constant 0 : i32
    %c0_i32_0 = arith.constant 0 : i32
    %c0_i32_1 = arith.constant 0 : i32
    return %c0_i32, %c0_i32_0 : i32, i32
  }
}

module attributes {stable_mosaic.version = 11 : i64} {
  func.func @_scale_shift_kernel(%arg0: i32, %arg1: memref<512x128xbf16, #tpu.memory_space<vmem>>, %arg2: memref<1x128xf32, #tpu.memory_space<vmem>>, %arg3: memref<1x128xf32, #tpu.memory_space<vmem>>, %arg4: memref<512x128xbf16, #tpu.memory_space<vmem>>) attributes {dimension_semantics = [#tpu.dimension_semantics<parallel>], iteration_bounds = array<i64: 1>, scalar_prefetch = 0 : i64, scratch_operands = 0 : i64, tpu.core_type = #tpu.core_type<tc>, window_params = [{transform_indices = @transform_0, window_bounds = array<i64: 512, 128>}, {pipeline_mode = #tpu.pipeline_mode<synchronous>, transform_indices = @transform_1, window_bounds = array<i64: 1, 128>}, {pipeline_mode = #tpu.pipeline_mode<synchronous>, transform_indices = @transform_2, window_bounds = array<i64: 1, 128>}, {transform_indices = @transform_3, window_bounds = array<i64: 512, 128>}]} {
    %c0 = arith.constant 0 : index
    %c0_0 = arith.constant 0 : index
    %0 = vector.load %arg1[%c0, %c0_0] : memref<512x128xbf16, #tpu.memory_space<vmem>>, vector<512x128xbf16>
    %1 = arith.extf %0 : vector<512x128xbf16> to vector<512x128xf32>
    %c0_1 = arith.constant 0 : index
    %c0_2 = arith.constant 0 : index
    %2 = vector.load %arg2[%c0_1, %c0_2] : memref<1x128xf32, #tpu.memory_space<vmem>>, vector<1x128xf32>
    %3 = vector.broadcast %2 : vector<1x128xf32> to vector<512x128xf32>
    %4 = arith.mulf %1, %3 : vector<512x128xf32>
    %c0_3 = arith.constant 0 : index
    %c0_4 = arith.constant 0 : index
    %5 = vector.load %arg3[%c0_3, %c0_4] : memref<1x128xf32, #tpu.memory_space<vmem>>, vector<1x128xf32>
    %6 = vector.broadcast %5 : vector<1x128xf32> to vector<512x128xf32>
    %7 = arith.addf %4, %6 : vector<512x128xf32>
    %cst = arith.constant 0.000000e+00 : f32
    %8 = vector.broadcast %cst : f32 to vector<512x128xf32>
    %9 = arith.maximumf %7, %8 : vector<512x128xf32>
    %10 = arith.truncf %9 : vector<512x128xf32> to vector<512x128xbf16>
    %c0_5 = arith.constant 0 : index
    %c0_6 = arith.constant 0 : index
    %11 = vector.load %arg4[%c0_5, %c0_6] : memref<512x128xbf16, #tpu.memory_space<vmem>>, vector<512x128xbf16>
    tpu.vector_store %arg4[%c0_5, %c0_6], %10 {strides = array<i32>} : memref<512x128xbf16, #tpu.memory_space<vmem>>, vector<512x128xbf16>,
    return
  }
  func.func @transform_0(%arg0: i32) -> (i32, i32) {
    %c0_i32 = arith.constant 0 : i32
    %c0_i32_0 = arith.constant 0 : i32
    return %arg0, %c0_i32 : i32, i32
  }
  func.func @transform_1(%arg0: i32) -> (i32, i32) {
    %c0_i32 = arith.constant 0 : i32
    %c0_i32_0 = arith.constant 0 : i32
    %c0_i32_1 = arith.constant 0 : i32
    return %c0_i32, %c0_i32_0 : i32, i32
  }
  func.func @transform_2(%arg0: i32) -> (i32, i32) {
    %c0_i32 = arith.constant 0 : i32
    %c0_i32_0 = arith.constant 0 : i32
    %c0_i32_1 = arith.constant 0 : i32
    return %c0_i32, %c0_i32_0 : i32, i32
  }
  func.func @transform_3(%arg0: i32) -> (i32, i32) {
    %c0_i32 = arith.constant 0 : i32
    %c0_i32_0 = arith.constant 0 : i32
    return %arg0, %c0_i32 : i32, i32
  }
}

module attributes {stable_mosaic.version = 11 : i64} {
  func.func @_mm_stats_fused_kernel(%arg0: i32, %arg1: memref<512x128xbf16, #tpu.memory_space<vmem>>, %arg2: memref<128x128xbf16, #tpu.memory_space<vmem>>, %arg3: memref<512x128xbf16, #tpu.memory_space<vmem>>, %arg4: memref<128x128xbf16, #tpu.memory_space<vmem>>, %arg5: memref<512x128xf32, #tpu.memory_space<vmem>>, %arg6: memref<512x128xf32, #tpu.memory_space<vmem>>, %arg7: memref<1x128xf32, #tpu.memory_space<vmem>>, %arg8: memref<1x128xf32, #tpu.memory_space<vmem>>, %arg9: memref<1x128xf32, #tpu.memory_space<vmem>>, %arg10: memref<1x128xf32, #tpu.memory_space<vmem>>) attributes {dimension_semantics = [#tpu.dimension_semantics<arbitrary>], iteration_bounds = array<i64: 1>, scalar_prefetch = 0 : i64, scratch_operands = 0 : i64, tpu.core_type = #tpu.core_type<tc>, window_params = [{transform_indices = @transform_0, window_bounds = array<i64: 512, 128>}, {pipeline_mode = #tpu.pipeline_mode<synchronous>, transform_indices = @transform_1, window_bounds = array<i64: 128, 128>}, {transform_indices = @transform_2, window_bounds = array<i64: 512, 128>}, {pipeline_mode = #tpu.pipeline_mode<synchronous>, transform_indices = @transform_3, window_bounds = array<i64: 128, 128>}, {transform_indices = @transform_4, window_bounds = array<i64: 512, 128>}, {transform_indices = @transform_5, window_bounds = array<i64: 512, 128>}, {pipeline_mode = #tpu.pipeline_mode<synchronous>, transform_indices = @transform_6, window_bounds = array<i64: 1, 128>}, {pipeline_mode = #tpu.pipeline_mode<synchronous>, transform_indices = @transform_7, window_bounds = array<i64: 1, 128>}, {pipeline_mode = #tpu.pipeline_mode<synchronous>, transform_indices = @transform_8, window_bounds = array<i64: 1, 128>}, {pipeline_mode = #tpu.pipeline_mode<synchronous>, transform_indices = @transform_9, window_bounds = array<i64: 1, 128>}]} {
    %c0_i32 = arith.constant 0 : i32
    %0 = arith.cmpi eq, %arg0, %c0_i32 : i32
    %1 = arith.extui %0 : i1 to i32
    %c0_i32_0 = arith.constant 0 : i32
    %2 = arith.cmpi ne, %1, %c0_i32_0 : i32
    scf.if %2 {
      %cst_33 = arith.constant 0.000000e+00 : f32
      %33 = vector.broadcast %cst_33 : f32 to vector<1x128xf32>
      %c0_34 = arith.constant 0 : index
      %c0_35 = arith.constant 0 : index
      %34 = vector.load %arg7[%c0_34, %c0_35] : memref<1x128xf32, #tpu.memory_space<vmem>>, vector<1x128xf32>
      tpu.vector_store %arg7[%c0_34, %c0_35], %33 {strides = array<i32>} : memref<1x128xf32, #tpu.memory_space<vmem>>, vector<1x128xf32>,
      %cst_36 = arith.constant 0.000000e+00 : f32
      %35 = vector.broadcast %cst_36 : f32 to vector<1x128xf32>
      %c0_37 = arith.constant 0 : index
      %c0_38 = arith.constant 0 : index
      %36 = vector.load %arg8[%c0_37, %c0_38] : memref<1x128xf32, #tpu.memory_space<vmem>>, vector<1x128xf32>
      tpu.vector_store %arg8[%c0_37, %c0_38], %35 {strides = array<i32>} : memref<1x128xf32, #tpu.memory_space<vmem>>, vector<1x128xf32>,
      %cst_39 = arith.constant 0.000000e+00 : f32
      %37 = vector.broadcast %cst_39 : f32 to vector<1x128xf32>
      %c0_40 = arith.constant 0 : index
      %c0_41 = arith.constant 0 : index
      %38 = vector.load %arg9[%c0_40, %c0_41] : memref<1x128xf32, #tpu.memory_space<vmem>>, vector<1x128xf32>
      tpu.vector_store %arg9[%c0_40, %c0_41], %37 {strides = array<i32>} : memref<1x128xf32, #tpu.memory_space<vmem>>, vector<1x128xf32>,
      %cst_42 = arith.constant 0.000000e+00 : f32
      %39 = vector.broadcast %cst_42 : f32 to vector<1x128xf32>
      %c0_43 = arith.constant 0 : index
      %c0_44 = arith.constant 0 : index
      %40 = vector.load %arg10[%c0_43, %c0_44] : memref<1x128xf32, #tpu.memory_space<vmem>>, vector<1x128xf32>
      tpu.vector_store %arg10[%c0_43, %c0_44], %39 {strides = array<i32>} : memref<1x128xf32, #tpu.memory_space<vmem>>, vector<1x128xf32>,
    } else {
    }
    %c0 = arith.constant 0 : index
    %c0_1 = arith.constant 0 : index
    %3 = vector.load %arg1[%c0, %c0_1] : memref<512x128xbf16, #tpu.memory_space<vmem>>, vector<512x128xbf16>
    %c0_2 = arith.constant 0 : index
    %c0_3 = arith.constant 0 : index
    %4 = vector.load %arg2[%c0_2, %c0_3] : memref<128x128xbf16, #tpu.memory_space<vmem>>, vector<128x128xbf16>
    %cst = arith.constant dense<0.000000e+00> : vector<512x128xf32>
    %5 = tpu.matmul %3, %4, %cst {dimension_numbers = #tpu.dot_dimension_numbers<[1], [0], [0], [1], [0, 0, 1, 1], [], []>} : vector<512x128xbf16>, vector<128x128xbf16>, vector<512x128xf32> -> vector<512x128xf32>
    %c0_4 = arith.constant 0 : index
    %c0_5 = arith.constant 0 : index
    %6 = vector.load %arg3[%c0_4, %c0_5] : memref<512x128xbf16, #tpu.memory_space<vmem>>, vector<512x128xbf16>
    %c0_6 = arith.constant 0 : index
    %c0_7 = arith.constant 0 : index
    %7 = vector.load %arg4[%c0_6, %c0_7] : memref<128x128xbf16, #tpu.memory_space<vmem>>, vector<128x128xbf16>
    %cst_8 = arith.constant dense<0.000000e+00> : vector<512x128xf32>
    %8 = tpu.matmul %6, %7, %cst_8 {dimension_numbers = #tpu.dot_dimension_numbers<[1], [0], [0], [1], [0, 0, 1, 1], [], []>} : vector<512x128xbf16>, vector<128x128xbf16>, vector<512x128xf32> -> vector<512x128xf32>
    %c0_9 = arith.constant 0 : index
    %c0_10 = arith.constant 0 : index
    %9 = vector.load %arg5[%c0_9, %c0_10] : memref<512x128xf32, #tpu.memory_space<vmem>>, vector<512x128xf32>
    tpu.vector_store %arg5[%c0_9, %c0_10], %5 {strides = array<i32>} : memref<512x128xf32, #tpu.memory_space<vmem>>, vector<512x128xf32>,
    %c0_11 = arith.constant 0 : index
    %c0_12 = arith.constant 0 : index
    %10 = vector.load %arg6[%c0_11, %c0_12] : memref<512x128xf32, #tpu.memory_space<vmem>>, vector<512x128xf32>
    tpu.vector_store %arg6[%c0_11, %c0_12], %8 {strides = array<i32>} : memref<512x128xf32, #tpu.memory_space<vmem>>, vector<512x128xf32>,
    %c0_13 = arith.constant 0 : index
    %c0_14 = arith.constant 0 : index
    %11 = vector.load %arg7[%c0_13, %c0_14] : memref<1x128xf32, #tpu.memory_space<vmem>>, vector<1x128xf32>
    %cst_15 = arith.constant dense<0.000000e+00> : vector<128xf32>
    %12 = vector.multi_reduction <add>, %5, %cst_15 [0] : vector<512x128xf32> to vector<128xf32>
    %13 = vector.shape_cast %12 : vector<128xf32> to vector<1x128xf32>
    %14 = arith.addf %11, %13 : vector<1x128xf32>
    %c0_16 = arith.constant 0 : index
    %c0_17 = arith.constant 0 : index
    %15 = vector.load %arg7[%c0_16, %c0_17] : memref<1x128xf32, #tpu.memory_space<vmem>>, vector<1x128xf32>
    tpu.vector_store %arg7[%c0_16, %c0_17], %14 {strides = array<i32>} : memref<1x128xf32, #tpu.memory_space<vmem>>, vector<1x128xf32>,
    %c0_18 = arith.constant 0 : index
    %c0_19 = arith.constant 0 : index
    %16 = vector.load %arg8[%c0_18, %c0_19] : memref<1x128xf32, #tpu.memory_space<vmem>>, vector<1x128xf32>
    %17 = arith.mulf %5, %5 : vector<512x128xf32>
    %cst_20 = arith.constant dense<0.000000e+00> : vector<128xf32>
    %18 = vector.multi_reduction <add>, %17, %cst_20 [0] : vector<512x128xf32> to vector<128xf32>
    %19 = vector.shape_cast %18 : vector<128xf32> to vector<1x128xf32>
    %20 = arith.addf %16, %19 : vector<1x128xf32>
    %c0_21 = arith.constant 0 : index
    %c0_22 = arith.constant 0 : index
    %21 = vector.load %arg8[%c0_21, %c0_22] : memref<1x128xf32, #tpu.memory_space<vmem>>, vector<1x128xf32>
    tpu.vector_store %arg8[%c0_21, %c0_22], %20 {strides = array<i32>} : memref<1x128xf32, #tpu.memory_space<vmem>>, vector<1x128xf32>,
    %c0_23 = arith.constant 0 : index
    %c0_24 = arith.constant 0 : index
    %22 = vector.load %arg9[%c0_23, %c0_24] : memref<1x128xf32, #tpu.memory_space<vmem>>, vector<1x128xf32>
    %cst_25 = arith.constant dense<0.000000e+00> : vector<128xf32>
    %23 = vector.multi_reduction <add>, %8, %cst_25 [0] : vector<512x128xf32> to vector<128xf32>
    %24 = vector.shape_cast %23 : vector<128xf32> to vector<1x128xf32>
    %25 = arith.addf %22, %24 : vector<1x128xf32>
    %c0_26 = arith.constant 0 : index
    %c0_27 = arith.constant 0 : index
    %26 = vector.load %arg9[%c0_26, %c0_27] : memref<1x128xf32, #tpu.memory_space<vmem>>, vector<1x128xf32>
    tpu.vector_store %arg9[%c0_26, %c0_27], %25 {strides = array<i32>} : memref<1x128xf32, #tpu.memory_space<vmem>>, vector<1x128xf32>,
    %c0_28 = arith.constant 0 : index
    %c0_29 = arith.constant 0 : index
    %27 = vector.load %arg10[%c0_28, %c0_29] : memref<1x128xf32, #tpu.memory_space<vmem>>, vector<1x128xf32>
    %28 = arith.mulf %8, %8 : vector<512x128xf32>
    %cst_30 = arith.constant dense<0.000000e+00> : vector<128xf32>
    %29 = vector.multi_reduction <add>, %28, %cst_30 [0] : vector<512x128xf32> to vector<128xf32>
    %30 = vector.shape_cast %29 : vector<128xf32> to vector<1x128xf32>
    %31 = arith.addf %27, %30 : vector<1x128xf32>
    %c0_31 = arith.constant 0 : index
    %c0_32 = arith.constant 0 : index
    %32 = vector.load %arg10[%c0_31, %c0_32] : memref<1x128xf32, #tpu.memory_space<vmem>>, vector<1x128xf32>
    tpu.vector_store %arg10[%c0_31, %c0_32], %31 {strides = array<i32>} : memref<1x128xf32, #tpu.memory_space<vmem>>, vector<1x128xf32>,
    return
  }
  func.func @transform_0(%arg0: i32) -> (i32, i32) {
    %c0_i32 = arith.constant 0 : i32
    %c0_i32_0 = arith.constant 0 : i32
    return %arg0, %c0_i32 : i32, i32
  }
  func.func @transform_1(%arg0: i32) -> (i32, i32) {
    %c0_i32 = arith.constant 0 : i32
    %c0_i32_0 = arith.constant 0 : i32
    %c0_i32_1 = arith.constant 0 : i32
    return %c0_i32, %c0_i32_0 : i32, i32
  }
  func.func @transform_2(%arg0: i32) -> (i32, i32) {
    %c0_i32 = arith.constant 0 : i32
    %c0_i32_0 = arith.constant 0 : i32
    return %arg0, %c0_i32 : i32, i32
  }
  func.func @transform_3(%arg0: i32) -> (i32, i32) {
    %c0_i32 = arith.constant 0 : i32
    %c0_i32_0 = arith.constant 0 : i32
    %c0_i32_1 = arith.constant 0 : i32
    return %c0_i32, %c0_i32_0 : i32, i32
  }
  func.func @transform_4(%arg0: i32) -> (i32, i32) {
    %c0_i32 = arith.constant 0 : i32
    %c0_i32_0 = arith.constant 0 : i32
    return %arg0, %c0_i32 : i32, i32
  }
  func.func @transform_5(%arg0: i32) -> (i32, i32) {
    %c0_i32 = arith.constant 0 : i32
    %c0_i32_0 = arith.constant 0 : i32
    return %arg0, %c0_i32 : i32, i32
  }
  func.func @transform_6(%arg0: i32) -> (i32, i32) {
    %c0_i32 = arith.constant 0 : i32
    %c0_i32_0 = arith.constant 0 : i32
    %c0_i32_1 = arith.constant 0 : i32
    return %c0_i32, %c0_i32_0 : i32, i32
  }
  func.func @transform_7(%arg0: i32) -> (i32, i32) {
    %c0_i32 = arith.constant 0 : i32
    %c0_i32_0 = arith.constant 0 : i32
    %c0_i32_1 = arith.constant 0 : i32
    return %c0_i32, %c0_i32_0 : i32, i32
  }
  func.func @transform_8(%arg0: i32) -> (i32, i32) {
    %c0_i32 = arith.constant 0 : i32
    %c0_i32_0 = arith.constant 0 : i32
    %c0_i32_1 = arith.constant 0 : i32
    return %c0_i32, %c0_i32_0 : i32, i32
  }
  func.func @transform_9(%arg0: i32) -> (i32, i32) {
    %c0_i32 = arith.constant 0 : i32
    %c0_i32_0 = arith.constant 0 : i32
    %c0_i32_1 = arith.constant 0 : i32
    return %c0_i32, %c0_i32_0 : i32, i32
  }
}

module attributes {stable_mosaic.version = 11 : i64} {
  func.func @_scale_shift_add_relu_kernel(%arg0: i32, %arg1: memref<512x128xf32, #tpu.memory_space<vmem>>, %arg2: memref<1x128xf32, #tpu.memory_space<vmem>>, %arg3: memref<1x128xf32, #tpu.memory_space<vmem>>, %arg4: memref<512x128xf32, #tpu.memory_space<vmem>>, %arg5: memref<1x128xf32, #tpu.memory_space<vmem>>, %arg6: memref<1x128xf32, #tpu.memory_space<vmem>>, %arg7: memref<512x128xf32, #tpu.memory_space<vmem>>) attributes {dimension_semantics = [#tpu.dimension_semantics<parallel>], iteration_bounds = array<i64: 1>, scalar_prefetch = 0 : i64, scratch_operands = 0 : i64, tpu.core_type = #tpu.core_type<tc>, window_params = [{transform_indices = @transform_0, window_bounds = array<i64: 512, 128>}, {pipeline_mode = #tpu.pipeline_mode<synchronous>, transform_indices = @transform_1, window_bounds = array<i64: 1, 128>}, {pipeline_mode = #tpu.pipeline_mode<synchronous>, transform_indices = @transform_2, window_bounds = array<i64: 1, 128>}, {transform_indices = @transform_3, window_bounds = array<i64: 512, 128>}, {pipeline_mode = #tpu.pipeline_mode<synchronous>, transform_indices = @transform_4, window_bounds = array<i64: 1, 128>}, {pipeline_mode = #tpu.pipeline_mode<synchronous>, transform_indices = @transform_5, window_bounds = array<i64: 1, 128>}, {transform_indices = @transform_6, window_bounds = array<i64: 512, 128>}]} {
    %c0 = arith.constant 0 : index
    %c0_0 = arith.constant 0 : index
    %0 = vector.load %arg1[%c0, %c0_0] : memref<512x128xf32, #tpu.memory_space<vmem>>, vector<512x128xf32>
    %c0_1 = arith.constant 0 : index
    %c0_2 = arith.constant 0 : index
    %1 = vector.load %arg2[%c0_1, %c0_2] : memref<1x128xf32, #tpu.memory_space<vmem>>, vector<1x128xf32>
    %2 = vector.broadcast %1 : vector<1x128xf32> to vector<512x128xf32>
    %3 = arith.mulf %0, %2 : vector<512x128xf32>
    %c0_3 = arith.constant 0 : index
    %c0_4 = arith.constant 0 : index
    %4 = vector.load %arg3[%c0_3, %c0_4] : memref<1x128xf32, #tpu.memory_space<vmem>>, vector<1x128xf32>
    %5 = vector.broadcast %4 : vector<1x128xf32> to vector<512x128xf32>
    %6 = arith.addf %3, %5 : vector<512x128xf32>
    %c0_5 = arith.constant 0 : index
    %c0_6 = arith.constant 0 : index
    %7 = vector.load %arg4[%c0_5, %c0_6] : memref<512x128xf32, #tpu.memory_space<vmem>>, vector<512x128xf32>
    %c0_7 = arith.constant 0 : index
    %c0_8 = arith.constant 0 : index
    %8 = vector.load %arg5[%c0_7, %c0_8] : memref<1x128xf32, #tpu.memory_space<vmem>>, vector<1x128xf32>
    %9 = vector.broadcast %8 : vector<1x128xf32> to vector<512x128xf32>
    %10 = arith.mulf %7, %9 : vector<512x128xf32>
    %c0_9 = arith.constant 0 : index
    %c0_10 = arith.constant 0 : index
    %11 = vector.load %arg6[%c0_9, %c0_10] : memref<1x128xf32, #tpu.memory_space<vmem>>, vector<1x128xf32>
    %12 = vector.broadcast %11 : vector<1x128xf32> to vector<512x128xf32>
    %13 = arith.addf %10, %12 : vector<512x128xf32>
    %14 = arith.addf %6, %13 : vector<512x128xf32>
    %cst = arith.constant 0.000000e+00 : f32
    %15 = vector.broadcast %cst : f32 to vector<512x128xf32>
    %16 = arith.maximumf %14, %15 : vector<512x128xf32>
    %c0_11 = arith.constant 0 : index
    %c0_12 = arith.constant 0 : index
    %17 = vector.load %arg7[%c0_11, %c0_12] : memref<512x128xf32, #tpu.memory_space<vmem>>, vector<512x128xf32>
    tpu.vector_store %arg7[%c0_11, %c0_12], %16 {strides = array<i32>} : memref<512x128xf32, #tpu.memory_space<vmem>>, vector<512x128xf32>,
    return
  }
  func.func @transform_0(%arg0: i32) -> (i32, i32) {
    %c0_i32 = arith.constant 0 : i32
    %c0_i32_0 = arith.constant 0 : i32
    return %arg0, %c0_i32 : i32, i32
  }
  func.func @transform_1(%arg0: i32) -> (i32, i32) {
    %c0_i32 = arith.constant 0 : i32
    %c0_i32_0 = arith.constant 0 : i32
    %c0_i32_1 = arith.constant 0 : i32
    return %c0_i32, %c0_i32_0 : i32, i32
  }
  func.func @transform_2(%arg0: i32) -> (i32, i32) {
    %c0_i32 = arith.constant 0 : i32
    %c0_i32_0 = arith.constant 0 : i32
    %c0_i32_1 = arith.constant 0 : i32
    return %c0_i32, %c0_i32_0 : i32, i32
  }
  func.func @transform_3(%arg0: i32) -> (i32, i32) {
    %c0_i32 = arith.constant 0 : i32
    %c0_i32_0 = arith.constant 0 : i32
    return %arg0, %c0_i32 : i32, i32
  }
  func.func @transform_4(%arg0: i32) -> (i32, i32) {
    %c0_i32 = arith.constant 0 : i32
    %c0_i32_0 = arith.constant 0 : i32
    %c0_i32_1 = arith.constant 0 : i32
    return %c0_i32, %c0_i32_0 : i32, i32
  }
  func.func @transform_5(%arg0: i32) -> (i32, i32) {
    %c0_i32 = arith.constant 0 : i32
    %c0_i32_0 = arith.constant 0 : i32
    %c0_i32_1 = arith.constant 0 : i32
    return %c0_i32, %c0_i32_0 : i32, i32
  }
  func.func @transform_6(%arg0: i32) -> (i32, i32) {
    %c0_i32 = arith.constant 0 : i32
    %c0_i32_0 = arith.constant 0 : i32
    return %arg0, %c0_i32 : i32, i32
  }
}

</mosaic_0001>

<llo_original>
// kernel: residual_block_forward.5
$region0: #{residual_block_forward.5}
  #allocation0 [shape = 'u32[]', space=smem, size = 0x4, offset = 0x4, fixed_abs, tag = 'smem constant byte address 0x4 - core index']
  #allocation1 [shape = 'u32[144,128]{1,0:T(1,128)}', space=vmem, size = 0x12000, scoped, tag = 'internal scratch']
  %s0 = inlined_call_operand.vmem [shape: bf16[512,128], index: 0, kind: input, shape index: {}]
  %s1 = inlined_call_operand.vmem [shape: f32[1,128], index: 1, kind: input, shape index: {}]
  %s2 = inlined_call_operand.vmem [shape: f32[1,128], index: 2, kind: input, shape index: {}]
  %s3 = inlined_call_operand.vmem [shape: bf16[512,128], index: 3, kind: output, shape index: {}]
  %s4 = sld [smem:[#allocation0]]
  $region22: #{residual_block_forward.5} parent=0
    _
  %s6 = ssub.s32 1, %s4
  %s7 = scalar_select 0, %s6, %s4
  // Predicated region
  $region2: #{residual_block_forward.5} parent=0 // pred_check
    _
  $region3: #{residual_block_forward.5} parent=0 // pred_check_branch
    %9 = sbr.rel (0) target = $region5
  $region4: #{residual_block_forward.5} parent=0 // pred_region
    _
  $region5: #{residual_block_forward.5} parent=0 // pred_fallthru
    _
  // Predicated region
  $region6: #{residual_block_forward.5} parent=0 // pred_check
    _
  $region7: #{residual_block_forward.5} parent=0 // pred_check_branch
    %11 = sbr.rel (0) target = $region9
  $region8: #{residual_block_forward.5} parent=0 // pred_region
    _
  $region9: #{residual_block_forward.5} parent=0 // pred_fallthru
    _
  // Predicated region
  $region10: #{residual_block_forward.5} parent=0 // pred_check
    _
  $region11: #{residual_block_forward.5} parent=0 // pred_check_branch
    %13 = sbr.rel (0) target = $region13
  $region12: #{residual_block_forward.5} parent=0 // pred_region
    _
  $region13: #{residual_block_forward.5} parent=0 // pred_fallthru
    _
  %v14 = vld [vmem:[%s0] sm:$0xf]
  %v15 = vld [vmem:[%s0 + $0x4] sm:$0xf]
  %v16 = vld [vmem:[%s0 + $0x8] sm:$0xf]
  %v17 = vld [vmem:[%s0 + $0xc] sm:$0xf]
  %v18 = vld [vmem:[%s0 + $0x10] sm:$0xf]
  %v19 = vld [vmem:[%s0 + $0x14] sm:$0xf]
  %v20 = vld [vmem:[%s0 + $0x18] sm:$0xf]
  %v21 = vld [vmem:[%s0 + $0x1c] sm:$0xf]
  %v22 = vld [vmem:[%s0 + $0x20] sm:$0xf]
  %v23 = vld [vmem:[%s0 + $0x24] sm:$0xf]
  %v24 = vld [vmem:[%s0 + $0x28] sm:$0xf]
  %v25 = vld [vmem:[%s0 + $0x2c] sm:$0xf]
  %v26 = vld [vmem:[%s0 + $0x30] sm:$0xf]
  %v27 = vld [vmem:[%s0 + $0x34] sm:$0xf]
  %v28 = vld [vmem:[%s0 + $0x38] sm:$0xf]
  %v29 = vld [vmem:[%s0 + $0x3c] sm:$0xf]
  %v30 = vld [vmem:[%s0 + $0x40] sm:$0xf]
  %v31 = vld [vmem:[%s0 + $0x44] sm:$0xf]
  %v32 = vld [vmem:[%s0 + $0x48] sm:$0xf]
  %v33 = vld [vmem:[%s0 + $0x4c] sm:$0xf]
  %v34 = vld [vmem:[%s0 + $0x50] sm:$0xf]
  %v35 = vld [vmem:[%s0 + $0x54] sm:$0xf]
  %v36 = vld [vmem:[%s0 + $0x58] sm:$0xf]
  %v37 = vld [vmem:[%s0 + $0x5c] sm:$0xf]
  %v38 = vld [vmem:[%s0 + $0x60] sm:$0xf]
  %v39 = vld [vmem:[%s0 + $0x64] sm:$0xf]
  %v40 = vld [vmem:[%s0 + $0x68] sm:$0xf]
  %v41 = vld [vmem:[%s0 + $0x6c] sm:$0xf]
  %v42 = vld [vmem:[%s0 + $0x70] sm:$0xf]
  %v43 = vld [vmem:[%s0 + $0x74] sm:$0xf]
  %v44 = vld [vmem:[%s0 + $0x78] sm:$0xf]
  %v45 = vld [vmem:[%s0 + $0x7c] sm:$0xf]
  %v46 = vld [vmem:[%s0 + $0x80] sm:$0xf]
  %v47 = vld [vmem:[%s0 + $0x84] sm:$0xf]
  %v48 = vld [vmem:[%s0 + $0x88] sm:$0xf]
  %v49 = vld [vmem:[%s0 + $0x8c] sm:$0xf]
  %v50 = vld [vmem:[%s0 + $0x90] sm:$0xf]
  %v51 = vld [vmem:[%s0 + $0x94] sm:$0xf]
  %v52 = vld [vmem:[%s0 + $0x98] sm:$0xf]
  %v53 = vld [vmem:[%s0 + $0x9c] sm:$0xf]
  %v54 = vld [vmem:[%s0 + $0xa0] sm:$0xf]
  %v55 = vld [vmem:[%s0 + $0xa4] sm:$0xf]
  %v56 = vld [vmem:[%s0 + $0xa8] sm:$0xf]
  %v57 = vld [vmem:[%s0 + $0xac] sm:$0xf]
  %v58 = vld [vmem:[%s0 + $0xb0] sm:$0xf]
  %v59 = vld [vmem:[%s0 + $0xb4] sm:$0xf]
  %v60 = vld [vmem:[%s0 + $0xb8] sm:$0xf]
  %v61 = vld [vmem:[%s0 + $0xbc] sm:$0xf]
  %v62 = vld [vmem:[%s0 + $0xc0] sm:$0xf]
  %v63 = vld [vmem:[%s0 + $0xc4] sm:$0xf]
  %v64 = vld [vmem:[%s0 + $0xc8] sm:$0xf]
  %v65 = vld [vmem:[%s0 + $0xcc] sm:$0xf]
  %v66 = vld [vmem:[%s0 + $0xd0] sm:$0xf]
  %v67 = vld [vmem:[%s0 + $0xd4] sm:$0xf]
  %v68 = vld [vmem:[%s0 + $0xd8] sm:$0xf]
  %v69 = vld [vmem:[%s0 + $0xdc] sm:$0xf]
  %v70 = vld [vmem:[%s0 + $0xe0] sm:$0xf]
  %v71 = vld [vmem:[%s0 + $0xe4] sm:$0xf]
  %v72 = vld [vmem:[%s0 + $0xe8] sm:$0xf]
  %v73 = vld [vmem:[%s0 + $0xec] sm:$0xf]
  %v74 = vld [vmem:[%s0 + $0xf0] sm:$0xf]
  %v75 = vld [vmem:[%s0 + $0xf4] sm:$0xf]
  %v76 = vld [vmem:[%s0 + $0xf8] sm:$0xf]
  %v77 = vld [vmem:[%s0 + $0xfc] sm:$0xf]
  %v78 = vunpack.c.l.bf16 %v14
  %v79 = vunpack.c.l.bf16 %v15
  %v80 = vunpack.c.l.bf16 %v16
  %v81 = vunpack.c.l.bf16 %v17
  %v82 = vunpack.c.l.bf16 %v18
  %v83 = vunpack.c.l.bf16 %v19
  %v84 = vunpack.c.l.bf16 %v20
  %v85 = vunpack.c.l.bf16 %v21
  %v86 = vunpack.c.l.bf16 %v22
  %v87 = vunpack.c.l.bf16 %v23
  %v88 = vunpack.c.l.bf16 %v24
  %v89 = vunpack.c.l.bf16 %v25
  %v90 = vunpack.c.l.bf16 %v26
  %v91 = vunpack.c.l.bf16 %v27
  %v92 = vunpack.c.l.bf16 %v28
  %v93 = vunpack.c.l.bf16 %v29
  %v94 = vunpack.c.l.bf16 %v30
  %v95 = vunpack.c.l.bf16 %v31
  %v96 = vunpack.c.l.bf16 %v32
  %v97 = vunpack.c.l.bf16 %v33
  %v98 = vunpack.c.l.bf16 %v34
  %v99 = vunpack.c.l.bf16 %v35
  %v100 = vunpack.c.l.bf16 %v36
  %v101 = vunpack.c.l.bf16 %v37
  %v102 = vunpack.c.l.bf16 %v38
  %v103 = vunpack.c.l.bf16 %v39
  %v104 = vunpack.c.l.bf16 %v40
  %v105 = vunpack.c.l.bf16 %v41
  %v106 = vunpack.c.l.bf16 %v42
  %v107 = vunpack.c.l.bf16 %v43
  %v108 = vunpack.c.l.bf16 %v44
  %v109 = vunpack.c.l.bf16 %v45
  %v110 = vunpack.c.l.bf16 %v46
  %v111 = vunpack.c.l.bf16 %v47
  %v112 = vunpack.c.l.bf16 %v48
  %v113 = vunpack.c.l.bf16 %v49
  %v114 = vunpack.c.l.bf16 %v50
  %v115 = vunpack.c.l.bf16 %v51
  %v116 = vunpack.c.l.bf16 %v52
  %v117 = vunpack.c.l.bf16 %v53
  %v118 = vunpack.c.l.bf16 %v54
  %v119 = vunpack.c.l.bf16 %v55
  %v120 = vunpack.c.l.bf16 %v56
  %v121 = vunpack.c.l.bf16 %v57
  %v122 = vunpack.c.l.bf16 %v58
  %v123 = vunpack.c.l.bf16 %v59
  %v124 = vunpack.c.l.bf16 %v60
  %v125 = vunpack.c.l.bf16 %v61
  %v126 = vunpack.c.l.bf16 %v62
  %v127 = vunpack.c.l.bf16 %v63
  %v128 = vunpack.c.l.bf16 %v64
  %v129 = vunpack.c.l.bf16 %v65
  %v130 = vunpack.c.l.bf16 %v66
  %v131 = vunpack.c.l.bf16 %v67
  %v132 = vunpack.c.l.bf16 %v68
  %v133 = vunpack.c.l.bf16 %v69
  %v134 = vunpack.c.l.bf16 %v70
  %v135 = vunpack.c.l.bf16 %v71
  %v136 = vunpack.c.l.bf16 %v72
  %v137 = vunpack.c.l.bf16 %v73
  %v138 = vunpack.c.l.bf16 %v74
  %v139 = vunpack.c.l.bf16 %v75
  %v140 = vunpack.c.l.bf16 %v76
  %v141 = vunpack.c.l.bf16 %v77
  %v142 = vld [vmem:[%s1] sm:$0x1]
  %v144 = vlaneseq
  %v145 = vshrl.u32 %v144, 7
  %v146 = vsub.s32 0, %v145
  %v147 = vrot.slane %v142, %v146
  %v149 = vmul.f32 %v78, %v147
  %v150 = vmul.f32 %v79, %v147
  %v151 = vmul.f32 %v80, %v147
  %v152 = vmul.f32 %v81, %v147
  %v153 = vmul.f32 %v82, %v147
  %v154 = vmul.f32 %v83, %v147
  %v155 = vmul.f32 %v84, %v147
  %v156 = vmul.f32 %v85, %v147
  %v157 = vmul.f32 %v86, %v147
  %v158 = vmul.f32 %v87, %v147
  %v159 = vmul.f32 %v88, %v147
  %v160 = vmul.f32 %v89, %v147
  %v161 = vmul.f32 %v90, %v147
  %v162 = vmul.f32 %v91, %v147
  %v163 = vmul.f32 %v92, %v147
  %v164 = vmul.f32 %v93, %v147
  %v165 = vmul.f32 %v94, %v147
  %v166 = vmul.f32 %v95, %v147
  %v167 = vmul.f32 %v96, %v147
  %v168 = vmul.f32 %v97, %v147
  %v169 = vmul.f32 %v98, %v147
  %v170 = vmul.f32 %v99, %v147
  %v171 = vmul.f32 %v100, %v147
  %v172 = vmul.f32 %v101, %v147
  %v173 = vmul.f32 %v102, %v147
  %v174 = vmul.f32 %v103, %v147
  %v175 = vmul.f32 %v104, %v147
  %v176 = vmul.f32 %v105, %v147
  %v177 = vmul.f32 %v106, %v147
  %v178 = vmul.f32 %v107, %v147
  %v179 = vmul.f32 %v108, %v147
  %v180 = vmul.f32 %v109, %v147
  %v181 = vmul.f32 %v110, %v147
  %v182 = vmul.f32 %v111, %v147
  %v183 = vmul.f32 %v112, %v147
  %v184 = vmul.f32 %v113, %v147
  %v185 = vmul.f32 %v114, %v147
  %v186 = vmul.f32 %v115, %v147
  %v187 = vmul.f32 %v116, %v147
  %v188 = vmul.f32 %v117, %v147
  %v189 = vmul.f32 %v118, %v147
  %v190 = vmul.f32 %v119, %v147
  %v191 = vmul.f32 %v120, %v147
  %v192 = vmul.f32 %v121, %v147
  %v193 = vmul.f32 %v122, %v147
  %v194 = vmul.f32 %v123, %v147
  %v195 = vmul.f32 %v124, %v147
  %v196 = vmul.f32 %v125, %v147
  %v197 = vmul.f32 %v126, %v147
  %v198 = vmul.f32 %v127, %v147
  %v199 = vmul.f32 %v128, %v147
  %v200 = vmul.f32 %v129, %v147
  %v201 = vmul.f32 %v130, %v147
  %v202 = vmul.f32 %v131, %v147
  %v203 = vmul.f32 %v132, %v147
  %v204 = vmul.f32 %v133, %v147
  %v205 = vmul.f32 %v134, %v147
  %v206 = vmul.f32 %v135, %v147
  %v207 = vmul.f32 %v136, %v147
  %v208 = vmul.f32 %v137, %v147
  %v209 = vmul.f32 %v138, %v147
  %v210 = vmul.f32 %v139, %v147
  %v211 = vmul.f32 %v140, %v147
  %v212 = vmul.f32 %v141, %v147
  %v213 = vld [vmem:[%s2] sm:$0x1]
  %v215 = vlaneseq
  %v216 = vshrl.u32 %v215, 7
  %v217 = vsub.s32 0, %v216
  %v218 = vrot.slane %v213, %v217
  %v220 = vadd.f32 %v149, %v218
  %v221 = vadd.f32 %v150, %v218
  %v222 = vadd.f32 %v151, %v218
  %v223 = vadd.f32 %v152, %v218
  %v224 = vadd.f32 %v153, %v218
  %v225 = vadd.f32 %v154, %v218
  %v226 = vadd.f32 %v155, %v218
  %v227 = vadd.f32 %v156, %v218
  %v228 = vadd.f32 %v157, %v218
  %v229 = vadd.f32 %v158, %v218
  %v230 = vadd.f32 %v159, %v218
  %v231 = vadd.f32 %v160, %v218
  %v232 = vadd.f32 %v161, %v218
  %v233 = vadd.f32 %v162, %v218
  %v234 = vadd.f32 %v163, %v218
  %v235 = vadd.f32 %v164, %v218
  %v236 = vadd.f32 %v165, %v218
  %v237 = vadd.f32 %v166, %v218
  %v238 = vadd.f32 %v167, %v218
  %v239 = vadd.f32 %v168, %v218
  %v240 = vadd.f32 %v169, %v218
  %v241 = vadd.f32 %v170, %v218
  %v242 = vadd.f32 %v171, %v218
  %v243 = vadd.f32 %v172, %v218
  %v244 = vadd.f32 %v173, %v218
  %v245 = vadd.f32 %v174, %v218
  %v246 = vadd.f32 %v175, %v218
  %v247 = vadd.f32 %v176, %v218
  %v248 = vadd.f32 %v177, %v218
  %v249 = vadd.f32 %v178, %v218
  %v250 = vadd.f32 %v179, %v218
  %v251 = vadd.f32 %v180, %v218
  %v252 = vadd.f32 %v181, %v218
  %v253 = vadd.f32 %v182, %v218
  %v254 = vadd.f32 %v183, %v218
  %v255 = vadd.f32 %v184, %v218
  %v256 = vadd.f32 %v185, %v218
  %v257 = vadd.f32 %v186, %v218
  %v258 = vadd.f32 %v187, %v218
  %v259 = vadd.f32 %v188, %v218
  %v260 = vadd.f32 %v189, %v218
  %v261 = vadd.f32 %v190, %v218
  %v262 = vadd.f32 %v191, %v218
  %v263 = vadd.f32 %v192, %v218
  %v264 = vadd.f32 %v193, %v218
  %v265 = vadd.f32 %v194, %v218
  %v266 = vadd.f32 %v195, %v218
  %v267 = vadd.f32 %v196, %v218
  %v268 = vadd.f32 %v197, %v218
  %v269 = vadd.f32 %v198, %v218
  %v270 = vadd.f32 %v199, %v218
  %v271 = vadd.f32 %v200, %v218
  %v272 = vadd.f32 %v201, %v218
  %v273 = vadd.f32 %v202, %v218
  %v274 = vadd.f32 %v203, %v218
  %v275 = vadd.f32 %v204, %v218
  %v276 = vadd.f32 %v205, %v218
  %v277 = vadd.f32 %v206, %v218
  %v278 = vadd.f32 %v207, %v218
  %v279 = vadd.f32 %v208, %v218
  %v280 = vadd.f32 %v209, %v218
  %v281 = vadd.f32 %v210, %v218
  %v282 = vadd.f32 %v211, %v218
  %v283 = vadd.f32 %v212, %v218
  %v284 = vmax.f32 %v220, 0.0
  %v285 = vmax.f32 %v221, 0.0
  %v286 = vmax.f32 %v222, 0.0
  %v287 = vmax.f32 %v223, 0.0
  %v288 = vmax.f32 %v224, 0.0
  %v289 = vmax.f32 %v225, 0.0
  %v290 = vmax.f32 %v226, 0.0
  %v291 = vmax.f32 %v227, 0.0
  %v292 = vmax.f32 %v228, 0.0
  %v293 = vmax.f32 %v229, 0.0
  %v294 = vmax.f32 %v230, 0.0
  %v295 = vmax.f32 %v231, 0.0
  %v296 = vmax.f32 %v232, 0.0
  %v297 = vmax.f32 %v233, 0.0
  %v298 = vmax.f32 %v234, 0.0
  %v299 = vmax.f32 %v235, 0.0
  %v300 = vmax.f32 %v236, 0.0
  %v301 = vmax.f32 %v237, 0.0
  %v302 = vmax.f32 %v238, 0.0
  %v303 = vmax.f32 %v239, 0.0
  %v304 = vmax.f32 %v240, 0.0
  %v305 = vmax.f32 %v241, 0.0
  %v306 = vmax.f32 %v242, 0.0
  %v307 = vmax.f32 %v243, 0.0
  %v308 = vmax.f32 %v244, 0.0
  %v309 = vmax.f32 %v245, 0.0
  %v310 = vmax.f32 %v246, 0.0
  %v311 = vmax.f32 %v247, 0.0
  %v312 = vmax.f32 %v248, 0.0
  %v313 = vmax.f32 %v249, 0.0
  %v314 = vmax.f32 %v250, 0.0
  %v315 = vmax.f32 %v251, 0.0
  %v316 = vmax.f32 %v252, 0.0
  %v317 = vmax.f32 %v253, 0.0
  %v318 = vmax.f32 %v254, 0.0
  %v319 = vmax.f32 %v255, 0.0
  %v320 = vmax.f32 %v256, 0.0
  %v321 = vmax.f32 %v257, 0.0
  %v322 = vmax.f32 %v258, 0.0
  %v323 = vmax.f32 %v259, 0.0
  %v324 = vmax.f32 %v260, 0.0
  %v325 = vmax.f32 %v261, 0.0
  %v326 = vmax.f32 %v262, 0.0
  %v327 = vmax.f32 %v263, 0.0
  %v328 = vmax.f32 %v264, 0.0
  %v329 = vmax.f32 %v265, 0.0
  %v330 = vmax.f32 %v266, 0.0
  %v331 = vmax.f32 %v267, 0.0
  %v332 = vmax.f32 %v268, 0.0
  %v333 = vmax.f32 %v269, 0.0
  %v334 = vmax.f32 %v270, 0.0
  %v335 = vmax.f32 %v271, 0.0
  %v336 = vmax.f32 %v272, 0.0
  %v337 = vmax.f32 %v273, 0.0
  %v338 = vmax.f32 %v274, 0.0
  %v339 = vmax.f32 %v275, 0.0
  %v340 = vmax.f32 %v276, 0.0
  %v341 = vmax.f32 %v277, 0.0
  %v342 = vmax.f32 %v278, 0.0
  %v343 = vmax.f32 %v279, 0.0
  %v344 = vmax.f32 %v280, 0.0
  %v345 = vmax.f32 %v281, 0.0
  %v346 = vmax.f32 %v282, 0.0
  %v347 = vmax.f32 %v283, 0.0
  %v348 = vpack.c.bf16 %v285, %v284
  %v349 = vpack.c.bf16 %v287, %v286
  %v350 = vpack.c.bf16 %v289, %v288
  %v351 = vpack.c.bf16 %v291, %v290
  %v352 = vpack.c.bf16 %v293, %v292
  %v353 = vpack.c.bf16 %v295, %v294
  %v354 = vpack.c.bf16 %v297, %v296
  %v355 = vpack.c.bf16 %v299, %v298
  %v356 = vpack.c.bf16 %v301, %v300
  %v357 = vpack.c.bf16 %v303, %v302
  %v358 = vpack.c.bf16 %v305, %v304
  %v359 = vpack.c.bf16 %v307, %v306
  %v360 = vpack.c.bf16 %v309, %v308
  %v361 = vpack.c.bf16 %v311, %v310
  %v362 = vpack.c.bf16 %v313, %v312
  %v363 = vpack.c.bf16 %v315, %v314
  %v364 = vpack.c.bf16 %v317, %v316
  %v365 = vpack.c.bf16 %v319, %v318
  %v366 = vpack.c.bf16 %v321, %v320
  %v367 = vpack.c.bf16 %v323, %v322
  %v368 = vpack.c.bf16 %v325, %v324
  %v369 = vpack.c.bf16 %v327, %v326
  %v370 = vpack.c.bf16 %v329, %v328
  %v371 = vpack.c.bf16 %v331, %v330
  %v372 = vpack.c.bf16 %v333, %v332
  %v373 = vpack.c.bf16 %v335, %v334
  %v374 = vpack.c.bf16 %v337, %v336
  %v375 = vpack.c.bf16 %v339, %v338
  %v376 = vpack.c.bf16 %v341, %v340
  %v377 = vpack.c.bf16 %v343, %v342
  %v378 = vpack.c.bf16 %v345, %v344
  %v379 = vpack.c.bf16 %v347, %v346
  %v412 = vunpack.c.l.b16 %v348
  %v413 = vunpack.c.h.b16 %v348
  %v414 = vunpack.c.l.b16 %v349
  %v415 = vunpack.c.h.b16 %v349
  %v416 = vunpack.c.l.b16 %v350
  %v417 = vunpack.c.h.b16 %v350
  %v418 = vunpack.c.l.b16 %v351
  %v419 = vunpack.c.h.b16 %v351
  %v420 = vunpack.c.l.b16 %v352
  %v421 = vunpack.c.h.b16 %v352
  %v422 = vunpack.c.l.b16 %v353
  %v423 = vunpack.c.h.b16 %v353
  %v424 = vunpack.c.l.b16 %v354
  %v425 = vunpack.c.h.b16 %v354
  %v426 = vunpack.c.l.b16 %v355
  %v427 = vunpack.c.h.b16 %v355
  %v428 = vunpack.c.l.b16 %v356
  %v429 = vunpack.c.h.b16 %v356
  %v430 = vunpack.c.l.b16 %v357
  %v431 = vunpack.c.h.b16 %v357
  %v432 = vunpack.c.l.b16 %v358
  %v433 = vunpack.c.h.b16 %v358
  %v434 = vunpack.c.l.b16 %v359
  %v435 = vunpack.c.h.b16 %v359
  %v436 = vunpack.c.l.b16 %v360
  %v437 = vunpack.c.h.b16 %v360
  %v438 = vunpack.c.l.b16 %v361
  %v439 = vunpack.c.h.b16 %v361
  %v440 = vunpack.c.l.b16 %v362
  %v441 = vunpack.c.h.b16 %v362
  %v442 = vunpack.c.l.b16 %v363
  %v443 = vunpack.c.h.b16 %v363
  %v444 = vunpack.c.l.b16 %v364
  %v445 = vunpack.c.h.b16 %v364
  %v446 = vunpack.c.l.b16 %v365
  %v447 = vunpack.c.h.b16 %v365
  %v448 = vunpack.c.l.b16 %v366
  %v449 = vunpack.c.h.b16 %v366
  %v450 = vunpack.c.l.b16 %v367
  %v451 = vunpack.c.h.b16 %v367
  %v452 = vunpack.c.l.b16 %v368
  %v453 = vunpack.c.h.b16 %v368
  %v454 = vunpack.c.l.b16 %v369
  %v455 = vunpack.c.h.b16 %v369
  %v456 = vunpack.c.l.b16 %v370
  %v457 = vunpack.c.h.b16 %v370
  %v458 = vunpack.c.l.b16 %v371
  %v459 = vunpack.c.h.b16 %v371
  %v460 = vunpack.c.l.b16 %v372
  %v461 = vunpack.c.h.b16 %v372
  %v462 = vunpack.c.l.b16 %v373
  %v463 = vunpack.c.h.b16 %v373
  %v464 = vunpack.c.l.b16 %v374
  %v465 = vunpack.c.h.b16 %v374
  %v466 = vunpack.c.l.b16 %v375
  %v467 = vunpack.c.h.b16 %v375
  %v468 = vunpack.c.l.b16 %v376
  %v469 = vunpack.c.h.b16 %v376
  %v470 = vunpack.c.l.b16 %v377
  %v471 = vunpack.c.h.b16 %v377
  %v472 = vunpack.c.l.b16 %v378
  %v473 = vunpack.c.h.b16 %v378
  %v474 = vunpack.c.l.b16 %v379
  %v475 = vunpack.c.h.b16 %v379
  %v476 = vpack.c.b16 %v412, %v412
  %v477 = vpack.c.b16 %v413, %v413
  %v478 = vpack.c.b16 %v414, %v414
  %v479 = vpack.c.b16 %v415, %v415
  %v480 = vpack.c.b16 %v416, %v416
  %v481 = vpack.c.b16 %v417, %v417
  %v482 = vpack.c.b16 %v418, %v418
  %v483 = vpack.c.b16 %v419, %v419
  %v484 = vpack.c.b16 %v420, %v420
  %v485 = vpack.c.b16 %v421, %v421
  %v486 = vpack.c.b16 %v422, %v422
  %v487 = vpack.c.b16 %v423, %v423
  %v488 = vpack.c.b16 %v424, %v424
  %v489 = vpack.c.b16 %v425, %v425
  %v490 = vpack.c.b16 %v426, %v426
  %v491 = vpack.c.b16 %v427, %v427
  %v492 = vpack.c.b16 %v428, %v428
  %v493 = vpack.c.b16 %v429, %v429
  %v494 = vpack.c.b16 %v430, %v430
  %v495 = vpack.c.b16 %v431, %v431
  %v496 = vpack.c.b16 %v432, %v432
  %v497 = vpack.c.b16 %v433, %v433
  %v498 = vpack.c.b16 %v434, %v434
  %v499 = vpack.c.b16 %v435, %v435
  %v500 = vpack.c.b16 %v436, %v436
  %v501 = vpack.c.b16 %v437, %v437
  %v502 = vpack.c.b16 %v438, %v438
  %v503 = vpack.c.b16 %v439, %v439
  %v504 = vpack.c.b16 %v440, %v440
  %v505 = vpack.c.b16 %v441, %v441
  %v506 = vpack.c.b16 %v442, %v442
  %v507 = vpack.c.b16 %v443, %v443
  %v508 = vpack.c.b16 %v444, %v444
  %v509 = vpack.c.b16 %v445, %v445
  %v510 = vpack.c.b16 %v446, %v446
  %v511 = vpack.c.b16 %v447, %v447
  %v512 = vpack.c.b16 %v448, %v448
  %v513 = vpack.c.b16 %v449, %v449
  %v514 = vpack.c.b16 %v450, %v450
  %v515 = vpack.c.b16 %v451, %v451
  %v516 = vpack.c.b16 %v452, %v452
  %v517 = vpack.c.b16 %v453, %v453
  %v518 = vpack.c.b16 %v454, %v454
  %v519 = vpack.c.b16 %v455, %v455
  %v520 = vpack.c.b16 %v456, %v456
  %v521 = vpack.c.b16 %v457, %v457
  %v522 = vpack.c.b16 %v458, %v458
  %v523 = vpack.c.b16 %v459, %v459
  %v524 = vpack.c.b16 %v460, %v460
  %v525 = vpack.c.b16 %v461, %v461
  %v526 = vpack.c.b16 %v462, %v462
  %v527 = vpack.c.b16 %v463, %v463
  %v528 = vpack.c.b16 %v464, %v464
  %v529 = vpack.c.b16 %v465, %v465
  %v530 = vpack.c.b16 %v466, %v466
  %v531 = vpack.c.b16 %v467, %v467
  %v532 = vpack.c.b16 %v468, %v468
  %v533 = vpack.c.b16 %v469, %v469
  %v534 = vpack.c.b16 %v470, %v470
  %v535 = vpack.c.b16 %v471, %v471
  %v536 = vpack.c.b16 %v472, %v472
  %v537 = vpack.c.b16 %v473, %v473
  %v538 = vpack.c.b16 %v474, %v474
  %v539 = vpack.c.b16 %v475, %v475
  %604 = vst [vmem:[%s3] sm:$0xf] %v476
  %605 = vst [vmem:[%s3 + $0x4] sm:$0xf] %v477
  %606 = vst [vmem:[%s3 + $0x8] sm:$0xf] %v478
  %607 = vst [vmem:[%s3 + $0xc] sm:$0xf] %v479
  %608 = vst [vmem:[%s3 + $0x10] sm:$0xf] %v480
  %609 = vst [vmem:[%s3 + $0x14] sm:$0xf] %v481
  %610 = vst [vmem:[%s3 + $0x18] sm:$0xf] %v482
  %611 = vst [vmem:[%s3 + $0x1c] sm:$0xf] %v483
  %612 = vst [vmem:[%s3 + $0x20] sm:$0xf] %v484
  %613 = vst [vmem:[%s3 + $0x24] sm:$0xf] %v485
  %614 = vst [vmem:[%s3 + $0x28] sm:$0xf] %v486
  %615 = vst [vmem:[%s3 + $0x2c] sm:$0xf] %v487
  %616 = vst [vmem:[%s3 + $0x30] sm:$0xf] %v488
  %617 = vst [vmem:[%s3 + $0x34] sm:$0xf] %v489
  %618 = vst [vmem:[%s3 + $0x38] sm:$0xf] %v490
  %619 = vst [vmem:[%s3 + $0x3c] sm:$0xf] %v491
  %620 = vst [vmem:[%s3 + $0x40] sm:$0xf] %v492
  %621 = vst [vmem:[%s3 + $0x44] sm:$0xf] %v493
  %622 = vst [vmem:[%s3 + $0x48] sm:$0xf] %v494
  %623 = vst [vmem:[%s3 + $0x4c] sm:$0xf] %v495
  %624 = vst [vmem:[%s3 + $0x50] sm:$0xf] %v496
  %625 = vst [vmem:[%s3 + $0x54] sm:$0xf] %v497
  %626 = vst [vmem:[%s3 + $0x58] sm:$0xf] %v498
  %627 = vst [vmem:[%s3 + $0x5c] sm:$0xf] %v499
  %628 = vst [vmem:[%s3 + $0x60] sm:$0xf] %v500
  %629 = vst [vmem:[%s3 + $0x64] sm:$0xf] %v501
  %630 = vst [vmem:[%s3 + $0x68] sm:$0xf] %v502
  %631 = vst [vmem:[%s3 + $0x6c] sm:$0xf] %v503
  %632 = vst [vmem:[%s3 + $0x70] sm:$0xf] %v504
  %633 = vst [vmem:[%s3 + $0x74] sm:$0xf] %v505
  %634 = vst [vmem:[%s3 + $0x78] sm:$0xf] %v506
  %635 = vst [vmem:[%s3 + $0x7c] sm:$0xf] %v507
  %636 = vst [vmem:[%s3 + $0x80] sm:$0xf] %v508
  %637 = vst [vmem:[%s3 + $0x84] sm:$0xf] %v509
  %638 = vst [vmem:[%s3 + $0x88] sm:$0xf] %v510
  %639 = vst [vmem:[%s3 + $0x8c] sm:$0xf] %v511
  %640 = vst [vmem:[%s3 + $0x90] sm:$0xf] %v512
  %641 = vst [vmem:[%s3 + $0x94] sm:$0xf] %v513
  %642 = vst [vmem:[%s3 + $0x98] sm:$0xf] %v514
  %643 = vst [vmem:[%s3 + $0x9c] sm:$0xf] %v515
  %644 = vst [vmem:[%s3 + $0xa0] sm:$0xf] %v516
  %645 = vst [vmem:[%s3 + $0xa4] sm:$0xf] %v517
  %646 = vst [vmem:[%s3 + $0xa8] sm:$0xf] %v518
  %647 = vst [vmem:[%s3 + $0xac] sm:$0xf] %v519
  %648 = vst [vmem:[%s3 + $0xb0] sm:$0xf] %v520
  %649 = vst [vmem:[%s3 + $0xb4] sm:$0xf] %v521
  %650 = vst [vmem:[%s3 + $0xb8] sm:$0xf] %v522
  %651 = vst [vmem:[%s3 + $0xbc] sm:$0xf] %v523
  %652 = vst [vmem:[%s3 + $0xc0] sm:$0xf] %v524
  %653 = vst [vmem:[%s3 + $0xc4] sm:$0xf] %v525
  %654 = vst [vmem:[%s3 + $0xc8] sm:$0xf] %v526
  %655 = vst [vmem:[%s3 + $0xcc] sm:$0xf] %v527
  %656 = vst [vmem:[%s3 + $0xd0] sm:$0xf] %v528
  %657 = vst [vmem:[%s3 + $0xd4] sm:$0xf] %v529
  %658 = vst [vmem:[%s3 + $0xd8] sm:$0xf] %v530
  %659 = vst [vmem:[%s3 + $0xdc] sm:$0xf] %v531
  %660 = vst [vmem:[%s3 + $0xe0] sm:$0xf] %v532
  %661 = vst [vmem:[%s3 + $0xe4] sm:$0xf] %v533
  %662 = vst [vmem:[%s3 + $0xe8] sm:$0xf] %v534
  %663 = vst [vmem:[%s3 + $0xec] sm:$0xf] %v535
  %664 = vst [vmem:[%s3 + $0xf0] sm:$0xf] %v536
  %665 = vst [vmem:[%s3 + $0xf4] sm:$0xf] %v537
  %666 = vst [vmem:[%s3 + $0xf8] sm:$0xf] %v538
  %667 = vst [vmem:[%s3 + $0xfc] sm:$0xf] %v539
  // Predicated region
  $region14: #{residual_block_forward.5} parent=0 // pred_check
    _
  $region15: #{residual_block_forward.5} parent=0 // pred_check_branch
    %669 = sbr.rel (0) target = $region17
  $region16: #{residual_block_forward.5} parent=0 // pred_region
    _
  $region17: #{residual_block_forward.5} parent=0 // pred_fallthru
    _
  // Predicated region
  $region18: #{residual_block_forward.5} parent=0 // pred_check
    _
  $region19: #{residual_block_forward.5} parent=0 // pred_check_branch
    %671 = sbr.rel (0) target = $region21
  $region20: #{residual_block_forward.5} parent=0 // pred_region
    _
  $region21: #{residual_block_forward.5} parent=0 // pred_fallthru
    _

// kernel: residual_block_forward.4
$region0: #{residual_block_forward.4}
  #allocation0 [shape = 'u32[]', space=smem, size = 0x4, offset = 0x4, fixed_abs, tag = 'smem constant byte address 0x4 - core index']
  #allocation1 [shape = 'u32[144,128]{1,0:T(1,128)}', space=vmem, size = 0x12000, scoped, tag = 'internal scratch']
  %s0 = inlined_call_operand.vmem [shape: bf16[512,128], index: 0, kind: input, shape index: {}]
  %s1 = inlined_call_operand.vmem [shape: bf16[128,128], index: 1, kind: input, shape index: {}]
  %s2 = inlined_call_operand.vmem [shape: bf16[512,128], index: 2, kind: output, shape index: {0}]
  %s3 = inlined_call_operand.vmem [shape: f32[1,128], index: 3, kind: output, shape index: {1}]
  %s4 = inlined_call_operand.vmem [shape: f32[1,128], index: 4, kind: output, shape index: {2}]
  %5 = xla_tuple %s2, %s3, %s4
  %s6 = sld [smem:[#allocation0]]
  $region38: #{residual_block_forward.4} parent=0
    _
  %s8 = ssub.s32 1, %s6
  %s9 = scalar_select 0, %s8, %s6
  // Predicated region
  $region2: #{residual_block_forward.4} parent=0 // pred_check
    _
  $region3: #{residual_block_forward.4} parent=0 // pred_check_branch
    %11 = sbr.rel (0) target = $region5
  $region4: #{residual_block_forward.4} parent=0 // pred_region
    _
  $region5: #{residual_block_forward.4} parent=0 // pred_fallthru
    _
  // Predicated region
  $region6: #{residual_block_forward.4} parent=0 // pred_check
    _
  $region7: #{residual_block_forward.4} parent=0 // pred_check_branch
    %13 = sbr.rel (0) target = $region9
  $region8: #{residual_block_forward.4} parent=0 // pred_region
    _
  $region9: #{residual_block_forward.4} parent=0 // pred_fallthru
    _
  %p15 = scmp.eq.s32.totalorder 0, 0
  // Predicated region
  $region10: #{residual_block_forward.4} parent=0 // pred_check
    %p16 = pneg %p15
  $region11: #{residual_block_forward.4} parent=0 // pred_check_branch
    %18 = sbr.rel (%p16) target = $region13
  $region12: #{residual_block_forward.4} parent=0 // pred_region
    %19 = vst [vmem:[%s3] sm:$0x1] 0.0
    %20 = vst [vmem:[%s4] sm:$0x1] 0.0
  $region13: #{residual_block_forward.4} parent=0 // pred_fallthru
    _
  %v21 = vld [vmem:[%s0] sm:$0xf]
  %v22 = vld [vmem:[%s0 + $0x4] sm:$0xf]
  %v23 = vld [vmem:[%s0 + $0x8] sm:$0xf]
  %v24 = vld [vmem:[%s0 + $0xc] sm:$0xf]
  %v25 = vld [vmem:[%s0 + $0x10] sm:$0xf]
  %v26 = vld [vmem:[%s0 + $0x14] sm:$0xf]
  %v27 = vld [vmem:[%s0 + $0x18] sm:$0xf]
  %v28 = vld [vmem:[%s0 + $0x1c] sm:$0xf]
  %v29 = vld [vmem:[%s0 + $0x20] sm:$0xf]
  %v30 = vld [vmem:[%s0 + $0x24] sm:$0xf]
  %v31 = vld [vmem:[%s0 + $0x28] sm:$0xf]
  %v32 = vld [vmem:[%s0 + $0x2c] sm:$0xf]
  %v33 = vld [vmem:[%s0 + $0x30] sm:$0xf]
  %v34 = vld [vmem:[%s0 + $0x34] sm:$0xf]
  %v35 = vld [vmem:[%s0 + $0x38] sm:$0xf]
  %v36 = vld [vmem:[%s0 + $0x3c] sm:$0xf]
  %v37 = vld [vmem:[%s0 + $0x40] sm:$0xf]
  %v38 = vld [vmem:[%s0 + $0x44] sm:$0xf]
  %v39 = vld [vmem:[%s0 + $0x48] sm:$0xf]
  %v40 = vld [vmem:[%s0 + $0x4c] sm:$0xf]
  %v41 = vld [vmem:[%s0 + $0x50] sm:$0xf]
  %v42 = vld [vmem:[%s0 + $0x54] sm:$0xf]
  %v43 = vld [vmem:[%s0 + $0x58] sm:$0xf]
  %v44 = vld [vmem:[%s0 + $0x5c] sm:$0xf]
  %v45 = vld [vmem:[%s0 + $0x60] sm:$0xf]
  %v46 = vld [vmem:[%s0 + $0x64] sm:$0xf]
  %v47 = vld [vmem:[%s0 + $0x68] sm:$0xf]
  %v48 = vld [vmem:[%s0 + $0x6c] sm:$0xf]
  %v49 = vld [vmem:[%s0 + $0x70] sm:$0xf]
  %v50 = vld [vmem:[%s0 + $0x74] sm:$0xf]
  %v51 = vld [vmem:[%s0 + $0x78] sm:$0xf]
  %v52 = vld [vmem:[%s0 + $0x7c] sm:$0xf]
  %v53 = vld [vmem:[%s0 + $0x80] sm:$0xf]
  %v54 = vld [vmem:[%s0 + $0x84] sm:$0xf]
  %v55 = vld [vmem:[%s0 + $0x88] sm:$0xf]
  %v56 = vld [vmem:[%s0 + $0x8c] sm:$0xf]
  %v57 = vld [vmem:[%s0 + $0x90] sm:$0xf]
  %v58 = vld [vmem:[%s0 + $0x94] sm:$0xf]
  %v59 = vld [vmem:[%s0 + $0x98] sm:$0xf]
  %v60 = vld [vmem:[%s0 + $0x9c] sm:$0xf]
  %v61 = vld [vmem:[%s0 + $0xa0] sm:$0xf]
  %v62 = vld [vmem:[%s0 + $0xa4] sm:$0xf]
  %v63 = vld [vmem:[%s0 + $0xa8] sm:$0xf]
  %v64 = vld [vmem:[%s0 + $0xac] sm:$0xf]
  %v65 = vld [vmem:[%s0 + $0xb0] sm:$0xf]
  %v66 = vld [vmem:[%s0 + $0xb4] sm:$0xf]
  %v67 = vld [vmem:[%s0 + $0xb8] sm:$0xf]
  %v68 = vld [vmem:[%s0 + $0xbc] sm:$0xf]
  %v69 = vld [vmem:[%s0 + $0xc0] sm:$0xf]
  %v70 = vld [vmem:[%s0 + $0xc4] sm:$0xf]
  %v71 = vld [vmem:[%s0 + $0xc8] sm:$0xf]
  %v72 = vld [vmem:[%s0 + $0xcc] sm:$0xf]
  %v73 = vld [vmem:[%s0 + $0xd0] sm:$0xf]
  %v74 = vld [vmem:[%s0 + $0xd4] sm:$0xf]
  %v75 = vld [vmem:[%s0 + $0xd8] sm:$0xf]
  %v76 = vld [vmem:[%s0 + $0xdc] sm:$0xf]
  %v77 = vld [vmem:[%s0 + $0xe0] sm:$0xf]
  %v78 = vld [vmem:[%s0 + $0xe4] sm:$0xf]
  %v79 = vld [vmem:[%s0 + $0xe8] sm:$0xf]
  %v80 = vld [vmem:[%s0 + $0xec] sm:$0xf]
  %v81 = vld [vmem:[%s0 + $0xf0] sm:$0xf]
  %v82 = vld [vmem:[%s0 + $0xf4] sm:$0xf]
  %v83 = vld [vmem:[%s0 + $0xf8] sm:$0xf]
  %v84 = vld [vmem:[%s0 + $0xfc] sm:$0xf]
  %v85 = vld [vmem:[%s1] sm:$0xf]
  %v86 = vld [vmem:[%s1 + $0x4] sm:$0xf]
  %v87 = vld [vmem:[%s1 + $0x8] sm:$0xf]
  %v88 = vld [vmem:[%s1 + $0xc] sm:$0xf]
  %v89 = vld [vmem:[%s1 + $0x10] sm:$0xf]
  %v90 = vld [vmem:[%s1 + $0x14] sm:$0xf]
  %v91 = vld [vmem:[%s1 + $0x18] sm:$0xf]
  %v92 = vld [vmem:[%s1 + $0x1c] sm:$0xf]
  %v93 = vld [vmem:[%s1 + $0x20] sm:$0xf]
  %v94 = vld [vmem:[%s1 + $0x24] sm:$0xf]
  %v95 = vld [vmem:[%s1 + $0x28] sm:$0xf]
  %v96 = vld [vmem:[%s1 + $0x2c] sm:$0xf]
  %v97 = vld [vmem:[%s1 + $0x30] sm:$0xf]
  %v98 = vld [vmem:[%s1 + $0x34] sm:$0xf]
  %v99 = vld [vmem:[%s1 + $0x38] sm:$0xf]
  %v100 = vld [vmem:[%s1 + $0x3c] sm:$0xf]
  %v165 = vunpack.c.l.b16 %v21
  %v166 = vunpack.c.l.b16 %v22
  %v167 = vunpack.c.l.b16 %v23
  %v168 = vunpack.c.l.b16 %v24
  %v169 = vunpack.c.l.b16 %v25
  %v170 = vunpack.c.l.b16 %v26
  %v171 = vunpack.c.l.b16 %v27
  %v172 = vunpack.c.l.b16 %v28
  %v173 = vunpack.c.l.b16 %v29
  %v174 = vunpack.c.l.b16 %v30
  %v175 = vunpack.c.l.b16 %v31
  %v176 = vunpack.c.l.b16 %v32
  %v177 = vunpack.c.l.b16 %v33
  %v178 = vunpack.c.l.b16 %v34
  %v179 = vunpack.c.l.b16 %v35
  %v180 = vunpack.c.l.b16 %v36
  %v181 = vunpack.c.l.b16 %v37
  %v182 = vunpack.c.l.b16 %v38
  %v183 = vunpack.c.l.b16 %v39
  %v184 = vunpack.c.l.b16 %v40
  %v185 = vunpack.c.l.b16 %v41
  %v186 = vunpack.c.l.b16 %v42
  %v187 = vunpack.c.l.b16 %v43
  %v188 = vunpack.c.l.b16 %v44
  %v189 = vunpack.c.l.b16 %v45
  %v190 = vunpack.c.l.b16 %v46
  %v191 = vunpack.c.l.b16 %v47
  %v192 = vunpack.c.l.b16 %v48
  %v193 = vunpack.c.l.b16 %v49
  %v194 = vunpack.c.l.b16 %v50
  %v195 = vunpack.c.l.b16 %v51
  %v196 = vunpack.c.l.b16 %v52
  %v197 = vunpack.c.l.b16 %v53
  %v198 = vunpack.c.l.b16 %v54
  %v199 = vunpack.c.l.b16 %v55
  %v200 = vunpack.c.l.b16 %v56
  %v201 = vunpack.c.l.b16 %v57
  %v202 = vunpack.c.l.b16 %v58
  %v203 = vunpack.c.l.b16 %v59
  %v204 = vunpack.c.l.b16 %v60
  %v205 = vunpack.c.l.b16 %v61
  %v206 = vunpack.c.l.b16 %v62
  %v207 = vunpack.c.l.b16 %v63
  %v208 = vunpack.c.l.b16 %v64
  %v209 = vunpack.c.l.b16 %v65
  %v210 = vunpack.c.l.b16 %v66
  %v211 = vunpack.c.l.b16 %v67
  %v212 = vunpack.c.l.b16 %v68
  %v213 = vunpack.c.l.b16 %v69
  %v214 = vunpack.c.l.b16 %v70
  %v215 = vunpack.c.l.b16 %v71
  %v216 = vunpack.c.l.b16 %v72
  %v217 = vunpack.c.l.b16 %v73
  %v218 = vunpack.c.l.b16 %v74
  %v219 = vunpack.c.l.b16 %v75
  %v220 = vunpack.c.l.b16 %v76
  %v221 = vunpack.c.l.b16 %v77
  %v222 = vunpack.c.l.b16 %v78
  %v223 = vunpack.c.l.b16 %v79
  %v224 = vunpack.c.l.b16 %v80
  %v225 = vunpack.c.l.b16 %v81
  %v226 = vunpack.c.l.b16 %v82
  %v227 = vunpack.c.l.b16 %v83
  %v228 = vunpack.c.l.b16 %v84
  %v229 = vpack.c.b16 %v166, %v165
  %v230 = vpack.c.b16 %v168, %v167
  %v231 = vpack.c.b16 %v170, %v169
  %v232 = vpack.c.b16 %v172, %v171
  %v233 = vpack.c.b16 %v174, %v173
  %v234 = vpack.c.b16 %v176, %v175
  %v235 = vpack.c.b16 %v178, %v177
  %v236 = vpack.c.b16 %v180, %v179
  %v237 = vpack.c.b16 %v182, %v181
  %v238 = vpack.c.b16 %v184, %v183
  %v239 = vpack.c.b16 %v186, %v185
  %v240 = vpack.c.b16 %v188, %v187
  %v241 = vpack.c.b16 %v190, %v189
  %v242 = vpack.c.b16 %v192, %v191
  %v243 = vpack.c.b16 %v194, %v193
  %v244 = vpack.c.b16 %v196, %v195
  %v245 = vpack.c.b16 %v198, %v197
  %v246 = vpack.c.b16 %v200, %v199
  %v247 = vpack.c.b16 %v202, %v201
  %v248 = vpack.c.b16 %v204, %v203
  %v249 = vpack.c.b16 %v206, %v205
  %v250 = vpack.c.b16 %v208, %v207
  %v251 = vpack.c.b16 %v210, %v209
  %v252 = vpack.c.b16 %v212, %v211
  %v253 = vpack.c.b16 %v214, %v213
  %v254 = vpack.c.b16 %v216, %v215
  %v255 = vpack.c.b16 %v218, %v217
  %v256 = vpack.c.b16 %v220, %v219
  %v257 = vpack.c.b16 %v222, %v221
  %v258 = vpack.c.b16 %v224, %v223
  %v259 = vpack.c.b16 %v226, %v225
  %v260 = vpack.c.b16 %v228, %v227
  %v309 = vunpack.c.l.b16 %v85
  %v310 = vunpack.c.l.b16 %v86
  %v311 = vunpack.c.l.b16 %v87
  %v312 = vunpack.c.l.b16 %v88
  %v313 = vunpack.c.l.b16 %v89
  %v314 = vunpack.c.l.b16 %v90
  %v315 = vunpack.c.l.b16 %v91
  %v316 = vunpack.c.l.b16 %v92
  %v317 = vunpack.c.l.b16 %v93
  %v318 = vunpack.c.l.b16 %v94
  %v319 = vunpack.c.l.b16 %v95
  %v320 = vunpack.c.l.b16 %v96
  %v321 = vunpack.c.l.b16 %v97
  %v322 = vunpack.c.l.b16 %v98
  %v323 = vunpack.c.l.b16 %v99
  %v324 = vunpack.c.l.b16 %v100
  %v325 = vpack.c.b16 %v310, %v309
  %v326 = vpack.c.b16 %v312, %v311
  %v327 = vpack.c.b16 %v314, %v313
  %v328 = vpack.c.b16 %v316, %v315
  %v329 = vpack.c.b16 %v318, %v317
  %v330 = vpack.c.b16 %v320, %v319
  %v331 = vpack.c.b16 %v322, %v321
  %v332 = vpack.c.b16 %v324, %v323
  %341 = vmatprep.subr.bf16.mxu0 0
  %342 = vmatpush1.bf16.msra.mxu0 %v325
  %343 = vmatprep.subr.bf16.mxu0 0
  %344 = vmatpush1.bf16.msra.mxu0 %v326
  %345 = vmatprep.subr.bf16.mxu0 0
  %346 = vmatpush1.bf16.msra.mxu0 %v327
  %347 = vmatprep.subr.bf16.mxu0 0
  %348 = vmatpush1.bf16.msra.mxu0 %v328
  %349 = vmatprep.subr.bf16.mxu0 0
  %350 = vmatpush1.bf16.msra.mxu0 %v329
  %351 = vmatprep.subr.bf16.mxu0 0
  %352 = vmatpush1.bf16.msra.mxu0 %v330
  %353 = vmatprep.subr.bf16.mxu0 0
  %354 = vmatpush1.bf16.msra.mxu0 %v331
  %355 = vmatprep.subr.bf16.mxu0 0
  %356 = vmatpush1.bf16.msra.mxu0 %v332
  %357 = vmatprep.subr.bf16.mxu0 0
  %358 = vmatpush1.bf16.msra.mxu0 0
  %359 = vmatprep.subr.bf16.mxu0 0
  %360 = vmatpush1.bf16.msra.mxu0 0
  %361 = vmatprep.subr.bf16.mxu0 0
  %362 = vmatpush1.bf16.msra.mxu0 0
  %363 = vmatprep.subr.bf16.mxu0 0
  %364 = vmatpush1.bf16.msra.mxu0 0
  %365 = vmatprep.subr.bf16.mxu0 0
  %366 = vmatpush1.bf16.msra.mxu0 0
  %367 = vmatprep.subr.bf16.mxu0 0
  %368 = vmatpush1.bf16.msra.mxu0 0
  %369 = vmatprep.subr.bf16.mxu0 0
  %370 = vmatpush1.bf16.msra.mxu0 0
  %371 = vmatprep.subr.bf16.mxu0 0
  %372 = vmatpush1.bf16.msra.mxu0 0
  %373 = vmatprep.mubr.bf16.mxu0 0
  %374 = vmatmul.mubr.bf16.gmra.mrb[0].mxu0 %v229
  %v375 = vpop.f32.mrb[0].mxu0
  %v376 = vadd.f32 0.0, %v375
  %v377 = vpop.f32.mrb[0].mxu0
  %v378 = vpop.f32.mrb[0].mxu0
  %v379 = vadd.f32 0.0, %v378
  %v380 = vpop.f32.mrb[0].mxu0
  %381 = vmatprep.mubr.bf16.mxu0 0
  %382 = vmatmul.mubr.bf16.gmra.mrb[0].mxu0 %v230
  %v383 = vpop.f32.mrb[0].mxu0
  %v384 = vadd.f32 0.0, %v383
  %v385 = vpop.f32.mrb[0].mxu0
  %v386 = vpop.f32.mrb[0].mxu0
  %v387 = vadd.f32 0.0, %v386
  %v388 = vpop.f32.mrb[0].mxu0
  %389 = vmatprep.mubr.bf16.mxu0 0
  %390 = vmatmul.mubr.bf16.gmra.mrb[0].mxu0 %v231
  %v391 = vpop.f32.mrb[0].mxu0
  %v392 = vadd.f32 0.0, %v391
  %v393 = vpop.f32.mrb[0].mxu0
  %v394 = vpop.f32.mrb[0].mxu0
  %v395 = vadd.f32 0.0, %v394
  %v396 = vpop.f32.mrb[0].mxu0
  %397 = vmatprep.mubr.bf16.mxu0 0
  %398 = vmatmul.mubr.bf16.gmra.mrb[0].mxu0 %v232
  %v399 = vpop.f32.mrb[0].mxu0
  %v400 = vadd.f32 0.0, %v399
  %v401 = vpop.f32.mrb[0].mxu0
  %v402 = vpop.f32.mrb[0].mxu0
  %v403 = vadd.f32 0.0, %v402
  %v404 = vpop.f32.mrb[0].mxu0
  %405 = vmatprep.mubr.bf16.mxu0 0
  %406 = vmatmul.mubr.bf16.gmra.mrb[0].mxu0 %v233
  %v407 = vpop.f32.mrb[0].mxu0
  %v408 = vadd.f32 0.0, %v407
  %v409 = vpop.f32.mrb[0].mxu0
  %v410 = vpop.f32.mrb[0].mxu0
  %v411 = vadd.f32 0.0, %v410
  %v412 = vpop.f32.mrb[0].mxu0
  %413 = vmatprep.mubr.bf16.mxu0 0
  %414 = vmatmul.mubr.bf16.gmra.mrb[0].mxu0 %v234
  %v415 = vpop.f32.mrb[0].mxu0
  %v416 = vadd.f32 0.0, %v415
  %v417 = vpop.f32.mrb[0].mxu0
  %v418 = vpop.f32.mrb[0].mxu0
  %v419 = vadd.f32 0.0, %v418
  %v420 = vpop.f32.mrb[0].mxu0
  %421 = vmatprep.mubr.bf16.mxu0 0
  %422 = vmatmul.mubr.bf16.gmra.mrb[0].mxu0 %v235
  %v423 = vpop.f32.mrb[0].mxu0
  %v424 = vadd.f32 0.0, %v423
  %v425 = vpop.f32.mrb[0].mxu0
  %v426 = vpop.f32.mrb[0].mxu0
  %v427 = vadd.f32 0.0, %v426
  %v428 = vpop.f32.mrb[0].mxu0
  %429 = vmatprep.mubr.bf16.mxu0 0
  %430 = vmatmul.mubr.bf16.gmra.mrb[0].mxu0 %v236
  %v431 = vpop.f32.mrb[0].mxu0
  %v432 = vadd.f32 0.0, %v431
  %v433 = vpop.f32.mrb[0].mxu0
  %v434 = vpop.f32.mrb[0].mxu0
  %v435 = vadd.f32 0.0, %v434
  %v436 = vpop.f32.mrb[0].mxu0
  %437 = vmatprep.mubr.bf16.mxu0 0
  %438 = vmatmul.mubr.bf16.gmra.mrb[0].mxu0 %v237
  %v439 = vpop.f32.mrb[0].mxu0
  %v440 = vadd.f32 0.0, %v439
  %v441 = vpop.f32.mrb[0].mxu0
  %v442 = vpop.f32.mrb[0].mxu0
  %v443 = vadd.f32 0.0, %v442
  %v444 = vpop.f32.mrb[0].mxu0
  %445 = vmatprep.mubr.bf16.mxu0 0
  %446 = vmatmul.mubr.bf16.gmra.mrb[0].mxu0 %v238
  %v447 = vpop.f32.mrb[0].mxu0
  %v448 = vadd.f32 0.0, %v447
  %v449 = vpop.f32.mrb[0].mxu0
  %v450 = vpop.f32.mrb[0].mxu0
  %v451 = vadd.f32 0.0, %v450
  %v452 = vpop.f32.mrb[0].mxu0
  %453 = vmatprep.mubr.bf16.mxu0 0
  %454 = vmatmul.mubr.bf16.gmra.mrb[0].mxu0 %v239
  %v455 = vpop.f32.mrb[0].mxu0
  %v456 = vadd.f32 0.0, %v455
  %v457 = vpop.f32.mrb[0].mxu0
  %v458 = vpop.f32.mrb[0].mxu0
  %v459 = vadd.f32 0.0, %v458
  %v460 = vpop.f32.mrb[0].mxu0
  %461 = vmatprep.mubr.bf16.mxu0 0
  %462 = vmatmul.mubr.bf16.gmra.mrb[0].mxu0 %v240
  %v463 = vpop.f32.mrb[0].mxu0
  %v464 = vadd.f32 0.0, %v463
  %v465 = vpop.f32.mrb[0].mxu0
  %v466 = vpop.f32.mrb[0].mxu0
  %v467 = vadd.f32 0.0, %v466
  %v468 = vpop.f32.mrb[0].mxu0
  %469 = vmatprep.mubr.bf16.mxu0 0
  %470 = vmatmul.mubr.bf16.gmra.mrb[0].mxu0 %v241
  %v471 = vpop.f32.mrb[0].mxu0
  %v472 = vadd.f32 0.0, %v471
  %v473 = vpop.f32.mrb[0].mxu0
  %v474 = vpop.f32.mrb[0].mxu0
  %v475 = vadd.f32 0.0, %v474
  %v476 = vpop.f32.mrb[0].mxu0
  %477 = vmatprep.mubr.bf16.mxu0 0
  %478 = vmatmul.mubr.bf16.gmra.mrb[0].mxu0 %v242
  %v479 = vpop.f32.mrb[0].mxu0
  %v480 = vadd.f32 0.0, %v479
  %v481 = vpop.f32.mrb[0].mxu0
  %v482 = vpop.f32.mrb[0].mxu0
  %v483 = vadd.f32 0.0, %v482
  %v484 = vpop.f32.mrb[0].mxu0
  %485 = vmatprep.mubr.bf16.mxu0 0
  %486 = vmatmul.mubr.bf16.gmra.mrb[0].mxu0 %v243
  %v487 = vpop.f32.mrb[0].mxu0
  %v488 = vadd.f32 0.0, %v487
  %v489 = vpop.f32.mrb[0].mxu0
  %v490 = vpop.f32.mrb[0].mxu0
  %v491 = vadd.f32 0.0, %v490
  %v492 = vpop.f32.mrb[0].mxu0
  %493 = vmatprep.mubr.bf16.mxu0 0
  %494 = vmatmul.mubr.bf16.gmra.mrb[0].mxu0 %v244
  %v495 = vpop.f32.mrb[0].mxu0
  %v496 = vadd.f32 0.0, %v495
  %v497 = vpop.f32.mrb[0].mxu0
  %v498 = vpop.f32.mrb[0].mxu0
  %v499 = vadd.f32 0.0, %v498
  %v500 = vpop.f32.mrb[0].mxu0
  %501 = vmatprep.mubr.bf16.mxu0 0
  %502 = vmatmul.mubr.bf16.gmra.mrb[0].mxu0 %v245
  %v503 = vpop.f32.mrb[0].mxu0
  %v504 = vadd.f32 0.0, %v503
  %v505 = vpop.f32.mrb[0].mxu0
  %v506 = vpop.f32.mrb[0].mxu0
  %v507 = vadd.f32 0.0, %v506
  %v508 = vpop.f32.mrb[0].mxu0
  %509 = vmatprep.mubr.bf16.mxu0 0
  %510 = vmatmul.mubr.bf16.gmra.mrb[0].mxu0 %v246
  %v511 = vpop.f32.mrb[0].mxu0
  %v512 = vadd.f32 0.0, %v511
  %v513 = vpop.f32.mrb[0].mxu0
  %v514 = vpop.f32.mrb[0].mxu0
  %v515 = vadd.f32 0.0, %v514
  %v516 = vpop.f32.mrb[0].mxu0
  %517 = vmatprep.mubr.bf16.mxu0 0
  %518 = vmatmul.mubr.bf16.gmra.mrb[0].mxu0 %v247
  %v519 = vpop.f32.mrb[0].mxu0
  %v520 = vadd.f32 0.0, %v519
  %v521 = vpop.f32.mrb[0].mxu0
  %v522 = vpop.f32.mrb[0].mxu0
  %v523 = vadd.f32 0.0, %v522
  %v524 = vpop.f32.mrb[0].mxu0
  %525 = vmatprep.mubr.bf16.mxu0 0
  %526 = vmatmul.mubr.bf16.gmra.mrb[0].mxu0 %v248
  %v527 = vpop.f32.mrb[0].mxu0
  %v528 = vadd.f32 0.0, %v527
  %v529 = vpop.f32.mrb[0].mxu0
  %v530 = vpop.f32.mrb[0].mxu0
  %v531 = vadd.f32 0.0, %v530
  %v532 = vpop.f32.mrb[0].mxu0
  %533 = vmatprep.mubr.bf16.mxu0 0
  %534 = vmatmul.mubr.bf16.gmra.mrb[0].mxu0 %v249
  %v535 = vpop.f32.mrb[0].mxu0
  %v536 = vadd.f32 0.0, %v535
  %v537 = vpop.f32.mrb[0].mxu0
  %v538 = vpop.f32.mrb[0].mxu0
  %v539 = vadd.f32 0.0, %v538
  %v540 = vpop.f32.mrb[0].mxu0
  %541 = vmatprep.mubr.bf16.mxu0 0
  %542 = vmatmul.mubr.bf16.gmra.mrb[0].mxu0 %v250
  %v543 = vpop.f32.mrb[0].mxu0
  %v544 = vadd.f32 0.0, %v543
  %v545 = vpop.f32.mrb[0].mxu0
  %v546 = vpop.f32.mrb[0].mxu0
  %v547 = vadd.f32 0.0, %v546
  %v548 = vpop.f32.mrb[0].mxu0
  %549 = vmatprep.mubr.bf16.mxu0 0
  %550 = vmatmul.mubr.bf16.gmra.mrb[0].mxu0 %v251
  %v551 = vpop.f32.mrb[0].mxu0
  %v552 = vadd.f32 0.0, %v551
  %v553 = vpop.f32.mrb[0].mxu0
  %v554 = vpop.f32.mrb[0].mxu0
  %v555 = vadd.f32 0.0, %v554
  %v556 = vpop.f32.mrb[0].mxu0
  %557 = vmatprep.mubr.bf16.mxu0 0
  %558 = vmatmul.mubr.bf16.gmra.mrb[0].mxu0 %v252
  %v559 = vpop.f32.mrb[0].mxu0
  %v560 = vadd.f32 0.0, %v559
  %v561 = vpop.f32.mrb[0].mxu0
  %v562 = vpop.f32.mrb[0].mxu0
  %v563 = vadd.f32 0.0, %v562
  %v564 = vpop.f32.mrb[0].mxu0
  %565 = vmatprep.mubr.bf16.mxu0 0
  %566 = vmatmul.mubr.bf16.gmra.mrb[0].mxu0 %v253
  %v567 = vpop.f32.mrb[0].mxu0
  %v568 = vadd.f32 0.0, %v567
  %v569 = vpop.f32.mrb[0].mxu0
  %v570 = vpop.f32.mrb[0].mxu0
  %v571 = vadd.f32 0.0, %v570
  %v572 = vpop.f32.mrb[0].mxu0
  %573 = vmatprep.mubr.bf16.mxu0 0
  %574 = vmatmul.mubr.bf16.gmra.mrb[0].mxu0 %v254
  %v575 = vpop.f32.mrb[0].mxu0
  %v576 = vadd.f32 0.0, %v575
  %v577 = vpop.f32.mrb[0].mxu0
  %v578 = vpop.f32.mrb[0].mxu0
  %v579 = vadd.f32 0.0, %v578
  %v580 = vpop.f32.mrb[0].mxu0
  %581 = vmatprep.mubr.bf16.mxu0 0
  %582 = vmatmul.mubr.bf16.gmra.mrb[0].mxu0 %v255
  %v583 = vpop.f32.mrb[0].mxu0
  %v584 = vadd.f32 0.0, %v583
  %v585 = vpop.f32.mrb[0].mxu0
  %v586 = vpop.f32.mrb[0].mxu0
  %v587 = vadd.f32 0.0, %v586
  %v588 = vpop.f32.mrb[0].mxu0
  %589 = vmatprep.mubr.bf16.mxu0 0
  %590 = vmatmul.mubr.bf16.gmra.mrb[0].mxu0 %v256
  %v591 = vpop.f32.mrb[0].mxu0
  %v592 = vadd.f32 0.0, %v591
  %v593 = vpop.f32.mrb[0].mxu0
  %v594 = vpop.f32.mrb[0].mxu0
  %v595 = vadd.f32 0.0, %v594
  %v596 = vpop.f32.mrb[0].mxu0
  %597 = vmatprep.mubr.bf16.mxu0 0
  %598 = vmatmul.mubr.bf16.gmra.mrb[0].mxu0 %v257
  %v599 = vpop.f32.mrb[0].mxu0
  %v600 = vadd.f32 0.0, %v599
  %v601 = vpop.f32.mrb[0].mxu0
  %v602 = vpop.f32.mrb[0].mxu0
  %v603 = vadd.f32 0.0, %v602
  %v604 = vpop.f32.mrb[0].mxu0
  %605 = vmatprep.mubr.bf16.mxu0 0
  %606 = vmatmul.mubr.bf16.gmra.mrb[0].mxu0 %v258
  %v607 = vpop.f32.mrb[0].mxu0
  %v608 = vadd.f32 0.0, %v607
  %v609 = vpop.f32.mrb[0].mxu0
  %v610 = vpop.f32.mrb[0].mxu0
  %v611 = vadd.f32 0.0, %v610
  %v612 = vpop.f32.mrb[0].mxu0
  %613 = vmatprep.mubr.bf16.mxu0 0
  %614 = vmatmul.mubr.bf16.gmra.mrb[0].mxu0 %v259
  %v615 = vpop.f32.mrb[0].mxu0
  %v616 = vadd.f32 0.0, %v615
  %v617 = vpop.f32.mrb[0].mxu0
  %v618 = vpop.f32.mrb[0].mxu0
  %v619 = vadd.f32 0.0, %v618
  %v620 = vpop.f32.mrb[0].mxu0
  %621 = vmatprep.mubr.bf16.mxu0 0
  %622 = vmatmul.mubr.bf16.gmra.mrb[0].mxu0 %v260
  %v623 = vpop.f32.mrb[0].mxu0
  %v624 = vadd.f32 0.0, %v623
  %v625 = vpop.f32.mrb[0].mxu0
  %v626 = vpop.f32.mrb[0].mxu0
  %v627 = vadd.f32 0.0, %v626
  %v628 = vpop.f32.mrb[0].mxu0
  %629 = vdwg.mxu0
  %v630 = vpack.c.bf16 %v379, %v376
  %v631 = vpack.c.bf16 %v387, %v384
  %v632 = vpack.c.bf16 %v395, %v392
  %v633 = vpack.c.bf16 %v403, %v400
  %v634 = vpack.c.bf16 %v411, %v408
  %v635 = vpack.c.bf16 %v419, %v416
  %v636 = vpack.c.bf16 %v427, %v424
  %v637 = vpack.c.bf16 %v435, %v432
  %v638 = vpack.c.bf16 %v443, %v440
  %v639 = vpack.c.bf16 %v451, %v448
  %v640 = vpack.c.bf16 %v459, %v456
  %v641 = vpack.c.bf16 %v467, %v464
  %v642 = vpack.c.bf16 %v475, %v472
  %v643 = vpack.c.bf16 %v483, %v480
  %v644 = vpack.c.bf16 %v491, %v488
  %v645 = vpack.c.bf16 %v499, %v496
  %v646 = vpack.c.bf16 %v507, %v504
  %v647 = vpack.c.bf16 %v515, %v512
  %v648 = vpack.c.bf16 %v523, %v520
  %v649 = vpack.c.bf16 %v531, %v528
  %v650 = vpack.c.bf16 %v539, %v536
  %v651 = vpack.c.bf16 %v547, %v544
  %v652 = vpack.c.bf16 %v555, %v552
  %v653 = vpack.c.bf16 %v563, %v560
  %v654 = vpack.c.bf16 %v571, %v568
  %v655 = vpack.c.bf16 %v579, %v576
  %v656 = vpack.c.bf16 %v587, %v584
  %v657 = vpack.c.bf16 %v595, %v592
  %v658 = vpack.c.bf16 %v603, %v600
  %v659 = vpack.c.bf16 %v611, %v608
  %v660 = vpack.c.bf16 %v619, %v616
  %v661 = vpack.c.bf16 %v627, %v624
  %v694 = vunpack.c.l.b16 %v630
  %v695 = vunpack.c.h.b16 %v630
  %v696 = vunpack.c.l.b16 %v631
  %v697 = vunpack.c.h.b16 %v631
  %v698 = vunpack.c.l.b16 %v632
  %v699 = vunpack.c.h.b16 %v632
  %v700 = vunpack.c.l.b16 %v633
  %v701 = vunpack.c.h.b16 %v633
  %v702 = vunpack.c.l.b16 %v634
  %v703 = vunpack.c.h.b16 %v634
  %v704 = vunpack.c.l.b16 %v635
  %v705 = vunpack.c.h.b16 %v635
  %v706 = vunpack.c.l.b16 %v636
  %v707 = vunpack.c.h.b16 %v636
  %v708 = vunpack.c.l.b16 %v637
  %v709 = vunpack.c.h.b16 %v637
  %v710 = vunpack.c.l.b16 %v638
  %v711 = vunpack.c.h.b16 %v638
  %v712 = vunpack.c.l.b16 %v639
  %v713 = vunpack.c.h.b16 %v639
  %v714 = vunpack.c.l.b16 %v640
  %v715 = vunpack.c.h.b16 %v640
  %v716 = vunpack.c.l.b16 %v641
  %v717 = vunpack.c.h.b16 %v641
  %v718 = vunpack.c.l.b16 %v642
  %v719 = vunpack.c.h.b16 %v642
  %v720 = vunpack.c.l.b16 %v643
  %v721 = vunpack.c.h.b16 %v643
  %v722 = vunpack.c.l.b16 %v644
  %v723 = vunpack.c.h.b16 %v644
  %v724 = vunpack.c.l.b16 %v645
  %v725 = vunpack.c.h.b16 %v645
  %v726 = vunpack.c.l.b16 %v646
  %v727 = vunpack.c.h.b16 %v646
  %v728 = vunpack.c.l.b16 %v647
  %v729 = vunpack.c.h.b16 %v647
  %v730 = vunpack.c.l.b16 %v648
  %v731 = vunpack.c.h.b16 %v648
  %v732 = vunpack.c.l.b16 %v649
  %v733 = vunpack.c.h.b16 %v649
  %v734 = vunpack.c.l.b16 %v650
  %v735 = vunpack.c.h.b16 %v650
  %v736 = vunpack.c.l.b16 %v651
  %v737 = vunpack.c.h.b16 %v651
  %v738 = vunpack.c.l.b16 %v652
  %v739 = vunpack.c.h.b16 %v652
  %v740 = vunpack.c.l.b16 %v653
  %v741 = vunpack.c.h.b16 %v653
  %v742 = vunpack.c.l.b16 %v654
  %v743 = vunpack.c.h.b16 %v654
  %v744 = vunpack.c.l.b16 %v655
  %v745 = vunpack.c.h.b16 %v655
  %v746 = vunpack.c.l.b16 %v656
  %v747 = vunpack.c.h.b16 %v656
  %v748 = vunpack.c.l.b16 %v657
  %v749 = vunpack.c.h.b16 %v657
  %v750 = vunpack.c.l.b16 %v658
  %v751 = vunpack.c.h.b16 %v658
  %v752 = vunpack.c.l.b16 %v659
  %v753 = vunpack.c.h.b16 %v659
  %v754 = vunpack.c.l.b16 %v660
  %v755 = vunpack.c.h.b16 %v660
  %v756 = vunpack.c.l.b16 %v661
  %v757 = vunpack.c.h.b16 %v661
  %v758 = vpack.c.b16 %v694, %v694
  %v759 = vpack.c.b16 %v695, %v695
  %v760 = vpack.c.b16 %v696, %v696
  %v761 = vpack.c.b16 %v697, %v697
  %v762 = vpack.c.b16 %v698, %v698
  %v763 = vpack.c.b16 %v699, %v699
  %v764 = vpack.c.b16 %v700, %v700
  %v765 = vpack.c.b16 %v701, %v701
  %v766 = vpack.c.b16 %v702, %v702
  %v767 = vpack.c.b16 %v703, %v703
  %v768 = vpack.c.b16 %v704, %v704
  %v769 = vpack.c.b16 %v705, %v705
  %v770 = vpack.c.b16 %v706, %v706
  %v771 = vpack.c.b16 %v707, %v707
  %v772 = vpack.c.b16 %v708, %v708
  %v773 = vpack.c.b16 %v709, %v709
  %v774 = vpack.c.b16 %v710, %v710
  %v775 = vpack.c.b16 %v711, %v711
  %v776 = vpack.c.b16 %v712, %v712
  %v777 = vpack.c.b16 %v713, %v713
  %v778 = vpack.c.b16 %v714, %v714
  %v779 = vpack.c.b16 %v715, %v715
  %v780 = vpack.c.b16 %v716, %v716
  %v781 = vpack.c.b16 %v717, %v717
  %v782 = vpack.c.b16 %v718, %v718
  %v783 = vpack.c.b16 %v719, %v719
  %v784 = vpack.c.b16 %v720, %v720
  %v785 = vpack.c.b16 %v721, %v721
  %v786 = vpack.c.b16 %v722, %v722
  %v787 = vpack.c.b16 %v723, %v723
  %v788 = vpack.c.b16 %v724, %v724
  %v789 = vpack.c.b16 %v725, %v725
  %v790 = vpack.c.b16 %v726, %v726
  %v791 = vpack.c.b16 %v727, %v727
  %v792 = vpack.c.b16 %v728, %v728
  %v793 = vpack.c.b16 %v729, %v729
  %v794 = vpack.c.b16 %v730, %v730
  %v795 = vpack.c.b16 %v731, %v731
  %v796 = vpack.c.b16 %v732, %v732
  %v797 = vpack.c.b16 %v733, %v733
  %v798 = vpack.c.b16 %v734, %v734
  %v799 = vpack.c.b16 %v735, %v735
  %v800 = vpack.c.b16 %v736, %v736
  %v801 = vpack.c.b16 %v737, %v737
  %v802 = vpack.c.b16 %v738, %v738
  %v803 = vpack.c.b16 %v739, %v739
  %v804 = vpack.c.b16 %v740, %v740
  %v805 = vpack.c.b16 %v741, %v741
  %v806 = vpack.c.b16 %v742, %v742
  %v807 = vpack.c.b16 %v743, %v743
  %v808 = vpack.c.b16 %v744, %v744
  %v809 = vpack.c.b16 %v745, %v745
  %v810 = vpack.c.b16 %v746, %v746
  %v811 = vpack.c.b16 %v747, %v747
  %v812 = vpack.c.b16 %v748, %v748
  %v813 = vpack.c.b16 %v749, %v749
  %v814 = vpack.c.b16 %v750, %v750
  %v815 = vpack.c.b16 %v751, %v751
  %v816 = vpack.c.b16 %v752, %v752
  %v817 = vpack.c.b16 %v753, %v753
  %v818 = vpack.c.b16 %v754, %v754
  %v819 = vpack.c.b16 %v755, %v755
  %v820 = vpack.c.b16 %v756, %v756
  %v821 = vpack.c.b16 %v757, %v757
  %886 = vst [vmem:[%s2] sm:$0xf] %v758
  %887 = vst [vmem:[%s2 + $0x4] sm:$0xf] %v759
  %888 = vst [vmem:[%s2 + $0x8] sm:$0xf] %v760
  %889 = vst [vmem:[%s2 + $0xc] sm:$0xf] %v761
  %890 = vst [vmem:[%s2 + $0x10] sm:$0xf] %v762
  %891 = vst [vmem:[%s2 + $0x14] sm:$0xf] %v763
  %892 = vst [vmem:[%s2 + $0x18] sm:$0xf] %v764
  %893 = vst [vmem:[%s2 + $0x1c] sm:$0xf] %v765
  %894 = vst [vmem:[%s2 + $0x20] sm:$0xf] %v766
  %895 = vst [vmem:[%s2 + $0x24] sm:$0xf] %v767
  %896 = vst [vmem:[%s2 + $0x28] sm:$0xf] %v768
  %897 = vst [vmem:[%s2 + $0x2c] sm:$0xf] %v769
  %898 = vst [vmem:[%s2 + $0x30] sm:$0xf] %v770
  %899 = vst [vmem:[%s2 + $0x34] sm:$0xf] %v771
  %900 = vst [vmem:[%s2 + $0x38] sm:$0xf] %v772
  %901 = vst [vmem:[%s2 + $0x3c] sm:$0xf] %v773
  %902 = vst [vmem:[%s2 + $0x40] sm:$0xf] %v774
  %903 = vst [vmem:[%s2 + $0x44] sm:$0xf] %v775
  %904 = vst [vmem:[%s2 + $0x48] sm:$0xf] %v776
  %905 = vst [vmem:[%s2 + $0x4c] sm:$0xf] %v777
  %906 = vst [vmem:[%s2 + $0x50] sm:$0xf] %v778
  %907 = vst [vmem:[%s2 + $0x54] sm:$0xf] %v779
  %908 = vst [vmem:[%s2 + $0x58] sm:$0xf] %v780
  %909 = vst [vmem:[%s2 + $0x5c] sm:$0xf] %v781
  %910 = vst [vmem:[%s2 + $0x60] sm:$0xf] %v782
  %911 = vst [vmem:[%s2 + $0x64] sm:$0xf] %v783
  %912 = vst [vmem:[%s2 + $0x68] sm:$0xf] %v784
  %913 = vst [vmem:[%s2 + $0x6c] sm:$0xf] %v785
  %914 = vst [vmem:[%s2 + $0x70] sm:$0xf] %v786
  %915 = vst [vmem:[%s2 + $0x74] sm:$0xf] %v787
  %916 = vst [vmem:[%s2 + $0x78] sm:$0xf] %v788
  %917 = vst [vmem:[%s2 + $0x7c] sm:$0xf] %v789
  %918 = vst [vmem:[%s2 + $0x80] sm:$0xf] %v790
  %919 = vst [vmem:[%s2 + $0x84] sm:$0xf] %v791
  %920 = vst [vmem:[%s2 + $0x88] sm:$0xf] %v792
  %921 = vst [vmem:[%s2 + $0x8c] sm:$0xf] %v793
  %922 = vst [vmem:[%s2 + $0x90] sm:$0xf] %v794
  %923 = vst [vmem:[%s2 + $0x94] sm:$0xf] %v795
  %924 = vst [vmem:[%s2 + $0x98] sm:$0xf] %v796
  %925 = vst [vmem:[%s2 + $0x9c] sm:$0xf] %v797
  %926 = vst [vmem:[%s2 + $0xa0] sm:$0xf] %v798
  %927 = vst [vmem:[%s2 + $0xa4] sm:$0xf] %v799
  %928 = vst [vmem:[%s2 + $0xa8] sm:$0xf] %v800
  %929 = vst [vmem:[%s2 + $0xac] sm:$0xf] %v801
  %930 = vst [vmem:[%s2 + $0xb0] sm:$0xf] %v802
  %931 = vst [vmem:[%s2 + $0xb4] sm:$0xf] %v803
  %932 = vst [vmem:[%s2 + $0xb8] sm:$0xf] %v804
  %933 = vst [vmem:[%s2 + $0xbc] sm:$0xf] %v805
  %934 = vst [vmem:[%s2 + $0xc0] sm:$0xf] %v806
  %935 = vst [vmem:[%s2 + $0xc4] sm:$0xf] %v807
  %936 = vst [vmem:[%s2 + $0xc8] sm:$0xf] %v808
  %937 = vst [vmem:[%s2 + $0xcc] sm:$0xf] %v809
  %938 = vst [vmem:[%s2 + $0xd0] sm:$0xf] %v810
  %939 = vst [vmem:[%s2 + $0xd4] sm:$0xf] %v811
  %940 = vst [vmem:[%s2 + $0xd8] sm:$0xf] %v812
  %941 = vst [vmem:[%s2 + $0xdc] sm:$0xf] %v813
  %942 = vst [vmem:[%s2 + $0xe0] sm:$0xf] %v814
  %943 = vst [vmem:[%s2 + $0xe4] sm:$0xf] %v815
  %944 = vst [vmem:[%s2 + $0xe8] sm:$0xf] %v816
  %945 = vst [vmem:[%s2 + $0xec] sm:$0xf] %v817
  %946 = vst [vmem:[%s2 + $0xf0] sm:$0xf] %v818
  %947 = vst [vmem:[%s2 + $0xf4] sm:$0xf] %v819
  %948 = vst [vmem:[%s2 + $0xf8] sm:$0xf] %v820
  %949 = vst [vmem:[%s2 + $0xfc] sm:$0xf] %v821
  %v950 = vld [vmem:[%s3] sm:$0x1]
  %v951 = vadd.f32 %v376, %v379
  %v952 = vadd.f32 %v951, %v384
  %v953 = vadd.f32 %v952, %v387
  %v954 = vadd.f32 %v953, %v392
  %v955 = vadd.f32 %v954, %v395
  %v956 = vadd.f32 %v955, %v400
  %v957 = vadd.f32 %v956, %v403
  %v958 = vadd.f32 %v957, %v408
  %v959 = vadd.f32 %v958, %v411
  %v960 = vadd.f32 %v959, %v416
  %v961 = vadd.f32 %v960, %v419
  %v962 = vadd.f32 %v961, %v424
  %v963 = vadd.f32 %v962, %v427
  %v964 = vadd.f32 %v963, %v432
  %v965 = vadd.f32 %v964, %v435
  %v966 = vadd.f32 %v965, %v440
  %v967 = vadd.f32 %v966, %v443
  %v968 = vadd.f32 %v967, %v448
  %v969 = vadd.f32 %v968, %v451
  %v970 = vadd.f32 %v969, %v456
  %v971 = vadd.f32 %v970, %v459
  %v972 = vadd.f32 %v971, %v464
  %v973 = vadd.f32 %v972, %v467
  %v974 = vadd.f32 %v973, %v472
  %v975 = vadd.f32 %v974, %v475
  %v976 = vadd.f32 %v975, %v480
  %v977 = vadd.f32 %v976, %v483
  %v978 = vadd.f32 %v977, %v488
  %v979 = vadd.f32 %v978, %v491
  %v980 = vadd.f32 %v979, %v496
  %v981 = vadd.f32 %v980, %v499
  %v982 = vadd.f32 %v981, %v504
  %v983 = vadd.f32 %v982, %v507
  %v984 = vadd.f32 %v983, %v512
  %v985 = vadd.f32 %v984, %v515
  %v986 = vadd.f32 %v985, %v520
  %v987 = vadd.f32 %v986, %v523
  %v988 = vadd.f32 %v987, %v528
  %v989 = vadd.f32 %v988, %v531
  %v990 = vadd.f32 %v989, %v536
  %v991 = vadd.f32 %v990, %v539
  %v992 = vadd.f32 %v991, %v544
  %v993 = vadd.f32 %v992, %v547
  %v994 = vadd.f32 %v993, %v552
  %v995 = vadd.f32 %v994, %v555
  %v996 = vadd.f32 %v995, %v560
  %v997 = vadd.f32 %v996, %v563
  %v998 = vadd.f32 %v997, %v568
  %v999 = vadd.f32 %v998, %v571
  %v1000 = vadd.f32 %v999, %v576
  %v1001 = vadd.f32 %v1000, %v579
  %v1002 = vadd.f32 %v1001, %v584
  %v1003 = vadd.f32 %v1002, %v587
  %v1004 = vadd.f32 %v1003, %v592
  %v1005 = vadd.f32 %v1004, %v595
  %v1006 = vadd.f32 %v1005, %v600
  %v1007 = vadd.f32 %v1006, %v603
  %v1008 = vadd.f32 %v1007, %v608
  %v1009 = vadd.f32 %v1008, %v611
  %v1010 = vadd.f32 %v1009, %v616
  %v1011 = vadd.f32 %v1010, %v619
  %v1012 = vadd.f32 %v1011, %v624
  %v1013 = vadd.f32 %v1012, %v627
  %v1014 = vrot.slane %v1013, 4
  %v1015 = vadd.f32 %v1013, %v1014
  %v1016 = vrot.slane %v1015, 2
  %v1017 = vadd.f32 %v1015, %v1016
  %v1018 = vrot.slane %v1017, 1
  %v1019 = vadd.f32 %v1017, %v1018
  %v1020 = vadd.f32 %v950, %v1019
  %1021 = vst [vmem:[%s3] sm:$0x1] %v1020
  %v1022 = vld [vmem:[%s4] sm:$0x1]
  %v1023 = vmul.f32 %v376, %v376
  %v1024 = vmul.f32 %v379, %v379
  %v1025 = vmul.f32 %v384, %v384
  %v1026 = vmul.f32 %v387, %v387
  %v1027 = vmul.f32 %v392, %v392
  %v1028 = vmul.f32 %v395, %v395
  %v1029 = vmul.f32 %v400, %v400
  %v1030 = vmul.f32 %v403, %v403
  %v1031 = vmul.f32 %v408, %v408
  %v1032 = vmul.f32 %v411, %v411
  %v1033 = vmul.f32 %v416, %v416
  %v1034 = vmul.f32 %v419, %v419
  %v1035 = vmul.f32 %v424, %v424
  %v1036 = vmul.f32 %v427, %v427
  %v1037 = vmul.f32 %v432, %v432
  %v1038 = vmul.f32 %v435, %v435
  %v1039 = vmul.f32 %v440, %v440
  %v1040 = vmul.f32 %v443, %v443
  %v1041 = vmul.f32 %v448, %v448
  %v1042 = vmul.f32 %v451, %v451
  %v1043 = vmul.f32 %v456, %v456
  %v1044 = vmul.f32 %v459, %v459
  %v1045 = vmul.f32 %v464, %v464
  %v1046 = vmul.f32 %v467, %v467
  %v1047 = vmul.f32 %v472, %v472
  %v1048 = vmul.f32 %v475, %v475
  %v1049 = vmul.f32 %v480, %v480
  %v1050 = vmul.f32 %v483, %v483
  %v1051 = vmul.f32 %v488, %v488
  %v1052 = vmul.f32 %v491, %v491
  %v1053 = vmul.f32 %v496, %v496
  %v1054 = vmul.f32 %v499, %v499
  %v1055 = vmul.f32 %v504, %v504
  %v1056 = vmul.f32 %v507, %v507
  %v1057 = vmul.f32 %v512, %v512
  %v1058 = vmul.f32 %v515, %v515
  %v1059 = vmul.f32 %v520, %v520
  %v1060 = vmul.f32 %v523, %v523
  %v1061 = vmul.f32 %v528, %v528
  %v1062 = vmul.f32 %v531, %v531
  %v1063 = vmul.f32 %v536, %v536
  %v1064 = vmul.f32 %v539, %v539
  %v1065 = vmul.f32 %v544, %v544
  %v1066 = vmul.f32 %v547, %v547
  %v1067 = vmul.f32 %v552, %v552
  %v1068 = vmul.f32 %v555, %v555
  %v1069 = vmul.f32 %v560, %v560
  %v1070 = vmul.f32 %v563, %v563
  %v1071 = vmul.f32 %v568, %v568
  %v1072 = vmul.f32 %v571, %v571
  %v1073 = vmul.f32 %v576, %v576
  %v1074 = vmul.f32 %v579, %v579
  %v1075 = vmul.f32 %v584, %v584
  %v1076 = vmul.f32 %v587, %v587
  %v1077 = vmul.f32 %v592, %v592
  %v1078 = vmul.f32 %v595, %v595
  %v1079 = vmul.f32 %v600, %v600
  %v1080 = vmul.f32 %v603, %v603
  %v1081 = vmul.f32 %v608, %v608
  %v1082 = vmul.f32 %v611, %v611
  %v1083 = vmul.f32 %v616, %v616
  %v1084 = vmul.f32 %v619, %v619
  %v1085 = vmul.f32 %v624, %v624
  %v1086 = vmul.f32 %v627, %v627
  %v1087 = vadd.f32 %v1023, %v1024
  %v1088 = vadd.f32 %v1087, %v1025
  %v1089 = vadd.f32 %v1088, %v1026
  %v1090 = vadd.f32 %v1089, %v1027
  %v1091 = vadd.f32 %v1090, %v1028
  %v1092 = vadd.f32 %v1091, %v1029
  %v1093 = vadd.f32 %v1092, %v1030
  %v1094 = vadd.f32 %v1093, %v1031
  %v1095 = vadd.f32 %v1094, %v1032
  %v1096 = vadd.f32 %v1095, %v1033
  %v1097 = vadd.f32 %v1096, %v1034
  %v1098 = vadd.f32 %v1097, %v1035
  %v1099 = vadd.f32 %v1098, %v1036
  %v1100 = vadd.f32 %v1099, %v1037
  %v1101 = vadd.f32 %v1100, %v1038
  %v1102 = vadd.f32 %v1101, %v1039
  %v1103 = vadd.f32 %v1102, %v1040
  %v1104 = vadd.f32 %v1103, %v1041
  %v1105 = vadd.f32 %v1104, %v1042
  %v1106 = vadd.f32 %v1105, %v1043
  %v1107 = vadd.f32 %v1106, %v1044
  %v1108 = vadd.f32 %v1107, %v1045
  %v1109 = vadd.f32 %v1108, %v1046
  %v1110 = vadd.f32 %v1109, %v1047
  %v1111 = vadd.f32 %v1110, %v1048
  %v1112 = vadd.f32 %v1111, %v1049
  %v1113 = vadd.f32 %v1112, %v1050
  %v1114 = vadd.f32 %v1113, %v1051
  %v1115 = vadd.f32 %v1114, %v1052
  %v1116 = vadd.f32 %v1115, %v1053
  %v1117 = vadd.f32 %v1116, %v1054
  %v1118 = vadd.f32 %v1117, %v1055
  %v1119 = vadd.f32 %v1118, %v1056
  %v1120 = vadd.f32 %v1119, %v1057
  %v1121 = vadd.f32 %v1120, %v1058
  %v1122 = vadd.f32 %v1121, %v1059
  %v1123 = vadd.f32 %v1122, %v1060
  %v1124 = vadd.f32 %v1123, %v1061
  %v1125 = vadd.f32 %v1124, %v1062
  %v1126 = vadd.f32 %v1125, %v1063
  %v1127 = vadd.f32 %v1126, %v1064
  %v1128 = vadd.f32 %v1127, %v1065
  %v1129 = vadd.f32 %v1128, %v1066
  %v1130 = vadd.f32 %v1129, %v1067
  %v1131 = vadd.f32 %v1130, %v1068
  %v1132 = vadd.f32 %v1131, %v1069
  %v1133 = vadd.f32 %v1132, %v1070
  %v1134 = vadd.f32 %v1133, %v1071
  %v1135 = vadd.f32 %v1134, %v1072
  %v1136 = vadd.f32 %v1135, %v1073
  %v1137 = vadd.f32 %v1136, %v1074
  %v1138 = vadd.f32 %v1137, %v1075
  %v1139 = vadd.f32 %v1138, %v1076
  %v1140 = vadd.f32 %v1139, %v1077
  %v1141 = vadd.f32 %v1140, %v1078
  %v1142 = vadd.f32 %v1141, %v1079
  %v1143 = vadd.f32 %v1142, %v1080
  %v1144 = vadd.f32 %v1143, %v1081
  %v1145 = vadd.f32 %v1144, %v1082
  %v1146 = vadd.f32 %v1145, %v1083
  %v1147 = vadd.f32 %v1146, %v1084
  %v1148 = vadd.f32 %v1147, %v1085
  %v1149 = vadd.f32 %v1148, %v1086
  %v1150 = vrot.slane %v1149, 4
  %v1151 = vadd.f32 %v1149, %v1150
  %v1152 = vrot.slane %v1151, 2
  %v1153 = vadd.f32 %v1151, %v1152
  %v1154 = vrot.slane %v1153, 1
  %v1155 = vadd.f32 %v1153, %v1154
  %v1156 = vadd.f32 %v1022, %v1155
  %1157 = vst [vmem:[%s4] sm:$0x1] %v1156
  // Predicated region
  $region14: #{residual_block_forward.4} parent=0 // pred_check
    _
  $region15: #{residual_block_forward.4} parent=0 // pred_check_branch
    %1159 = sbr.rel (0) target = $region17
  $region16: #{residual_block_forward.4} parent=0 // pred_region
    _
  $region17: #{residual_block_forward.4} parent=0 // pred_fallthru
    _
  // Predicated region
  $region18: #{residual_block_forward.4} parent=0 // pred_check
    _
  $region19: #{residual_block_forward.4} parent=0 // pred_check_branch
    %1161 = sbr.rel (0) target = $region21
  $region20: #{residual_block_forward.4} parent=0 // pred_region
    _
  $region21: #{residual_block_forward.4} parent=0 // pred_fallthru
    _
  // Predicated region
  $region22: #{residual_block_forward.4} parent=0 // pred_check
    _
  $region23: #{residual_block_forward.4} parent=0 // pred_check_branch
    %1163 = sbr.rel (0) target = $region25
  $region24: #{residual_block_forward.4} parent=0 // pred_region
    _
  $region25: #{residual_block_forward.4} parent=0 // pred_fallthru
    _
  // Predicated region
  $region26: #{residual_block_forward.4} parent=0 // pred_check
    _
  $region27: #{residual_block_forward.4} parent=0 // pred_check_branch
    %1165 = sbr.rel (0) target = $region29
  $region28: #{residual_block_forward.4} parent=0 // pred_region
    _
  $region29: #{residual_block_forward.4} parent=0 // pred_fallthru
    _
  // Predicated region
  $region30: #{residual_block_forward.4} parent=0 // pred_check
    _
  $region31: #{residual_block_forward.4} parent=0 // pred_check_branch
    %1167 = sbr.rel (0) target = $region33
  $region32: #{residual_block_forward.4} parent=0 // pred_region
    _
  $region33: #{residual_block_forward.4} parent=0 // pred_fallthru
    _
  // Predicated region
  $region34: #{residual_block_forward.4} parent=0 // pred_check
    _
  $region35: #{residual_block_forward.4} parent=0 // pred_check_branch
    %1169 = sbr.rel (0) target = $region37
  $region36: #{residual_block_forward.4} parent=0 // pred_region
    _
  $region37: #{residual_block_forward.4} parent=0 // pred_fallthru
    _

// kernel: residual_block_forward.7
$region0: #{residual_block_forward.7}
  #allocation0 [shape = 'u32[]', space=smem, size = 0x4, offset = 0x4, fixed_abs, tag = 'smem constant byte address 0x4 - core index']
  #allocation1 [shape = 'u32[144,128]{1,0:T(1,128)}', space=vmem, size = 0x12000, scoped, tag = 'internal scratch']
  %s0 = inlined_call_operand.vmem [shape: f32[512,128], index: 0, kind: input, shape index: {}]
  %s1 = inlined_call_operand.vmem [shape: f32[1,128], index: 1, kind: input, shape index: {}]
  %s2 = inlined_call_operand.vmem [shape: f32[1,128], index: 2, kind: input, shape index: {}]
  %s3 = inlined_call_operand.vmem [shape: f32[512,128], index: 3, kind: input, shape index: {}]
  %s4 = inlined_call_operand.vmem [shape: f32[1,128], index: 4, kind: input, shape index: {}]
  %s5 = inlined_call_operand.vmem [shape: f32[1,128], index: 5, kind: input, shape index: {}]
  %s6 = inlined_call_operand.vmem [shape: f32[512,128], index: 6, kind: output, shape index: {}]
  %s7 = sld [smem:[#allocation0]]
  $region34: #{residual_block_forward.7} parent=0
    _
  %s9 = ssub.s32 1, %s7
  %s10 = scalar_select 0, %s9, %s7
  // Predicated region
  $region2: #{residual_block_forward.7} parent=0 // pred_check
    _
  $region3: #{residual_block_forward.7} parent=0 // pred_check_branch
    %12 = sbr.rel (0) target = $region5
  $region4: #{residual_block_forward.7} parent=0 // pred_region
    _
  $region5: #{residual_block_forward.7} parent=0 // pred_fallthru
    _
  // Predicated region
  $region6: #{residual_block_forward.7} parent=0 // pred_check
    _
  $region7: #{residual_block_forward.7} parent=0 // pred_check_branch
    %14 = sbr.rel (0) target = $region9
  $region8: #{residual_block_forward.7} parent=0 // pred_region
    _
  $region9: #{residual_block_forward.7} parent=0 // pred_fallthru
    _
  // Predicated region
  $region10: #{residual_block_forward.7} parent=0 // pred_check
    _
  $region11: #{residual_block_forward.7} parent=0 // pred_check_branch
    %16 = sbr.rel (0) target = $region13
  $region12: #{residual_block_forward.7} parent=0 // pred_region
    _
  $region13: #{residual_block_forward.7} parent=0 // pred_fallthru
    _
  // Predicated region
  $region14: #{residual_block_forward.7} parent=0 // pred_check
    _
  $region15: #{residual_block_forward.7} parent=0 // pred_check_branch
    %18 = sbr.rel (0) target = $region17
  $region16: #{residual_block_forward.7} parent=0 // pred_region
    _
  $region17: #{residual_block_forward.7} parent=0 // pred_fallthru
    _
  // Predicated region
  $region18: #{residual_block_forward.7} parent=0 // pred_check
    _
  $region19: #{residual_block_forward.7} parent=0 // pred_check_branch
    %20 = sbr.rel (0) target = $region21
  $region20: #{residual_block_forward.7} parent=0 // pred_region
    _
  $region21: #{residual_block_forward.7} parent=0 // pred_fallthru
    _
  // Predicated region
  $region22: #{residual_block_forward.7} parent=0 // pred_check
    _
  $region23: #{residual_block_forward.7} parent=0 // pred_check_branch
    %22 = sbr.rel (0) target = $region25
  $region24: #{residual_block_forward.7} parent=0 // pred_region
    _
  $region25: #{residual_block_forward.7} parent=0 // pred_fallthru
    _
  %v23 = vld [vmem:[%s0] sm:$0xff]
  %v24 = vld [vmem:[%s0 + $0x8] sm:$0xff]
  %v25 = vld [vmem:[%s0 + $0x10] sm:$0xff]
  %v26 = vld [vmem:[%s0 + $0x18] sm:$0xff]
  %v27 = vld [vmem:[%s0 + $0x20] sm:$0xff]
  %v28 = vld [vmem:[%s0 + $0x28] sm:$0xff]
  %v29 = vld [vmem:[%s0 + $0x30] sm:$0xff]
  %v30 = vld [vmem:[%s0 + $0x38] sm:$0xff]
  %v31 = vld [vmem:[%s0 + $0x40] sm:$0xff]
  %v32 = vld [vmem:[%s0 + $0x48] sm:$0xff]
  %v33 = vld [vmem:[%s0 + $0x50] sm:$0xff]
  %v34 = vld [vmem:[%s0 + $0x58] sm:$0xff]
  %v35 = vld [vmem:[%s0 + $0x60] sm:$0xff]
  %v36 = vld [vmem:[%s0 + $0x68] sm:$0xff]
  %v37 = vld [vmem:[%s0 + $0x70] sm:$0xff]
  %v38 = vld [vmem:[%s0 + $0x78] sm:$0xff]
  %v39 = vld [vmem:[%s0 + $0x80] sm:$0xff]
  %v40 = vld [vmem:[%s0 + $0x88] sm:$0xff]
  %v41 = vld [vmem:[%s0 + $0x90] sm:$0xff]
  %v42 = vld [vmem:[%s0 + $0x98] sm:$0xff]
  %v43 = vld [vmem:[%s0 + $0xa0] sm:$0xff]
  %v44 = vld [vmem:[%s0 + $0xa8] sm:$0xff]
  %v45 = vld [vmem:[%s0 + $0xb0] sm:$0xff]
  %v46 = vld [vmem:[%s0 + $0xb8] sm:$0xff]
  %v47 = vld [vmem:[%s0 + $0xc0] sm:$0xff]
  %v48 = vld [vmem:[%s0 + $0xc8] sm:$0xff]
  %v49 = vld [vmem:[%s0 + $0xd0] sm:$0xff]
  %v50 = vld [vmem:[%s0 + $0xd8] sm:$0xff]
  %v51 = vld [vmem:[%s0 + $0xe0] sm:$0xff]
  %v52 = vld [vmem:[%s0 + $0xe8] sm:$0xff]
  %v53 = vld [vmem:[%s0 + $0xf0] sm:$0xff]
  %v54 = vld [vmem:[%s0 + $0xf8] sm:$0xff]
  %v55 = vld [vmem:[%s0 + $0x100] sm:$0xff]
  %v56 = vld [vmem:[%s0 + $0x108] sm:$0xff]
  %v57 = vld [vmem:[%s0 + $0x110] sm:$0xff]
  %v58 = vld [vmem:[%s0 + $0x118] sm:$0xff]
  %v59 = vld [vmem:[%s0 + $0x120] sm:$0xff]
  %v60 = vld [vmem:[%s0 + $0x128] sm:$0xff]
  %v61 = vld [vmem:[%s0 + $0x130] sm:$0xff]
  %v62 = vld [vmem:[%s0 + $0x138] sm:$0xff]
  %v63 = vld [vmem:[%s0 + $0x140] sm:$0xff]
  %v64 = vld [vmem:[%s0 + $0x148] sm:$0xff]
  %v65 = vld [vmem:[%s0 + $0x150] sm:$0xff]
  %v66 = vld [vmem:[%s0 + $0x158] sm:$0xff]
  %v67 = vld [vmem:[%s0 + $0x160] sm:$0xff]
  %v68 = vld [vmem:[%s0 + $0x168] sm:$0xff]
  %v69 = vld [vmem:[%s0 + $0x170] sm:$0xff]
  %v70 = vld [vmem:[%s0 + $0x178] sm:$0xff]
  %v71 = vld [vmem:[%s0 + $0x180] sm:$0xff]
  %v72 = vld [vmem:[%s0 + $0x188] sm:$0xff]
  %v73 = vld [vmem:[%s0 + $0x190] sm:$0xff]
  %v74 = vld [vmem:[%s0 + $0x198] sm:$0xff]
  %v75 = vld [vmem:[%s0 + $0x1a0] sm:$0xff]
  %v76 = vld [vmem:[%s0 + $0x1a8] sm:$0xff]
  %v77 = vld [vmem:[%s0 + $0x1b0] sm:$0xff]
  %v78 = vld [vmem:[%s0 + $0x1b8] sm:$0xff]
  %v79 = vld [vmem:[%s0 + $0x1c0] sm:$0xff]
  %v80 = vld [vmem:[%s0 + $0x1c8] sm:$0xff]
  %v81 = vld [vmem:[%s0 + $0x1d0] sm:$0xff]
  %v82 = vld [vmem:[%s0 + $0x1d8] sm:$0xff]
  %v83 = vld [vmem:[%s0 + $0x1e0] sm:$0xff]
  %v84 = vld [vmem:[%s0 + $0x1e8] sm:$0xff]
  %v85 = vld [vmem:[%s0 + $0x1f0] sm:$0xff]
  %v86 = vld [vmem:[%s0 + $0x1f8] sm:$0xff]
  %v87 = vld [vmem:[%s1] sm:$0x1]
  %v89 = vlaneseq
  %v90 = vshrl.u32 %v89, 7
  %v91 = vsub.s32 0, %v90
  %v92 = vrot.slane %v87, %v91
  %v94 = vmul.f32 %v23, %v92
  %v95 = vmul.f32 %v24, %v92
  %v96 = vmul.f32 %v25, %v92
  %v97 = vmul.f32 %v26, %v92
  %v98 = vmul.f32 %v27, %v92
  %v99 = vmul.f32 %v28, %v92
  %v100 = vmul.f32 %v29, %v92
  %v101 = vmul.f32 %v30, %v92
  %v102 = vmul.f32 %v31, %v92
  %v103 = vmul.f32 %v32, %v92
  %v104 = vmul.f32 %v33, %v92
  %v105 = vmul.f32 %v34, %v92
  %v106 = vmul.f32 %v35, %v92
  %v107 = vmul.f32 %v36, %v92
  %v108 = vmul.f32 %v37, %v92
  %v109 = vmul.f32 %v38, %v92
  %v110 = vmul.f32 %v39, %v92
  %v111 = vmul.f32 %v40, %v92
  %v112 = vmul.f32 %v41, %v92
  %v113 = vmul.f32 %v42, %v92
  %v114 = vmul.f32 %v43, %v92
  %v115 = vmul.f32 %v44, %v92
  %v116 = vmul.f32 %v45, %v92
  %v117 = vmul.f32 %v46, %v92
  %v118 = vmul.f32 %v47, %v92
  %v119 = vmul.f32 %v48, %v92
  %v120 = vmul.f32 %v49, %v92
  %v121 = vmul.f32 %v50, %v92
  %v122 = vmul.f32 %v51, %v92
  %v123 = vmul.f32 %v52, %v92
  %v124 = vmul.f32 %v53, %v92
  %v125 = vmul.f32 %v54, %v92
  %v126 = vmul.f32 %v55, %v92
  %v127 = vmul.f32 %v56, %v92
  %v128 = vmul.f32 %v57, %v92
  %v129 = vmul.f32 %v58, %v92
  %v130 = vmul.f32 %v59, %v92
  %v131 = vmul.f32 %v60, %v92
  %v132 = vmul.f32 %v61, %v92
  %v133 = vmul.f32 %v62, %v92
  %v134 = vmul.f32 %v63, %v92
  %v135 = vmul.f32 %v64, %v92
  %v136 = vmul.f32 %v65, %v92
  %v137 = vmul.f32 %v66, %v92
  %v138 = vmul.f32 %v67, %v92
  %v139 = vmul.f32 %v68, %v92
  %v140 = vmul.f32 %v69, %v92
  %v141 = vmul.f32 %v70, %v92
  %v142 = vmul.f32 %v71, %v92
  %v143 = vmul.f32 %v72, %v92
  %v144 = vmul.f32 %v73, %v92
  %v145 = vmul.f32 %v74, %v92
  %v146 = vmul.f32 %v75, %v92
  %v147 = vmul.f32 %v76, %v92
  %v148 = vmul.f32 %v77, %v92
  %v149 = vmul.f32 %v78, %v92
  %v150 = vmul.f32 %v79, %v92
  %v151 = vmul.f32 %v80, %v92
  %v152 = vmul.f32 %v81, %v92
  %v153 = vmul.f32 %v82, %v92
  %v154 = vmul.f32 %v83, %v92
  %v155 = vmul.f32 %v84, %v92
  %v156 = vmul.f32 %v85, %v92
  %v157 = vmul.f32 %v86, %v92
  %v158 = vld [vmem:[%s2] sm:$0x1]
  %v160 = vlaneseq
  %v161 = vshrl.u32 %v160, 7
  %v162 = vsub.s32 0, %v161
  %v163 = vrot.slane %v158, %v162
  %v165 = vadd.f32 %v94, %v163
  %v166 = vadd.f32 %v95, %v163
  %v167 = vadd.f32 %v96, %v163
  %v168 = vadd.f32 %v97, %v163
  %v169 = vadd.f32 %v98, %v163
  %v170 = vadd.f32 %v99, %v163
  %v171 = vadd.f32 %v100, %v163
  %v172 = vadd.f32 %v101, %v163
  %v173 = vadd.f32 %v102, %v163
  %v174 = vadd.f32 %v103, %v163
  %v175 = vadd.f32 %v104, %v163
  %v176 = vadd.f32 %v105, %v163
  %v177 = vadd.f32 %v106, %v163
  %v178 = vadd.f32 %v107, %v163
  %v179 = vadd.f32 %v108, %v163
  %v180 = vadd.f32 %v109, %v163
  %v181 = vadd.f32 %v110, %v163
  %v182 = vadd.f32 %v111, %v163
  %v183 = vadd.f32 %v112, %v163
  %v184 = vadd.f32 %v113, %v163
  %v185 = vadd.f32 %v114, %v163
  %v186 = vadd.f32 %v115, %v163
  %v187 = vadd.f32 %v116, %v163
  %v188 = vadd.f32 %v117, %v163
  %v189 = vadd.f32 %v118, %v163
  %v190 = vadd.f32 %v119, %v163
  %v191 = vadd.f32 %v120, %v163
  %v192 = vadd.f32 %v121, %v163
  %v193 = vadd.f32 %v122, %v163
  %v194 = vadd.f32 %v123, %v163
  %v195 = vadd.f32 %v124, %v163
  %v196 = vadd.f32 %v125, %v163
  %v197 = vadd.f32 %v126, %v163
  %v198 = vadd.f32 %v127, %v163
  %v199 = vadd.f32 %v128, %v163
  %v200 = vadd.f32 %v129, %v163
  %v201 = vadd.f32 %v130, %v163
  %v202 = vadd.f32 %v131, %v163
  %v203 = vadd.f32 %v132, %v163
  %v204 = vadd.f32 %v133, %v163
  %v205 = vadd.f32 %v134, %v163
  %v206 = vadd.f32 %v135, %v163
  %v207 = vadd.f32 %v136, %v163
  %v208 = vadd.f32 %v137, %v163
  %v209 = vadd.f32 %v138, %v163
  %v210 = vadd.f32 %v139, %v163
  %v211 = vadd.f32 %v140, %v163
  %v212 = vadd.f32 %v141, %v163
  %v213 = vadd.f32 %v142, %v163
  %v214 = vadd.f32 %v143, %v163
  %v215 = vadd.f32 %v144, %v163
  %v216 = vadd.f32 %v145, %v163
  %v217 = vadd.f32 %v146, %v163
  %v218 = vadd.f32 %v147, %v163
  %v219 = vadd.f32 %v148, %v163
  %v220 = vadd.f32 %v149, %v163
  %v221 = vadd.f32 %v150, %v163
  %v222 = vadd.f32 %v151, %v163
  %v223 = vadd.f32 %v152, %v163
  %v224 = vadd.f32 %v153, %v163
  %v225 = vadd.f32 %v154, %v163
  %v226 = vadd.f32 %v155, %v163
  %v227 = vadd.f32 %v156, %v163
  %v228 = vadd.f32 %v157, %v163
  %v229 = vld [vmem:[%s3] sm:$0xff]
  %v230 = vld [vmem:[%s3 + $0x8] sm:$0xff]
  %v231 = vld [vmem:[%s3 + $0x10] sm:$0xff]
  %v232 = vld [vmem:[%s3 + $0x18] sm:$0xff]
  %v233 = vld [vmem:[%s3 + $0x20] sm:$0xff]
  %v234 = vld [vmem:[%s3 + $0x28] sm:$0xff]
  %v235 = vld [vmem:[%s3 + $0x30] sm:$0xff]
  %v236 = vld [vmem:[%s3 + $0x38] sm:$0xff]
  %v237 = vld [vmem:[%s3 + $0x40] sm:$0xff]
  %v238 = vld [vmem:[%s3 + $0x48] sm:$0xff]
  %v239 = vld [vmem:[%s3 + $0x50] sm:$0xff]
  %v240 = vld [vmem:[%s3 + $0x58] sm:$0xff]
  %v241 = vld [vmem:[%s3 + $0x60] sm:$0xff]
  %v242 = vld [vmem:[%s3 + $0x68] sm:$0xff]
  %v243 = vld [vmem:[%s3 + $0x70] sm:$0xff]
  %v244 = vld [vmem:[%s3 + $0x78] sm:$0xff]
  %v245 = vld [vmem:[%s3 + $0x80] sm:$0xff]
  %v246 = vld [vmem:[%s3 + $0x88] sm:$0xff]
  %v247 = vld [vmem:[%s3 + $0x90] sm:$0xff]
  %v248 = vld [vmem:[%s3 + $0x98] sm:$0xff]
  %v249 = vld [vmem:[%s3 + $0xa0] sm:$0xff]
  %v250 = vld [vmem:[%s3 + $0xa8] sm:$0xff]
  %v251 = vld [vmem:[%s3 + $0xb0] sm:$0xff]
  %v252 = vld [vmem:[%s3 + $0xb8] sm:$0xff]
  %v253 = vld [vmem:[%s3 + $0xc0] sm:$0xff]
  %v254 = vld [vmem:[%s3 + $0xc8] sm:$0xff]
  %v255 = vld [vmem:[%s3 + $0xd0] sm:$0xff]
  %v256 = vld [vmem:[%s3 + $0xd8] sm:$0xff]
  %v257 = vld [vmem:[%s3 + $0xe0] sm:$0xff]
  %v258 = vld [vmem:[%s3 + $0xe8] sm:$0xff]
  %v259 = vld [vmem:[%s3 + $0xf0] sm:$0xff]
  %v260 = vld [vmem:[%s3 + $0xf8] sm:$0xff]
  %v261 = vld [vmem:[%s3 + $0x100] sm:$0xff]
  %v262 = vld [vmem:[%s3 + $0x108] sm:$0xff]
  %v263 = vld [vmem:[%s3 + $0x110] sm:$0xff]
  %v264 = vld [vmem:[%s3 + $0x118] sm:$0xff]
  %v265 = vld [vmem:[%s3 + $0x120] sm:$0xff]
  %v266 = vld [vmem:[%s3 + $0x128] sm:$0xff]
  %v267 = vld [vmem:[%s3 + $0x130] sm:$0xff]
  %v268 = vld [vmem:[%s3 + $0x138] sm:$0xff]
  %v269 = vld [vmem:[%s3 + $0x140] sm:$0xff]
  %v270 = vld [vmem:[%s3 + $0x148] sm:$0xff]
  %v271 = vld [vmem:[%s3 + $0x150] sm:$0xff]
  %v272 = vld [vmem:[%s3 + $0x158] sm:$0xff]
  %v273 = vld [vmem:[%s3 + $0x160] sm:$0xff]
  %v274 = vld [vmem:[%s3 + $0x168] sm:$0xff]
  %v275 = vld [vmem:[%s3 + $0x170] sm:$0xff]
  %v276 = vld [vmem:[%s3 + $0x178] sm:$0xff]
  %v277 = vld [vmem:[%s3 + $0x180] sm:$0xff]
  %v278 = vld [vmem:[%s3 + $0x188] sm:$0xff]
  %v279 = vld [vmem:[%s3 + $0x190] sm:$0xff]
  %v280 = vld [vmem:[%s3 + $0x198] sm:$0xff]
  %v281 = vld [vmem:[%s3 + $0x1a0] sm:$0xff]
  %v282 = vld [vmem:[%s3 + $0x1a8] sm:$0xff]
  %v283 = vld [vmem:[%s3 + $0x1b0] sm:$0xff]
  %v284 = vld [vmem:[%s3 + $0x1b8] sm:$0xff]
  %v285 = vld [vmem:[%s3 + $0x1c0] sm:$0xff]
  %v286 = vld [vmem:[%s3 + $0x1c8] sm:$0xff]
  %v287 = vld [vmem:[%s3 + $0x1d0] sm:$0xff]
  %v288 = vld [vmem:[%s3 + $0x1d8] sm:$0xff]
  %v289 = vld [vmem:[%s3 + $0x1e0] sm:$0xff]
  %v290 = vld [vmem:[%s3 + $0x1e8] sm:$0xff]
  %v291 = vld [vmem:[%s3 + $0x1f0] sm:$0xff]
  %v292 = vld [vmem:[%s3 + $0x1f8] sm:$0xff]
  %v293 = vld [vmem:[%s4] sm:$0x1]
  %v295 = vlaneseq
  %v296 = vshrl.u32 %v295, 7
  %v297 = vsub.s32 0, %v296
  %v298 = vrot.slane %v293, %v297
  %v300 = vmul.f32 %v229, %v298
  %v301 = vmul.f32 %v230, %v298
  %v302 = vmul.f32 %v231, %v298
  %v303 = vmul.f32 %v232, %v298
  %v304 = vmul.f32 %v233, %v298
  %v305 = vmul.f32 %v234, %v298
  %v306 = vmul.f32 %v235, %v298
  %v307 = vmul.f32 %v236, %v298
  %v308 = vmul.f32 %v237, %v298
  %v309 = vmul.f32 %v238, %v298
  %v310 = vmul.f32 %v239, %v298
  %v311 = vmul.f32 %v240, %v298
  %v312 = vmul.f32 %v241, %v298
  %v313 = vmul.f32 %v242, %v298
  %v314 = vmul.f32 %v243, %v298
  %v315 = vmul.f32 %v244, %v298
  %v316 = vmul.f32 %v245, %v298
  %v317 = vmul.f32 %v246, %v298
  %v318 = vmul.f32 %v247, %v298
  %v319 = vmul.f32 %v248, %v298
  %v320 = vmul.f32 %v249, %v298
  %v321 = vmul.f32 %v250, %v298
  %v322 = vmul.f32 %v251, %v298
  %v323 = vmul.f32 %v252, %v298
  %v324 = vmul.f32 %v253, %v298
  %v325 = vmul.f32 %v254, %v298
  %v326 = vmul.f32 %v255, %v298
  %v327 = vmul.f32 %v256, %v298
  %v328 = vmul.f32 %v257, %v298
  %v329 = vmul.f32 %v258, %v298
  %v330 = vmul.f32 %v259, %v298
  %v331 = vmul.f32 %v260, %v298
  %v332 = vmul.f32 %v261, %v298
  %v333 = vmul.f32 %v262, %v298
  %v334 = vmul.f32 %v263, %v298
  %v335 = vmul.f32 %v264, %v298
  %v336 = vmul.f32 %v265, %v298
  %v337 = vmul.f32 %v266, %v298
  %v338 = vmul.f32 %v267, %v298
  %v339 = vmul.f32 %v268, %v298
  %v340 = vmul.f32 %v269, %v298
  %v341 = vmul.f32 %v270, %v298
  %v342 = vmul.f32 %v271, %v298
  %v343 = vmul.f32 %v272, %v298
  %v344 = vmul.f32 %v273, %v298
  %v345 = vmul.f32 %v274, %v298
  %v346 = vmul.f32 %v275, %v298
  %v347 = vmul.f32 %v276, %v298
  %v348 = vmul.f32 %v277, %v298
  %v349 = vmul.f32 %v278, %v298
  %v350 = vmul.f32 %v279, %v298
  %v351 = vmul.f32 %v280, %v298
  %v352 = vmul.f32 %v281, %v298
  %v353 = vmul.f32 %v282, %v298
  %v354 = vmul.f32 %v283, %v298
  %v355 = vmul.f32 %v284, %v298
  %v356 = vmul.f32 %v285, %v298
  %v357 = vmul.f32 %v286, %v298
  %v358 = vmul.f32 %v287, %v298
  %v359 = vmul.f32 %v288, %v298
  %v360 = vmul.f32 %v289, %v298
  %v361 = vmul.f32 %v290, %v298
  %v362 = vmul.f32 %v291, %v298
  %v363 = vmul.f32 %v292, %v298
  %v364 = vld [vmem:[%s5] sm:$0x1]
  %v366 = vlaneseq
  %v367 = vshrl.u32 %v366, 7
  %v368 = vsub.s32 0, %v367
  %v369 = vrot.slane %v364, %v368
  %v371 = vadd.f32 %v300, %v369
  %v372 = vadd.f32 %v301, %v369
  %v373 = vadd.f32 %v302, %v369
  %v374 = vadd.f32 %v303, %v369
  %v375 = vadd.f32 %v304, %v369
  %v376 = vadd.f32 %v305, %v369
  %v377 = vadd.f32 %v306, %v369
  %v378 = vadd.f32 %v307, %v369
  %v379 = vadd.f32 %v308, %v369
  %v380 = vadd.f32 %v309, %v369
  %v381 = vadd.f32 %v310, %v369
  %v382 = vadd.f32 %v311, %v369
  %v383 = vadd.f32 %v312, %v369
  %v384 = vadd.f32 %v313, %v369
  %v385 = vadd.f32 %v314, %v369
  %v386 = vadd.f32 %v315, %v369
  %v387 = vadd.f32 %v316, %v369
  %v388 = vadd.f32 %v317, %v369
  %v389 = vadd.f32 %v318, %v369
  %v390 = vadd.f32 %v319, %v369
  %v391 = vadd.f32 %v320, %v369
  %v392 = vadd.f32 %v321, %v369
  %v393 = vadd.f32 %v322, %v369
  %v394 = vadd.f32 %v323, %v369
  %v395 = vadd.f32 %v324, %v369
  %v396 = vadd.f32 %v325, %v369
  %v397 = vadd.f32 %v326, %v369
  %v398 = vadd.f32 %v327, %v369
  %v399 = vadd.f32 %v328, %v369
  %v400 = vadd.f32 %v329, %v369
  %v401 = vadd.f32 %v330, %v369
  %v402 = vadd.f32 %v331, %v369
  %v403 = vadd.f32 %v332, %v369
  %v404 = vadd.f32 %v333, %v369
  %v405 = vadd.f32 %v334, %v369
  %v406 = vadd.f32 %v335, %v369
  %v407 = vadd.f32 %v336, %v369
  %v408 = vadd.f32 %v337, %v369
  %v409 = vadd.f32 %v338, %v369
  %v410 = vadd.f32 %v339, %v369
  %v411 = vadd.f32 %v340, %v369
  %v412 = vadd.f32 %v341, %v369
  %v413 = vadd.f32 %v342, %v369
  %v414 = vadd.f32 %v343, %v369
  %v415 = vadd.f32 %v344, %v369
  %v416 = vadd.f32 %v345, %v369
  %v417 = vadd.f32 %v346, %v369
  %v418 = vadd.f32 %v347, %v369
  %v419 = vadd.f32 %v348, %v369
  %v420 = vadd.f32 %v349, %v369
  %v421 = vadd.f32 %v350, %v369
  %v422 = vadd.f32 %v351, %v369
  %v423 = vadd.f32 %v352, %v369
  %v424 = vadd.f32 %v353, %v369
  %v425 = vadd.f32 %v354, %v369
  %v426 = vadd.f32 %v355, %v369
  %v427 = vadd.f32 %v356, %v369
  %v428 = vadd.f32 %v357, %v369
  %v429 = vadd.f32 %v358, %v369
  %v430 = vadd.f32 %v359, %v369
  %v431 = vadd.f32 %v360, %v369
  %v432 = vadd.f32 %v361, %v369
  %v433 = vadd.f32 %v362, %v369
  %v434 = vadd.f32 %v363, %v369
  %v435 = vadd.f32 %v165, %v371
  %v436 = vadd.f32 %v166, %v372
  %v437 = vadd.f32 %v167, %v373
  %v438 = vadd.f32 %v168, %v374
  %v439 = vadd.f32 %v169, %v375
  %v440 = vadd.f32 %v170, %v376
  %v441 = vadd.f32 %v171, %v377
  %v442 = vadd.f32 %v172, %v378
  %v443 = vadd.f32 %v173, %v379
  %v444 = vadd.f32 %v174, %v380
  %v445 = vadd.f32 %v175, %v381
  %v446 = vadd.f32 %v176, %v382
  %v447 = vadd.f32 %v177, %v383
  %v448 = vadd.f32 %v178, %v384
  %v449 = vadd.f32 %v179, %v385
  %v450 = vadd.f32 %v180, %v386
  %v451 = vadd.f32 %v181, %v387
  %v452 = vadd.f32 %v182, %v388
  %v453 = vadd.f32 %v183, %v389
  %v454 = vadd.f32 %v184, %v390
  %v455 = vadd.f32 %v185, %v391
  %v456 = vadd.f32 %v186, %v392
  %v457 = vadd.f32 %v187, %v393
  %v458 = vadd.f32 %v188, %v394
  %v459 = vadd.f32 %v189, %v395
  %v460 = vadd.f32 %v190, %v396
  %v461 = vadd.f32 %v191, %v397
  %v462 = vadd.f32 %v192, %v398
  %v463 = vadd.f32 %v193, %v399
  %v464 = vadd.f32 %v194, %v400
  %v465 = vadd.f32 %v195, %v401
  %v466 = vadd.f32 %v196, %v402
  %v467 = vadd.f32 %v197, %v403
  %v468 = vadd.f32 %v198, %v404
  %v469 = vadd.f32 %v199, %v405
  %v470 = vadd.f32 %v200, %v406
  %v471 = vadd.f32 %v201, %v407
  %v472 = vadd.f32 %v202, %v408
  %v473 = vadd.f32 %v203, %v409
  %v474 = vadd.f32 %v204, %v410
  %v475 = vadd.f32 %v205, %v411
  %v476 = vadd.f32 %v206, %v412
  %v477 = vadd.f32 %v207, %v413
  %v478 = vadd.f32 %v208, %v414
  %v479 = vadd.f32 %v209, %v415
  %v480 = vadd.f32 %v210, %v416
  %v481 = vadd.f32 %v211, %v417
  %v482 = vadd.f32 %v212, %v418
  %v483 = vadd.f32 %v213, %v419
  %v484 = vadd.f32 %v214, %v420
  %v485 = vadd.f32 %v215, %v421
  %v486 = vadd.f32 %v216, %v422
  %v487 = vadd.f32 %v217, %v423
  %v488 = vadd.f32 %v218, %v424
  %v489 = vadd.f32 %v219, %v425
  %v490 = vadd.f32 %v220, %v426
  %v491 = vadd.f32 %v221, %v427
  %v492 = vadd.f32 %v222, %v428
  %v493 = vadd.f32 %v223, %v429
  %v494 = vadd.f32 %v224, %v430
  %v495 = vadd.f32 %v225, %v431
  %v496 = vadd.f32 %v226, %v432
  %v497 = vadd.f32 %v227, %v433
  %v498 = vadd.f32 %v228, %v434
  %v499 = vmax.f32 %v435, 0.0
  %v500 = vmax.f32 %v436, 0.0
  %v501 = vmax.f32 %v437, 0.0
  %v502 = vmax.f32 %v438, 0.0
  %v503 = vmax.f32 %v439, 0.0
  %v504 = vmax.f32 %v440, 0.0
  %v505 = vmax.f32 %v441, 0.0
  %v506 = vmax.f32 %v442, 0.0
  %v507 = vmax.f32 %v443, 0.0
  %v508 = vmax.f32 %v444, 0.0
  %v509 = vmax.f32 %v445, 0.0
  %v510 = vmax.f32 %v446, 0.0
  %v511 = vmax.f32 %v447, 0.0
  %v512 = vmax.f32 %v448, 0.0
  %v513 = vmax.f32 %v449, 0.0
  %v514 = vmax.f32 %v450, 0.0
  %v515 = vmax.f32 %v451, 0.0
  %v516 = vmax.f32 %v452, 0.0
  %v517 = vmax.f32 %v453, 0.0
  %v518 = vmax.f32 %v454, 0.0
  %v519 = vmax.f32 %v455, 0.0
  %v520 = vmax.f32 %v456, 0.0
  %v521 = vmax.f32 %v457, 0.0
  %v522 = vmax.f32 %v458, 0.0
  %v523 = vmax.f32 %v459, 0.0
  %v524 = vmax.f32 %v460, 0.0
  %v525 = vmax.f32 %v461, 0.0
  %v526 = vmax.f32 %v462, 0.0
  %v527 = vmax.f32 %v463, 0.0
  %v528 = vmax.f32 %v464, 0.0
  %v529 = vmax.f32 %v465, 0.0
  %v530 = vmax.f32 %v466, 0.0
  %v531 = vmax.f32 %v467, 0.0
  %v532 = vmax.f32 %v468, 0.0
  %v533 = vmax.f32 %v469, 0.0
  %v534 = vmax.f32 %v470, 0.0
  %v535 = vmax.f32 %v471, 0.0
  %v536 = vmax.f32 %v472, 0.0
  %v537 = vmax.f32 %v473, 0.0
  %v538 = vmax.f32 %v474, 0.0
  %v539 = vmax.f32 %v475, 0.0
  %v540 = vmax.f32 %v476, 0.0
  %v541 = vmax.f32 %v477, 0.0
  %v542 = vmax.f32 %v478, 0.0
  %v543 = vmax.f32 %v479, 0.0
  %v544 = vmax.f32 %v480, 0.0
  %v545 = vmax.f32 %v481, 0.0
  %v546 = vmax.f32 %v482, 0.0
  %v547 = vmax.f32 %v483, 0.0
  %v548 = vmax.f32 %v484, 0.0
  %v549 = vmax.f32 %v485, 0.0
  %v550 = vmax.f32 %v486, 0.0
  %v551 = vmax.f32 %v487, 0.0
  %v552 = vmax.f32 %v488, 0.0
  %v553 = vmax.f32 %v489, 0.0
  %v554 = vmax.f32 %v490, 0.0
  %v555 = vmax.f32 %v491, 0.0
  %v556 = vmax.f32 %v492, 0.0
  %v557 = vmax.f32 %v493, 0.0
  %v558 = vmax.f32 %v494, 0.0
  %v559 = vmax.f32 %v495, 0.0
  %v560 = vmax.f32 %v496, 0.0
  %v561 = vmax.f32 %v497, 0.0
  %v562 = vmax.f32 %v498, 0.0
  %563 = vst [vmem:[%s6] sm:$0xff] %v499
  %564 = vst [vmem:[%s6 + $0x8] sm:$0xff] %v500
  %565 = vst [vmem:[%s6 + $0x10] sm:$0xff] %v501
  %566 = vst [vmem:[%s6 + $0x18] sm:$0xff] %v502
  %567 = vst [vmem:[%s6 + $0x20] sm:$0xff] %v503
  %568 = vst [vmem:[%s6 + $0x28] sm:$0xff] %v504
  %569 = vst [vmem:[%s6 + $0x30] sm:$0xff] %v505
  %570 = vst [vmem:[%s6 + $0x38] sm:$0xff] %v506
  %571 = vst [vmem:[%s6 + $0x40] sm:$0xff] %v507
  %572 = vst [vmem:[%s6 + $0x48] sm:$0xff] %v508
  %573 = vst [vmem:[%s6 + $0x50] sm:$0xff] %v509
  %574 = vst [vmem:[%s6 + $0x58] sm:$0xff] %v510
  %575 = vst [vmem:[%s6 + $0x60] sm:$0xff] %v511
  %576 = vst [vmem:[%s6 + $0x68] sm:$0xff] %v512
  %577 = vst [vmem:[%s6 + $0x70] sm:$0xff] %v513
  %578 = vst [vmem:[%s6 + $0x78] sm:$0xff] %v514
  %579 = vst [vmem:[%s6 + $0x80] sm:$0xff] %v515
  %580 = vst [vmem:[%s6 + $0x88] sm:$0xff] %v516
  %581 = vst [vmem:[%s6 + $0x90] sm:$0xff] %v517
  %582 = vst [vmem:[%s6 + $0x98] sm:$0xff] %v518
  %583 = vst [vmem:[%s6 + $0xa0] sm:$0xff] %v519
  %584 = vst [vmem:[%s6 + $0xa8] sm:$0xff] %v520
  %585 = vst [vmem:[%s6 + $0xb0] sm:$0xff] %v521
  %586 = vst [vmem:[%s6 + $0xb8] sm:$0xff] %v522
  %587 = vst [vmem:[%s6 + $0xc0] sm:$0xff] %v523
  %588 = vst [vmem:[%s6 + $0xc8] sm:$0xff] %v524
  %589 = vst [vmem:[%s6 + $0xd0] sm:$0xff] %v525
  %590 = vst [vmem:[%s6 + $0xd8] sm:$0xff] %v526
  %591 = vst [vmem:[%s6 + $0xe0] sm:$0xff] %v527
  %592 = vst [vmem:[%s6 + $0xe8] sm:$0xff] %v528
  %593 = vst [vmem:[%s6 + $0xf0] sm:$0xff] %v529
  %594 = vst [vmem:[%s6 + $0xf8] sm:$0xff] %v530
  %595 = vst [vmem:[%s6 + $0x100] sm:$0xff] %v531
  %596 = vst [vmem:[%s6 + $0x108] sm:$0xff] %v532
  %597 = vst [vmem:[%s6 + $0x110] sm:$0xff] %v533
  %598 = vst [vmem:[%s6 + $0x118] sm:$0xff] %v534
  %599 = vst [vmem:[%s6 + $0x120] sm:$0xff] %v535
  %600 = vst [vmem:[%s6 + $0x128] sm:$0xff] %v536
  %601 = vst [vmem:[%s6 + $0x130] sm:$0xff] %v537
  %602 = vst [vmem:[%s6 + $0x138] sm:$0xff] %v538
  %603 = vst [vmem:[%s6 + $0x140] sm:$0xff] %v539
  %604 = vst [vmem:[%s6 + $0x148] sm:$0xff] %v540
  %605 = vst [vmem:[%s6 + $0x150] sm:$0xff] %v541
  %606 = vst [vmem:[%s6 + $0x158] sm:$0xff] %v542
  %607 = vst [vmem:[%s6 + $0x160] sm:$0xff] %v543
  %608 = vst [vmem:[%s6 + $0x168] sm:$0xff] %v544
  %609 = vst [vmem:[%s6 + $0x170] sm:$0xff] %v545
  %610 = vst [vmem:[%s6 + $0x178] sm:$0xff] %v546
  %611 = vst [vmem:[%s6 + $0x180] sm:$0xff] %v547
  %612 = vst [vmem:[%s6 + $0x188] sm:$0xff] %v548
  %613 = vst [vmem:[%s6 + $0x190] sm:$0xff] %v549
  %614 = vst [vmem:[%s6 + $0x198] sm:$0xff] %v550
  %615 = vst [vmem:[%s6 + $0x1a0] sm:$0xff] %v551
  %616 = vst [vmem:[%s6 + $0x1a8] sm:$0xff] %v552
  %617 = vst [vmem:[%s6 + $0x1b0] sm:$0xff] %v553
  %618 = vst [vmem:[%s6 + $0x1b8] sm:$0xff] %v554
  %619 = vst [vmem:[%s6 + $0x1c0] sm:$0xff] %v555
  %620 = vst [vmem:[%s6 + $0x1c8] sm:$0xff] %v556
  %621 = vst [vmem:[%s6 + $0x1d0] sm:$0xff] %v557
  %622 = vst [vmem:[%s6 + $0x1d8] sm:$0xff] %v558
  %623 = vst [vmem:[%s6 + $0x1e0] sm:$0xff] %v559
  %624 = vst [vmem:[%s6 + $0x1e8] sm:$0xff] %v560
  %625 = vst [vmem:[%s6 + $0x1f0] sm:$0xff] %v561
  %626 = vst [vmem:[%s6 + $0x1f8] sm:$0xff] %v562
  // Predicated region
  $region26: #{residual_block_forward.7} parent=0 // pred_check
    _
  $region27: #{residual_block_forward.7} parent=0 // pred_check_branch
    %628 = sbr.rel (0) target = $region29
  $region28: #{residual_block_forward.7} parent=0 // pred_region
    _
  $region29: #{residual_block_forward.7} parent=0 // pred_fallthru
    _
  // Predicated region
  $region30: #{residual_block_forward.7} parent=0 // pred_check
    _
  $region31: #{residual_block_forward.7} parent=0 // pred_check_branch
    %630 = sbr.rel (0) target = $region33
  $region32: #{residual_block_forward.7} parent=0 // pred_region
    _
  $region33: #{residual_block_forward.7} parent=0 // pred_fallthru
    _

// kernel: residual_block_forward.6
$region0: #{residual_block_forward.6}
  #allocation0 [shape = 'u32[]', space=smem, size = 0x4, offset = 0x4, fixed_abs, tag = 'smem constant byte address 0x4 - core index']
  #allocation1 [shape = 'u32[144,128]{1,0:T(1,128)}', space=vmem, size = 0x12000, scoped, tag = 'internal scratch']
  %s0 = inlined_call_operand.vmem [shape: bf16[512,128], index: 0, kind: input, shape index: {}]
  %s1 = inlined_call_operand.vmem [shape: bf16[128,128], index: 1, kind: input, shape index: {}]
  %s2 = inlined_call_operand.vmem [shape: bf16[512,128], index: 2, kind: input, shape index: {}]
  %s3 = inlined_call_operand.vmem [shape: bf16[128,128], index: 3, kind: input, shape index: {}]
  %s4 = inlined_call_operand.vmem [shape: f32[512,128], index: 4, kind: output, shape index: {0}]
  %s5 = inlined_call_operand.vmem [shape: f32[512,128], index: 5, kind: output, shape index: {1}]
  %s6 = inlined_call_operand.vmem [shape: f32[1,128], index: 6, kind: output, shape index: {2}]
  %s7 = inlined_call_operand.vmem [shape: f32[1,128], index: 7, kind: output, shape index: {3}]
  %s8 = inlined_call_operand.vmem [shape: f32[1,128], index: 8, kind: output, shape index: {4}]
  %s9 = inlined_call_operand.vmem [shape: f32[1,128], index: 9, kind: output, shape index: {5}]
  %10 = xla_tuple %s4, %s5, %s6, %s7, %s8, %s9
  %s11 = sld [smem:[#allocation0]]
  $region70: #{residual_block_forward.6} parent=0
    _
  %s13 = ssub.s32 1, %s11
  %s14 = scalar_select 0, %s13, %s11
  // Predicated region
  $region2: #{residual_block_forward.6} parent=0 // pred_check
    _
  $region3: #{residual_block_forward.6} parent=0 // pred_check_branch
    %16 = sbr.rel (0) target = $region5
  $region4: #{residual_block_forward.6} parent=0 // pred_region
    _
  $region5: #{residual_block_forward.6} parent=0 // pred_fallthru
    _
  // Predicated region
  $region6: #{residual_block_forward.6} parent=0 // pred_check
    _
  $region7: #{residual_block_forward.6} parent=0 // pred_check_branch
    %18 = sbr.rel (0) target = $region9
  $region8: #{residual_block_forward.6} parent=0 // pred_region
    _
  $region9: #{residual_block_forward.6} parent=0 // pred_fallthru
    _
  // Predicated region
  $region10: #{residual_block_forward.6} parent=0 // pred_check
    _
  $region11: #{residual_block_forward.6} parent=0 // pred_check_branch
    %20 = sbr.rel (0) target = $region13
  $region12: #{residual_block_forward.6} parent=0 // pred_region
    _
  $region13: #{residual_block_forward.6} parent=0 // pred_fallthru
    _
  // Predicated region
  $region14: #{residual_block_forward.6} parent=0 // pred_check
    _
  $region15: #{residual_block_forward.6} parent=0 // pred_check_branch
    %22 = sbr.rel (0) target = $region17
  $region16: #{residual_block_forward.6} parent=0 // pred_region
    _
  $region17: #{residual_block_forward.6} parent=0 // pred_fallthru
    _
  %p24 = scmp.eq.s32.totalorder 0, 0
  // Predicated region
  $region18: #{residual_block_forward.6} parent=0 // pred_check
    %p25 = pneg %p24
  $region19: #{residual_block_forward.6} parent=0 // pred_check_branch
    %27 = sbr.rel (%p25) target = $region21
  $region20: #{residual_block_forward.6} parent=0 // pred_region
    %28 = vst [vmem:[%s6] sm:$0x1] 0.0
    %29 = vst [vmem:[%s7] sm:$0x1] 0.0
    %30 = vst [vmem:[%s8] sm:$0x1] 0.0
    %31 = vst [vmem:[%s9] sm:$0x1] 0.0
  $region21: #{residual_block_forward.6} parent=0 // pred_fallthru
    _
  %v32 = vld [vmem:[%s0] sm:$0xf]
  %v33 = vld [vmem:[%s0 + $0x4] sm:$0xf]
  %v34 = vld [vmem:[%s0 + $0x8] sm:$0xf]
  %v35 = vld [vmem:[%s0 + $0xc] sm:$0xf]
  %v36 = vld [vmem:[%s0 + $0x10] sm:$0xf]
  %v37 = vld [vmem:[%s0 + $0x14] sm:$0xf]
  %v38 = vld [vmem:[%s0 + $0x18] sm:$0xf]
  %v39 = vld [vmem:[%s0 + $0x1c] sm:$0xf]
  %v40 = vld [vmem:[%s0 + $0x20] sm:$0xf]
  %v41 = vld [vmem:[%s0 + $0x24] sm:$0xf]
  %v42 = vld [vmem:[%s0 + $0x28] sm:$0xf]
  %v43 = vld [vmem:[%s0 + $0x2c] sm:$0xf]
  %v44 = vld [vmem:[%s0 + $0x30] sm:$0xf]
  %v45 = vld [vmem:[%s0 + $0x34] sm:$0xf]
  %v46 = vld [vmem:[%s0 + $0x38] sm:$0xf]
  %v47 = vld [vmem:[%s0 + $0x3c] sm:$0xf]
  %v48 = vld [vmem:[%s0 + $0x40] sm:$0xf]
  %v49 = vld [vmem:[%s0 + $0x44] sm:$0xf]
  %v50 = vld [vmem:[%s0 + $0x48] sm:$0xf]
  %v51 = vld [vmem:[%s0 + $0x4c] sm:$0xf]
  %v52 = vld [vmem:[%s0 + $0x50] sm:$0xf]
  %v53 = vld [vmem:[%s0 + $0x54] sm:$0xf]
  %v54 = vld [vmem:[%s0 + $0x58] sm:$0xf]
  %v55 = vld [vmem:[%s0 + $0x5c] sm:$0xf]
  %v56 = vld [vmem:[%s0 + $0x60] sm:$0xf]
  %v57 = vld [vmem:[%s0 + $0x64] sm:$0xf]
  %v58 = vld [vmem:[%s0 + $0x68] sm:$0xf]
  %v59 = vld [vmem:[%s0 + $0x6c] sm:$0xf]
  %v60 = vld [vmem:[%s0 + $0x70] sm:$0xf]
  %v61 = vld [vmem:[%s0 + $0x74] sm:$0xf]
  %v62 = vld [vmem:[%s0 + $0x78] sm:$0xf]
  %v63 = vld [vmem:[%s0 + $0x7c] sm:$0xf]
  %v64 = vld [vmem:[%s0 + $0x80] sm:$0xf]
  %v65 = vld [vmem:[%s0 + $0x84] sm:$0xf]
  %v66 = vld [vmem:[%s0 + $0x88] sm:$0xf]
  %v67 = vld [vmem:[%s0 + $0x8c] sm:$0xf]
  %v68 = vld [vmem:[%s0 + $0x90] sm:$0xf]
  %v69 = vld [vmem:[%s0 + $0x94] sm:$0xf]
  %v70 = vld [vmem:[%s0 + $0x98] sm:$0xf]
  %v71 = vld [vmem:[%s0 + $0x9c] sm:$0xf]
  %v72 = vld [vmem:[%s0 + $0xa0] sm:$0xf]
  %v73 = vld [vmem:[%s0 + $0xa4] sm:$0xf]
  %v74 = vld [vmem:[%s0 + $0xa8] sm:$0xf]
  %v75 = vld [vmem:[%s0 + $0xac] sm:$0xf]
  %v76 = vld [vmem:[%s0 + $0xb0] sm:$0xf]
  %v77 = vld [vmem:[%s0 + $0xb4] sm:$0xf]
  %v78 = vld [vmem:[%s0 + $0xb8] sm:$0xf]
  %v79 = vld [vmem:[%s0 + $0xbc] sm:$0xf]
  %v80 = vld [vmem:[%s0 + $0xc0] sm:$0xf]
  %v81 = vld [vmem:[%s0 + $0xc4] sm:$0xf]
  %v82 = vld [vmem:[%s0 + $0xc8] sm:$0xf]
  %v83 = vld [vmem:[%s0 + $0xcc] sm:$0xf]
  %v84 = vld [vmem:[%s0 + $0xd0] sm:$0xf]
  %v85 = vld [vmem:[%s0 + $0xd4] sm:$0xf]
  %v86 = vld [vmem:[%s0 + $0xd8] sm:$0xf]
  %v87 = vld [vmem:[%s0 + $0xdc] sm:$0xf]
  %v88 = vld [vmem:[%s0 + $0xe0] sm:$0xf]
  %v89 = vld [vmem:[%s0 + $0xe4] sm:$0xf]
  %v90 = vld [vmem:[%s0 + $0xe8] sm:$0xf]
  %v91 = vld [vmem:[%s0 + $0xec] sm:$0xf]
  %v92 = vld [vmem:[%s0 + $0xf0] sm:$0xf]
  %v93 = vld [vmem:[%s0 + $0xf4] sm:$0xf]
  %v94 = vld [vmem:[%s0 + $0xf8] sm:$0xf]
  %v95 = vld [vmem:[%s0 + $0xfc] sm:$0xf]
  %v96 = vld [vmem:[%s1] sm:$0xf]
  %v97 = vld [vmem:[%s1 + $0x4] sm:$0xf]
  %v98 = vld [vmem:[%s1 + $0x8] sm:$0xf]
  %v99 = vld [vmem:[%s1 + $0xc] sm:$0xf]
  %v100 = vld [vmem:[%s1 + $0x10] sm:$0xf]
  %v101 = vld [vmem:[%s1 + $0x14] sm:$0xf]
  %v102 = vld [vmem:[%s1 + $0x18] sm:$0xf]
  %v103 = vld [vmem:[%s1 + $0x1c] sm:$0xf]
  %v104 = vld [vmem:[%s1 + $0x20] sm:$0xf]
  %v105 = vld [vmem:[%s1 + $0x24] sm:$0xf]
  %v106 = vld [vmem:[%s1 + $0x28] sm:$0xf]
  %v107 = vld [vmem:[%s1 + $0x2c] sm:$0xf]
  %v108 = vld [vmem:[%s1 + $0x30] sm:$0xf]
  %v109 = vld [vmem:[%s1 + $0x34] sm:$0xf]
  %v110 = vld [vmem:[%s1 + $0x38] sm:$0xf]
  %v111 = vld [vmem:[%s1 + $0x3c] sm:$0xf]
  %v176 = vunpack.c.l.b16 %v32
  %v177 = vunpack.c.l.b16 %v33
  %v178 = vunpack.c.l.b16 %v34
  %v179 = vunpack.c.l.b16 %v35
  %v180 = vunpack.c.l.b16 %v36
  %v181 = vunpack.c.l.b16 %v37
  %v182 = vunpack.c.l.b16 %v38
  %v183 = vunpack.c.l.b16 %v39
  %v184 = vunpack.c.l.b16 %v40
  %v185 = vunpack.c.l.b16 %v41
  %v186 = vunpack.c.l.b16 %v42
  %v187 = vunpack.c.l.b16 %v43
  %v188 = vunpack.c.l.b16 %v44
  %v189 = vunpack.c.l.b16 %v45
  %v190 = vunpack.c.l.b16 %v46
  %v191 = vunpack.c.l.b16 %v47
  %v192 = vunpack.c.l.b16 %v48
  %v193 = vunpack.c.l.b16 %v49
  %v194 = vunpack.c.l.b16 %v50
  %v195 = vunpack.c.l.b16 %v51
  %v196 = vunpack.c.l.b16 %v52
  %v197 = vunpack.c.l.b16 %v53
  %v198 = vunpack.c.l.b16 %v54
  %v199 = vunpack.c.l.b16 %v55
  %v200 = vunpack.c.l.b16 %v56
  %v201 = vunpack.c.l.b16 %v57
  %v202 = vunpack.c.l.b16 %v58
  %v203 = vunpack.c.l.b16 %v59
  %v204 = vunpack.c.l.b16 %v60
  %v205 = vunpack.c.l.b16 %v61
  %v206 = vunpack.c.l.b16 %v62
  %v207 = vunpack.c.l.b16 %v63
  %v208 = vunpack.c.l.b16 %v64
  %v209 = vunpack.c.l.b16 %v65
  %v210 = vunpack.c.l.b16 %v66
  %v211 = vunpack.c.l.b16 %v67
  %v212 = vunpack.c.l.b16 %v68
  %v213 = vunpack.c.l.b16 %v69
  %v214 = vunpack.c.l.b16 %v70
  %v215 = vunpack.c.l.b16 %v71
  %v216 = vunpack.c.l.b16 %v72
  %v217 = vunpack.c.l.b16 %v73
  %v218 = vunpack.c.l.b16 %v74
  %v219 = vunpack.c.l.b16 %v75
  %v220 = vunpack.c.l.b16 %v76
  %v221 = vunpack.c.l.b16 %v77
  %v222 = vunpack.c.l.b16 %v78
  %v223 = vunpack.c.l.b16 %v79
  %v224 = vunpack.c.l.b16 %v80
  %v225 = vunpack.c.l.b16 %v81
  %v226 = vunpack.c.l.b16 %v82
  %v227 = vunpack.c.l.b16 %v83
  %v228 = vunpack.c.l.b16 %v84
  %v229 = vunpack.c.l.b16 %v85
  %v230 = vunpack.c.l.b16 %v86
  %v231 = vunpack.c.l.b16 %v87
  %v232 = vunpack.c.l.b16 %v88
  %v233 = vunpack.c.l.b16 %v89
  %v234 = vunpack.c.l.b16 %v90
  %v235 = vunpack.c.l.b16 %v91
  %v236 = vunpack.c.l.b16 %v92
  %v237 = vunpack.c.l.b16 %v93
  %v238 = vunpack.c.l.b16 %v94
  %v239 = vunpack.c.l.b16 %v95
  %v240 = vpack.c.b16 %v177, %v176
  %v241 = vpack.c.b16 %v179, %v178
  %v242 = vpack.c.b16 %v181, %v180
  %v243 = vpack.c.b16 %v183, %v182
  %v244 = vpack.c.b16 %v185, %v184
  %v245 = vpack.c.b16 %v187, %v186
  %v246 = vpack.c.b16 %v189, %v188
  %v247 = vpack.c.b16 %v191, %v190
  %v248 = vpack.c.b16 %v193, %v192
  %v249 = vpack.c.b16 %v195, %v194
  %v250 = vpack.c.b16 %v197, %v196
  %v251 = vpack.c.b16 %v199, %v198
  %v252 = vpack.c.b16 %v201, %v200
  %v253 = vpack.c.b16 %v203, %v202
  %v254 = vpack.c.b16 %v205, %v204
  %v255 = vpack.c.b16 %v207, %v206
  %v256 = vpack.c.b16 %v209, %v208
  %v257 = vpack.c.b16 %v211, %v210
  %v258 = vpack.c.b16 %v213, %v212
  %v259 = vpack.c.b16 %v215, %v214
  %v260 = vpack.c.b16 %v217, %v216
  %v261 = vpack.c.b16 %v219, %v218
  %v262 = vpack.c.b16 %v221, %v220
  %v263 = vpack.c.b16 %v223, %v222
  %v264 = vpack.c.b16 %v225, %v224
  %v265 = vpack.c.b16 %v227, %v226
  %v266 = vpack.c.b16 %v229, %v228
  %v267 = vpack.c.b16 %v231, %v230
  %v268 = vpack.c.b16 %v233, %v232
  %v269 = vpack.c.b16 %v235, %v234
  %v270 = vpack.c.b16 %v237, %v236
  %v271 = vpack.c.b16 %v239, %v238
  %v320 = vunpack.c.l.b16 %v96
  %v321 = vunpack.c.l.b16 %v97
  %v322 = vunpack.c.l.b16 %v98
  %v323 = vunpack.c.l.b16 %v99
  %v324 = vunpack.c.l.b16 %v100
  %v325 = vunpack.c.l.b16 %v101
  %v326 = vunpack.c.l.b16 %v102
  %v327 = vunpack.c.l.b16 %v103
  %v328 = vunpack.c.l.b16 %v104
  %v329 = vunpack.c.l.b16 %v105
  %v330 = vunpack.c.l.b16 %v106
  %v331 = vunpack.c.l.b16 %v107
  %v332 = vunpack.c.l.b16 %v108
  %v333 = vunpack.c.l.b16 %v109
  %v334 = vunpack.c.l.b16 %v110
  %v335 = vunpack.c.l.b16 %v111
  %v336 = vpack.c.b16 %v321, %v320
  %v337 = vpack.c.b16 %v323, %v322
  %v338 = vpack.c.b16 %v325, %v324
  %v339 = vpack.c.b16 %v327, %v326
  %v340 = vpack.c.b16 %v329, %v328
  %v341 = vpack.c.b16 %v331, %v330
  %v342 = vpack.c.b16 %v333, %v332
  %v343 = vpack.c.b16 %v335, %v334
  %352 = vmatprep.subr.bf16.mxu0 0
  %353 = vmatpush1.bf16.msra.mxu0 %v336
  %354 = vmatprep.subr.bf16.mxu0 0
  %355 = vmatpush1.bf16.msra.mxu0 %v337
  %356 = vmatprep.subr.bf16.mxu0 0
  %357 = vmatpush1.bf16.msra.mxu0 %v338
  %358 = vmatprep.subr.bf16.mxu0 0
  %359 = vmatpush1.bf16.msra.mxu0 %v339
  %360 = vmatprep.subr.bf16.mxu0 0
  %361 = vmatpush1.bf16.msra.mxu0 %v340
  %362 = vmatprep.subr.bf16.mxu0 0
  %363 = vmatpush1.bf16.msra.mxu0 %v341
  %364 = vmatprep.subr.bf16.mxu0 0
  %365 = vmatpush1.bf16.msra.mxu0 %v342
  %366 = vmatprep.subr.bf16.mxu0 0
  %367 = vmatpush1.bf16.msra.mxu0 %v343
  %368 = vmatprep.subr.bf16.mxu0 0
  %369 = vmatpush1.bf16.msra.mxu0 0
  %370 = vmatprep.subr.bf16.mxu0 0
  %371 = vmatpush1.bf16.msra.mxu0 0
  %372 = vmatprep.subr.bf16.mxu0 0
  %373 = vmatpush1.bf16.msra.mxu0 0
  %374 = vmatprep.subr.bf16.mxu0 0
  %375 = vmatpush1.bf16.msra.mxu0 0
  %376 = vmatprep.subr.bf16.mxu0 0
  %377 = vmatpush1.bf16.msra.mxu0 0
  %378 = vmatprep.subr.bf16.mxu0 0
  %379 = vmatpush1.bf16.msra.mxu0 0
  %380 = vmatprep.subr.bf16.mxu0 0
  %381 = vmatpush1.bf16.msra.mxu0 0
  %382 = vmatprep.subr.bf16.mxu0 0
  %383 = vmatpush1.bf16.msra.mxu0 0
  %384 = vmatprep.mubr.bf16.mxu0 0
  %385 = vmatmul.mubr.bf16.gmra.mrb[0].mxu0 %v240
  %v386 = vpop.f32.mrb[0].mxu0
  %v387 = vadd.f32 0.0, %v386
  %v388 = vpop.f32.mrb[0].mxu0
  %v389 = vpop.f32.mrb[0].mxu0
  %v390 = vadd.f32 0.0, %v389
  %v391 = vpop.f32.mrb[0].mxu0
  %392 = vmatprep.mubr.bf16.mxu0 0
  %393 = vmatmul.mubr.bf16.gmra.mrb[0].mxu0 %v241
  %v394 = vpop.f32.mrb[0].mxu0
  %v395 = vadd.f32 0.0, %v394
  %v396 = vpop.f32.mrb[0].mxu0
  %v397 = vpop.f32.mrb[0].mxu0
  %v398 = vadd.f32 0.0, %v397
  %v399 = vpop.f32.mrb[0].mxu0
  %400 = vmatprep.mubr.bf16.mxu0 0
  %401 = vmatmul.mubr.bf16.gmra.mrb[0].mxu0 %v242
  %v402 = vpop.f32.mrb[0].mxu0
  %v403 = vadd.f32 0.0, %v402
  %v404 = vpop.f32.mrb[0].mxu0
  %v405 = vpop.f32.mrb[0].mxu0
  %v406 = vadd.f32 0.0, %v405
  %v407 = vpop.f32.mrb[0].mxu0
  %408 = vmatprep.mubr.bf16.mxu0 0
  %409 = vmatmul.mubr.bf16.gmra.mrb[0].mxu0 %v243
  %v410 = vpop.f32.mrb[0].mxu0
  %v411 = vadd.f32 0.0, %v410
  %v412 = vpop.f32.mrb[0].mxu0
  %v413 = vpop.f32.mrb[0].mxu0
  %v414 = vadd.f32 0.0, %v413
  %v415 = vpop.f32.mrb[0].mxu0
  %416 = vmatprep.mubr.bf16.mxu0 0
  %417 = vmatmul.mubr.bf16.gmra.mrb[0].mxu0 %v244
  %v418 = vpop.f32.mrb[0].mxu0
  %v419 = vadd.f32 0.0, %v418
  %v420 = vpop.f32.mrb[0].mxu0
  %v421 = vpop.f32.mrb[0].mxu0
  %v422 = vadd.f32 0.0, %v421
  %v423 = vpop.f32.mrb[0].mxu0
  %424 = vmatprep.mubr.bf16.mxu0 0
  %425 = vmatmul.mubr.bf16.gmra.mrb[0].mxu0 %v245
  %v426 = vpop.f32.mrb[0].mxu0
  %v427 = vadd.f32 0.0, %v426
  %v428 = vpop.f32.mrb[0].mxu0
  %v429 = vpop.f32.mrb[0].mxu0
  %v430 = vadd.f32 0.0, %v429
  %v431 = vpop.f32.mrb[0].mxu0
  %432 = vmatprep.mubr.bf16.mxu0 0
  %433 = vmatmul.mubr.bf16.gmra.mrb[0].mxu0 %v246
  %v434 = vpop.f32.mrb[0].mxu0
  %v435 = vadd.f32 0.0, %v434
  %v436 = vpop.f32.mrb[0].mxu0
  %v437 = vpop.f32.mrb[0].mxu0
  %v438 = vadd.f32 0.0, %v437
  %v439 = vpop.f32.mrb[0].mxu0
  %440 = vmatprep.mubr.bf16.mxu0 0
  %441 = vmatmul.mubr.bf16.gmra.mrb[0].mxu0 %v247
  %v442 = vpop.f32.mrb[0].mxu0
  %v443 = vadd.f32 0.0, %v442
  %v444 = vpop.f32.mrb[0].mxu0
  %v445 = vpop.f32.mrb[0].mxu0
  %v446 = vadd.f32 0.0, %v445
  %v447 = vpop.f32.mrb[0].mxu0
  %448 = vmatprep.mubr.bf16.mxu0 0
  %449 = vmatmul.mubr.bf16.gmra.mrb[0].mxu0 %v248
  %v450 = vpop.f32.mrb[0].mxu0
  %v451 = vadd.f32 0.0, %v450
  %v452 = vpop.f32.mrb[0].mxu0
  %v453 = vpop.f32.mrb[0].mxu0
  %v454 = vadd.f32 0.0, %v453
  %v455 = vpop.f32.mrb[0].mxu0
  %456 = vmatprep.mubr.bf16.mxu0 0
  %457 = vmatmul.mubr.bf16.gmra.mrb[0].mxu0 %v249
  %v458 = vpop.f32.mrb[0].mxu0
  %v459 = vadd.f32 0.0, %v458
  %v460 = vpop.f32.mrb[0].mxu0
  %v461 = vpop.f32.mrb[0].mxu0
  %v462 = vadd.f32 0.0, %v461
  %v463 = vpop.f32.mrb[0].mxu0
  %464 = vmatprep.mubr.bf16.mxu0 0
  %465 = vmatmul.mubr.bf16.gmra.mrb[0].mxu0 %v250
  %v466 = vpop.f32.mrb[0].mxu0
  %v467 = vadd.f32 0.0, %v466
  %v468 = vpop.f32.mrb[0].mxu0
  %v469 = vpop.f32.mrb[0].mxu0
  %v470 = vadd.f32 0.0, %v469
  %v471 = vpop.f32.mrb[0].mxu0
  %472 = vmatprep.mubr.bf16.mxu0 0
  %473 = vmatmul.mubr.bf16.gmra.mrb[0].mxu0 %v251
  %v474 = vpop.f32.mrb[0].mxu0
  %v475 = vadd.f32 0.0, %v474
  %v476 = vpop.f32.mrb[0].mxu0
  %v477 = vpop.f32.mrb[0].mxu0
  %v478 = vadd.f32 0.0, %v477
  %v479 = vpop.f32.mrb[0].mxu0
  %480 = vmatprep.mubr.bf16.mxu0 0
  %481 = vmatmul.mubr.bf16.gmra.mrb[0].mxu0 %v252
  %v482 = vpop.f32.mrb[0].mxu0
  %v483 = vadd.f32 0.0, %v482
  %v484 = vpop.f32.mrb[0].mxu0
  %v485 = vpop.f32.mrb[0].mxu0
  %v486 = vadd.f32 0.0, %v485
  %v487 = vpop.f32.mrb[0].mxu0
  %488 = vmatprep.mubr.bf16.mxu0 0
  %489 = vmatmul.mubr.bf16.gmra.mrb[0].mxu0 %v253
  %v490 = vpop.f32.mrb[0].mxu0
  %v491 = vadd.f32 0.0, %v490
  %v492 = vpop.f32.mrb[0].mxu0
  %v493 = vpop.f32.mrb[0].mxu0
  %v494 = vadd.f32 0.0, %v493
  %v495 = vpop.f32.mrb[0].mxu0
  %496 = vmatprep.mubr.bf16.mxu0 0
  %497 = vmatmul.mubr.bf16.gmra.mrb[0].mxu0 %v254
  %v498 = vpop.f32.mrb[0].mxu0
  %v499 = vadd.f32 0.0, %v498
  %v500 = vpop.f32.mrb[0].mxu0
  %v501 = vpop.f32.mrb[0].mxu0
  %v502 = vadd.f32 0.0, %v501
  %v503 = vpop.f32.mrb[0].mxu0
  %504 = vmatprep.mubr.bf16.mxu0 0
  %505 = vmatmul.mubr.bf16.gmra.mrb[0].mxu0 %v255
  %v506 = vpop.f32.mrb[0].mxu0
  %v507 = vadd.f32 0.0, %v506
  %v508 = vpop.f32.mrb[0].mxu0
  %v509 = vpop.f32.mrb[0].mxu0
  %v510 = vadd.f32 0.0, %v509
  %v511 = vpop.f32.mrb[0].mxu0
  %512 = vmatprep.mubr.bf16.mxu0 0
  %513 = vmatmul.mubr.bf16.gmra.mrb[0].mxu0 %v256
  %v514 = vpop.f32.mrb[0].mxu0
  %v515 = vadd.f32 0.0, %v514
  %v516 = vpop.f32.mrb[0].mxu0
  %v517 = vpop.f32.mrb[0].mxu0
  %v518 = vadd.f32 0.0, %v517
  %v519 = vpop.f32.mrb[0].mxu0
  %520 = vmatprep.mubr.bf16.mxu0 0
  %521 = vmatmul.mubr.bf16.gmra.mrb[0].mxu0 %v257
  %v522 = vpop.f32.mrb[0].mxu0
  %v523 = vadd.f32 0.0, %v522
  %v524 = vpop.f32.mrb[0].mxu0
  %v525 = vpop.f32.mrb[0].mxu0
  %v526 = vadd.f32 0.0, %v525
  %v527 = vpop.f32.mrb[0].mxu0
  %528 = vmatprep.mubr.bf16.mxu0 0
  %529 = vmatmul.mubr.bf16.gmra.mrb[0].mxu0 %v258
  %v530 = vpop.f32.mrb[0].mxu0
  %v531 = vadd.f32 0.0, %v530
  %v532 = vpop.f32.mrb[0].mxu0
  %v533 = vpop.f32.mrb[0].mxu0
  %v534 = vadd.f32 0.0, %v533
  %v535 = vpop.f32.mrb[0].mxu0
  %536 = vmatprep.mubr.bf16.mxu0 0
  %537 = vmatmul.mubr.bf16.gmra.mrb[0].mxu0 %v259
  %v538 = vpop.f32.mrb[0].mxu0
  %v539 = vadd.f32 0.0, %v538
  %v540 = vpop.f32.mrb[0].mxu0
  %v541 = vpop.f32.mrb[0].mxu0
  %v542 = vadd.f32 0.0, %v541
  %v543 = vpop.f32.mrb[0].mxu0
  %544 = vmatprep.mubr.bf16.mxu0 0
  %545 = vmatmul.mubr.bf16.gmra.mrb[0].mxu0 %v260
  %v546 = vpop.f32.mrb[0].mxu0
  %v547 = vadd.f32 0.0, %v546
  %v548 = vpop.f32.mrb[0].mxu0
  %v549 = vpop.f32.mrb[0].mxu0
  %v550 = vadd.f32 0.0, %v549
  %v551 = vpop.f32.mrb[0].mxu0
  %552 = vmatprep.mubr.bf16.mxu0 0
  %553 = vmatmul.mubr.bf16.gmra.mrb[0].mxu0 %v261
  %v554 = vpop.f32.mrb[0].mxu0
  %v555 = vadd.f32 0.0, %v554
  %v556 = vpop.f32.mrb[0].mxu0
  %v557 = vpop.f32.mrb[0].mxu0
  %v558 = vadd.f32 0.0, %v557
  %v559 = vpop.f32.mrb[0].mxu0
  %560 = vmatprep.mubr.bf16.mxu0 0
  %561 = vmatmul.mubr.bf16.gmra.mrb[0].mxu0 %v262
  %v562 = vpop.f32.mrb[0].mxu0
  %v563 = vadd.f32 0.0, %v562
  %v564 = vpop.f32.mrb[0].mxu0
  %v565 = vpop.f32.mrb[0].mxu0
  %v566 = vadd.f32 0.0, %v565
  %v567 = vpop.f32.mrb[0].mxu0
  %568 = vmatprep.mubr.bf16.mxu0 0
  %569 = vmatmul.mubr.bf16.gmra.mrb[0].mxu0 %v263
  %v570 = vpop.f32.mrb[0].mxu0
  %v571 = vadd.f32 0.0, %v570
  %v572 = vpop.f32.mrb[0].mxu0
  %v573 = vpop.f32.mrb[0].mxu0
  %v574 = vadd.f32 0.0, %v573
  %v575 = vpop.f32.mrb[0].mxu0
  %576 = vmatprep.mubr.bf16.mxu0 0
  %577 = vmatmul.mubr.bf16.gmra.mrb[0].mxu0 %v264
  %v578 = vpop.f32.mrb[0].mxu0
  %v579 = vadd.f32 0.0, %v578
  %v580 = vpop.f32.mrb[0].mxu0
  %v581 = vpop.f32.mrb[0].mxu0
  %v582 = vadd.f32 0.0, %v581
  %v583 = vpop.f32.mrb[0].mxu0
  %584 = vmatprep.mubr.bf16.mxu0 0
  %585 = vmatmul.mubr.bf16.gmra.mrb[0].mxu0 %v265
  %v586 = vpop.f32.mrb[0].mxu0
  %v587 = vadd.f32 0.0, %v586
  %v588 = vpop.f32.mrb[0].mxu0
  %v589 = vpop.f32.mrb[0].mxu0
  %v590 = vadd.f32 0.0, %v589
  %v591 = vpop.f32.mrb[0].mxu0
  %592 = vmatprep.mubr.bf16.mxu0 0
  %593 = vmatmul.mubr.bf16.gmra.mrb[0].mxu0 %v266
  %v594 = vpop.f32.mrb[0].mxu0
  %v595 = vadd.f32 0.0, %v594
  %v596 = vpop.f32.mrb[0].mxu0
  %v597 = vpop.f32.mrb[0].mxu0
  %v598 = vadd.f32 0.0, %v597
  %v599 = vpop.f32.mrb[0].mxu0
  %600 = vmatprep.mubr.bf16.mxu0 0
  %601 = vmatmul.mubr.bf16.gmra.mrb[0].mxu0 %v267
  %v602 = vpop.f32.mrb[0].mxu0
  %v603 = vadd.f32 0.0, %v602
  %v604 = vpop.f32.mrb[0].mxu0
  %v605 = vpop.f32.mrb[0].mxu0
  %v606 = vadd.f32 0.0, %v605
  %v607 = vpop.f32.mrb[0].mxu0
  %608 = vmatprep.mubr.bf16.mxu0 0
  %609 = vmatmul.mubr.bf16.gmra.mrb[0].mxu0 %v268
  %v610 = vpop.f32.mrb[0].mxu0
  %v611 = vadd.f32 0.0, %v610
  %v612 = vpop.f32.mrb[0].mxu0
  %v613 = vpop.f32.mrb[0].mxu0
  %v614 = vadd.f32 0.0, %v613
  %v615 = vpop.f32.mrb[0].mxu0
  %616 = vmatprep.mubr.bf16.mxu0 0
  %617 = vmatmul.mubr.bf16.gmra.mrb[0].mxu0 %v269
  %v618 = vpop.f32.mrb[0].mxu0
  %v619 = vadd.f32 0.0, %v618
  %v620 = vpop.f32.mrb[0].mxu0
  %v621 = vpop.f32.mrb[0].mxu0
  %v622 = vadd.f32 0.0, %v621
  %v623 = vpop.f32.mrb[0].mxu0
  %624 = vmatprep.mubr.bf16.mxu0 0
  %625 = vmatmul.mubr.bf16.gmra.mrb[0].mxu0 %v270
  %v626 = vpop.f32.mrb[0].mxu0
  %v627 = vadd.f32 0.0, %v626
  %v628 = vpop.f32.mrb[0].mxu0
  %v629 = vpop.f32.mrb[0].mxu0
  %v630 = vadd.f32 0.0, %v629
  %v631 = vpop.f32.mrb[0].mxu0
  %632 = vmatprep.mubr.bf16.mxu0 0
  %633 = vmatmul.mubr.bf16.gmra.mrb[0].mxu0 %v271
  %v634 = vpop.f32.mrb[0].mxu0
  %v635 = vadd.f32 0.0, %v634
  %v636 = vpop.f32.mrb[0].mxu0
  %v637 = vpop.f32.mrb[0].mxu0
  %v638 = vadd.f32 0.0, %v637
  %v639 = vpop.f32.mrb[0].mxu0
  %640 = vdwg.mxu0
  %v641 = vld [vmem:[%s2] sm:$0xf]
  %v642 = vld [vmem:[%s2 + $0x4] sm:$0xf]
  %v643 = vld [vmem:[%s2 + $0x8] sm:$0xf]
  %v644 = vld [vmem:[%s2 + $0xc] sm:$0xf]
  %v645 = vld [vmem:[%s2 + $0x10] sm:$0xf]
  %v646 = vld [vmem:[%s2 + $0x14] sm:$0xf]
  %v647 = vld [vmem:[%s2 + $0x18] sm:$0xf]
  %v648 = vld [vmem:[%s2 + $0x1c] sm:$0xf]
  %v649 = vld [vmem:[%s2 + $0x20] sm:$0xf]
  %v650 = vld [vmem:[%s2 + $0x24] sm:$0xf]
  %v651 = vld [vmem:[%s2 + $0x28] sm:$0xf]
  %v652 = vld [vmem:[%s2 + $0x2c] sm:$0xf]
  %v653 = vld [vmem:[%s2 + $0x30] sm:$0xf]
  %v654 = vld [vmem:[%s2 + $0x34] sm:$0xf]
  %v655 = vld [vmem:[%s2 + $0x38] sm:$0xf]
  %v656 = vld [vmem:[%s2 + $0x3c] sm:$0xf]
  %v657 = vld [vmem:[%s2 + $0x40] sm:$0xf]
  %v658 = vld [vmem:[%s2 + $0x44] sm:$0xf]
  %v659 = vld [vmem:[%s2 + $0x48] sm:$0xf]
  %v660 = vld [vmem:[%s2 + $0x4c] sm:$0xf]
  %v661 = vld [vmem:[%s2 + $0x50] sm:$0xf]
  %v662 = vld [vmem:[%s2 + $0x54] sm:$0xf]
  %v663 = vld [vmem:[%s2 + $0x58] sm:$0xf]
  %v664 = vld [vmem:[%s2 + $0x5c] sm:$0xf]
  %v665 = vld [vmem:[%s2 + $0x60] sm:$0xf]
  %v666 = vld [vmem:[%s2 + $0x64] sm:$0xf]
  %v667 = vld [vmem:[%s2 + $0x68] sm:$0xf]
  %v668 = vld [vmem:[%s2 + $0x6c] sm:$0xf]
  %v669 = vld [vmem:[%s2 + $0x70] sm:$0xf]
  %v670 = vld [vmem:[%s2 + $0x74] sm:$0xf]
  %v671 = vld [vmem:[%s2 + $0x78] sm:$0xf]
  %v672 = vld [vmem:[%s2 + $0x7c] sm:$0xf]
  %v673 = vld [vmem:[%s2 + $0x80] sm:$0xf]
  %v674 = vld [vmem:[%s2 + $0x84] sm:$0xf]
  %v675 = vld [vmem:[%s2 + $0x88] sm:$0xf]
  %v676 = vld [vmem:[%s2 + $0x8c] sm:$0xf]
  %v677 = vld [vmem:[%s2 + $0x90] sm:$0xf]
  %v678 = vld [vmem:[%s2 + $0x94] sm:$0xf]
  %v679 = vld [vmem:[%s2 + $0x98] sm:$0xf]
  %v680 = vld [vmem:[%s2 + $0x9c] sm:$0xf]
  %v681 = vld [vmem:[%s2 + $0xa0] sm:$0xf]
  %v682 = vld [vmem:[%s2 + $0xa4] sm:$0xf]
  %v683 = vld [vmem:[%s2 + $0xa8] sm:$0xf]
  %v684 = vld [vmem:[%s2 + $0xac] sm:$0xf]
  %v685 = vld [vmem:[%s2 + $0xb0] sm:$0xf]
  %v686 = vld [vmem:[%s2 + $0xb4] sm:$0xf]
  %v687 = vld [vmem:[%s2 + $0xb8] sm:$0xf]
  %v688 = vld [vmem:[%s2 + $0xbc] sm:$0xf]
  %v689 = vld [vmem:[%s2 + $0xc0] sm:$0xf]
  %v690 = vld [vmem:[%s2 + $0xc4] sm:$0xf]
  %v691 = vld [vmem:[%s2 + $0xc8] sm:$0xf]
  %v692 = vld [vmem:[%s2 + $0xcc] sm:$0xf]
  %v693 = vld [vmem:[%s2 + $0xd0] sm:$0xf]
  %v694 = vld [vmem:[%s2 + $0xd4] sm:$0xf]
  %v695 = vld [vmem:[%s2 + $0xd8] sm:$0xf]
  %v696 = vld [vmem:[%s2 + $0xdc] sm:$0xf]
  %v697 = vld [vmem:[%s2 + $0xe0] sm:$0xf]
  %v698 = vld [vmem:[%s2 + $0xe4] sm:$0xf]
  %v699 = vld [vmem:[%s2 + $0xe8] sm:$0xf]
  %v700 = vld [vmem:[%s2 + $0xec] sm:$0xf]
  %v701 = vld [vmem:[%s2 + $0xf0] sm:$0xf]
  %v702 = vld [vmem:[%s2 + $0xf4] sm:$0xf]
  %v703 = vld [vmem:[%s2 + $0xf8] sm:$0xf]
  %v704 = vld [vmem:[%s2 + $0xfc] sm:$0xf]
  %v705 = vld [vmem:[%s3] sm:$0xf]
  %v706 = vld [vmem:[%s3 + $0x4] sm:$0xf]
  %v707 = vld [vmem:[%s3 + $0x8] sm:$0xf]
  %v708 = vld [vmem:[%s3 + $0xc] sm:$0xf]
  %v709 = vld [vmem:[%s3 + $0x10] sm:$0xf]
  %v710 = vld [vmem:[%s3 + $0x14] sm:$0xf]
  %v711 = vld [vmem:[%s3 + $0x18] sm:$0xf]
  %v712 = vld [vmem:[%s3 + $0x1c] sm:$0xf]
  %v713 = vld [vmem:[%s3 + $0x20] sm:$0xf]
  %v714 = vld [vmem:[%s3 + $0x24] sm:$0xf]
  %v715 = vld [vmem:[%s3 + $0x28] sm:$0xf]
  %v716 = vld [vmem:[%s3 + $0x2c] sm:$0xf]
  %v717 = vld [vmem:[%s3 + $0x30] sm:$0xf]
  %v718 = vld [vmem:[%s3 + $0x34] sm:$0xf]
  %v719 = vld [vmem:[%s3 + $0x38] sm:$0xf]
  %v720 = vld [vmem:[%s3 + $0x3c] sm:$0xf]
  %v785 = vunpack.c.l.b16 %v641
  %v786 = vunpack.c.l.b16 %v642
  %v787 = vunpack.c.l.b16 %v643
  %v788 = vunpack.c.l.b16 %v644
  %v789 = vunpack.c.l.b16 %v645
  %v790 = vunpack.c.l.b16 %v646
  %v791 = vunpack.c.l.b16 %v647
  %v792 = vunpack.c.l.b16 %v648
  %v793 = vunpack.c.l.b16 %v649
  %v794 = vunpack.c.l.b16 %v650
  %v795 = vunpack.c.l.b16 %v651
  %v796 = vunpack.c.l.b16 %v652
  %v797 = vunpack.c.l.b16 %v653
  %v798 = vunpack.c.l.b16 %v654
  %v799 = vunpack.c.l.b16 %v655
  %v800 = vunpack.c.l.b16 %v656
  %v801 = vunpack.c.l.b16 %v657
  %v802 = vunpack.c.l.b16 %v658
  %v803 = vunpack.c.l.b16 %v659
  %v804 = vunpack.c.l.b16 %v660
  %v805 = vunpack.c.l.b16 %v661
  %v806 = vunpack.c.l.b16 %v662
  %v807 = vunpack.c.l.b16 %v663
  %v808 = vunpack.c.l.b16 %v664
  %v809 = vunpack.c.l.b16 %v665
  %v810 = vunpack.c.l.b16 %v666
  %v811 = vunpack.c.l.b16 %v667
  %v812 = vunpack.c.l.b16 %v668
  %v813 = vunpack.c.l.b16 %v669
  %v814 = vunpack.c.l.b16 %v670
  %v815 = vunpack.c.l.b16 %v671
  %v816 = vunpack.c.l.b16 %v672
  %v817 = vunpack.c.l.b16 %v673
  %v818 = vunpack.c.l.b16 %v674
  %v819 = vunpack.c.l.b16 %v675
  %v820 = vunpack.c.l.b16 %v676
  %v821 = vunpack.c.l.b16 %v677
  %v822 = vunpack.c.l.b16 %v678
  %v823 = vunpack.c.l.b16 %v679
  %v824 = vunpack.c.l.b16 %v680
  %v825 = vunpack.c.l.b16 %v681
  %v826 = vunpack.c.l.b16 %v682
  %v827 = vunpack.c.l.b16 %v683
  %v828 = vunpack.c.l.b16 %v684
  %v829 = vunpack.c.l.b16 %v685
  %v830 = vunpack.c.l.b16 %v686
  %v831 = vunpack.c.l.b16 %v687
  %v832 = vunpack.c.l.b16 %v688
  %v833 = vunpack.c.l.b16 %v689
  %v834 = vunpack.c.l.b16 %v690
  %v835 = vunpack.c.l.b16 %v691
  %v836 = vunpack.c.l.b16 %v692
  %v837 = vunpack.c.l.b16 %v693
  %v838 = vunpack.c.l.b16 %v694
  %v839 = vunpack.c.l.b16 %v695
  %v840 = vunpack.c.l.b16 %v696
  %v841 = vunpack.c.l.b16 %v697
  %v842 = vunpack.c.l.b16 %v698
  %v843 = vunpack.c.l.b16 %v699
  %v844 = vunpack.c.l.b16 %v700
  %v845 = vunpack.c.l.b16 %v701
  %v846 = vunpack.c.l.b16 %v702
  %v847 = vunpack.c.l.b16 %v703
  %v848 = vunpack.c.l.b16 %v704
  %v849 = vpack.c.b16 %v786, %v785
  %v850 = vpack.c.b16 %v788, %v787
  %v851 = vpack.c.b16 %v790, %v789
  %v852 = vpack.c.b16 %v792, %v791
  %v853 = vpack.c.b16 %v794, %v793
  %v854 = vpack.c.b16 %v796, %v795
  %v855 = vpack.c.b16 %v798, %v797
  %v856 = vpack.c.b16 %v800, %v799
  %v857 = vpack.c.b16 %v802, %v801
  %v858 = vpack.c.b16 %v804, %v803
  %v859 = vpack.c.b16 %v806, %v805
  %v860 = vpack.c.b16 %v808, %v807
  %v861 = vpack.c.b16 %v810, %v809
  %v862 = vpack.c.b16 %v812, %v811
  %v863 = vpack.c.b16 %v814, %v813
  %v864 = vpack.c.b16 %v816, %v815
  %v865 = vpack.c.b16 %v818, %v817
  %v866 = vpack.c.b16 %v820, %v819
  %v867 = vpack.c.b16 %v822, %v821
  %v868 = vpack.c.b16 %v824, %v823
  %v869 = vpack.c.b16 %v826, %v825
  %v870 = vpack.c.b16 %v828, %v827
  %v871 = vpack.c.b16 %v830, %v829
  %v872 = vpack.c.b16 %v832, %v831
  %v873 = vpack.c.b16 %v834, %v833
  %v874 = vpack.c.b16 %v836, %v835
  %v875 = vpack.c.b16 %v838, %v837
  %v876 = vpack.c.b16 %v840, %v839
  %v877 = vpack.c.b16 %v842, %v841
  %v878 = vpack.c.b16 %v844, %v843
  %v879 = vpack.c.b16 %v846, %v845
  %v880 = vpack.c.b16 %v848, %v847
  %v929 = vunpack.c.l.b16 %v705
  %v930 = vunpack.c.l.b16 %v706
  %v931 = vunpack.c.l.b16 %v707
  %v932 = vunpack.c.l.b16 %v708
  %v933 = vunpack.c.l.b16 %v709
  %v934 = vunpack.c.l.b16 %v710
  %v935 = vunpack.c.l.b16 %v711
  %v936 = vunpack.c.l.b16 %v712
  %v937 = vunpack.c.l.b16 %v713
  %v938 = vunpack.c.l.b16 %v714
  %v939 = vunpack.c.l.b16 %v715
  %v940 = vunpack.c.l.b16 %v716
  %v941 = vunpack.c.l.b16 %v717
  %v942 = vunpack.c.l.b16 %v718
  %v943 = vunpack.c.l.b16 %v719
  %v944 = vunpack.c.l.b16 %v720
  %v945 = vpack.c.b16 %v930, %v929
  %v946 = vpack.c.b16 %v932, %v931
  %v947 = vpack.c.b16 %v934, %v933
  %v948 = vpack.c.b16 %v936, %v935
  %v949 = vpack.c.b16 %v938, %v937
  %v950 = vpack.c.b16 %v940, %v939
  %v951 = vpack.c.b16 %v942, %v941
  %v952 = vpack.c.b16 %v944, %v943
  %961 = vmatprep.subr.bf16.mxu0 0
  %962 = vmatpush1.bf16.msra.mxu0 %v945
  %963 = vmatprep.subr.bf16.mxu0 0
  %964 = vmatpush1.bf16.msra.mxu0 %v946
  %965 = vmatprep.subr.bf16.mxu0 0
  %966 = vmatpush1.bf16.msra.mxu0 %v947
  %967 = vmatprep.subr.bf16.mxu0 0
  %968 = vmatpush1.bf16.msra.mxu0 %v948
  %969 = vmatprep.subr.bf16.mxu0 0
  %970 = vmatpush1.bf16.msra.mxu0 %v949
  %971 = vmatprep.subr.bf16.mxu0 0
  %972 = vmatpush1.bf16.msra.mxu0 %v950
  %973 = vmatprep.subr.bf16.mxu0 0
  %974 = vmatpush1.bf16.msra.mxu0 %v951
  %975 = vmatprep.subr.bf16.mxu0 0
  %976 = vmatpush1.bf16.msra.mxu0 %v952
  %977 = vmatprep.subr.bf16.mxu0 0
  %978 = vmatpush1.bf16.msra.mxu0 0
  %979 = vmatprep.subr.bf16.mxu0 0
  %980 = vmatpush1.bf16.msra.mxu0 0
  %981 = vmatprep.subr.bf16.mxu0 0
  %982 = vmatpush1.bf16.msra.mxu0 0
  %983 = vmatprep.subr.bf16.mxu0 0
  %984 = vmatpush1.bf16.msra.mxu0 0
  %985 = vmatprep.subr.bf16.mxu0 0
  %986 = vmatpush1.bf16.msra.mxu0 0
  %987 = vmatprep.subr.bf16.mxu0 0
  %988 = vmatpush1.bf16.msra.mxu0 0
  %989 = vmatprep.subr.bf16.mxu0 0
  %990 = vmatpush1.bf16.msra.mxu0 0
  %991 = vmatprep.subr.bf16.mxu0 0
  %992 = vmatpush1.bf16.msra.mxu0 0
  %993 = vmatprep.mubr.bf16.mxu0 0
  %994 = vmatmul.mubr.bf16.gmra.mrb[0].mxu0 %v849
  %v995 = vpop.f32.mrb[0].mxu0
  %v996 = vadd.f32 0.0, %v995
  %v997 = vpop.f32.mrb[0].mxu0
  %v998 = vpop.f32.mrb[0].mxu0
  %v999 = vadd.f32 0.0, %v998
  %v1000 = vpop.f32.mrb[0].mxu0
  %1001 = vmatprep.mubr.bf16.mxu0 0
  %1002 = vmatmul.mubr.bf16.gmra.mrb[0].mxu0 %v850
  %v1003 = vpop.f32.mrb[0].mxu0
  %v1004 = vadd.f32 0.0, %v1003
  %v1005 = vpop.f32.mrb[0].mxu0
  %v1006 = vpop.f32.mrb[0].mxu0
  %v1007 = vadd.f32 0.0, %v1006
  %v1008 = vpop.f32.mrb[0].mxu0
  %1009 = vmatprep.mubr.bf16.mxu0 0
  %1010 = vmatmul.mubr.bf16.gmra.mrb[0].mxu0 %v851
  %v1011 = vpop.f32.mrb[0].mxu0
  %v1012 = vadd.f32 0.0, %v1011
  %v1013 = vpop.f32.mrb[0].mxu0
  %v1014 = vpop.f32.mrb[0].mxu0
  %v1015 = vadd.f32 0.0, %v1014
  %v1016 = vpop.f32.mrb[0].mxu0
  %1017 = vmatprep.mubr.bf16.mxu0 0
  %1018 = vmatmul.mubr.bf16.gmra.mrb[0].mxu0 %v852
  %v1019 = vpop.f32.mrb[0].mxu0
  %v1020 = vadd.f32 0.0, %v1019
  %v1021 = vpop.f32.mrb[0].mxu0
  %v1022 = vpop.f32.mrb[0].mxu0
  %v1023 = vadd.f32 0.0, %v1022
  %v1024 = vpop.f32.mrb[0].mxu0
  %1025 = vmatprep.mubr.bf16.mxu0 0
  %1026 = vmatmul.mubr.bf16.gmra.mrb[0].mxu0 %v853
  %v1027 = vpop.f32.mrb[0].mxu0
  %v1028 = vadd.f32 0.0, %v1027
  %v1029 = vpop.f32.mrb[0].mxu0
  %v1030 = vpop.f32.mrb[0].mxu0
  %v1031 = vadd.f32 0.0, %v1030
  %v1032 = vpop.f32.mrb[0].mxu0
  %1033 = vmatprep.mubr.bf16.mxu0 0
  %1034 = vmatmul.mubr.bf16.gmra.mrb[0].mxu0 %v854
  %v1035 = vpop.f32.mrb[0].mxu0
  %v1036 = vadd.f32 0.0, %v1035
  %v1037 = vpop.f32.mrb[0].mxu0
  %v1038 = vpop.f32.mrb[0].mxu0
  %v1039 = vadd.f32 0.0, %v1038
  %v1040 = vpop.f32.mrb[0].mxu0
  %1041 = vmatprep.mubr.bf16.mxu0 0
  %1042 = vmatmul.mubr.bf16.gmra.mrb[0].mxu0 %v855
  %v1043 = vpop.f32.mrb[0].mxu0
  %v1044 = vadd.f32 0.0, %v1043
  %v1045 = vpop.f32.mrb[0].mxu0
  %v1046 = vpop.f32.mrb[0].mxu0
  %v1047 = vadd.f32 0.0, %v1046
  %v1048 = vpop.f32.mrb[0].mxu0
  %1049 = vmatprep.mubr.bf16.mxu0 0
  %1050 = vmatmul.mubr.bf16.gmra.mrb[0].mxu0 %v856
  %v1051 = vpop.f32.mrb[0].mxu0
  %v1052 = vadd.f32 0.0, %v1051
  %v1053 = vpop.f32.mrb[0].mxu0
  %v1054 = vpop.f32.mrb[0].mxu0
  %v1055 = vadd.f32 0.0, %v1054
  %v1056 = vpop.f32.mrb[0].mxu0
  %1057 = vmatprep.mubr.bf16.mxu0 0
  %1058 = vmatmul.mubr.bf16.gmra.mrb[0].mxu0 %v857
  %v1059 = vpop.f32.mrb[0].mxu0
  %v1060 = vadd.f32 0.0, %v1059
  %v1061 = vpop.f32.mrb[0].mxu0
  %v1062 = vpop.f32.mrb[0].mxu0
  %v1063 = vadd.f32 0.0, %v1062
  %v1064 = vpop.f32.mrb[0].mxu0
  %1065 = vmatprep.mubr.bf16.mxu0 0
  %1066 = vmatmul.mubr.bf16.gmra.mrb[0].mxu0 %v858
  %v1067 = vpop.f32.mrb[0].mxu0
  %v1068 = vadd.f32 0.0, %v1067
  %v1069 = vpop.f32.mrb[0].mxu0
  %v1070 = vpop.f32.mrb[0].mxu0
  %v1071 = vadd.f32 0.0, %v1070
  %v1072 = vpop.f32.mrb[0].mxu0
  %1073 = vmatprep.mubr.bf16.mxu0 0
  %1074 = vmatmul.mubr.bf16.gmra.mrb[0].mxu0 %v859
  %v1075 = vpop.f32.mrb[0].mxu0
  %v1076 = vadd.f32 0.0, %v1075
  %v1077 = vpop.f32.mrb[0].mxu0
  %v1078 = vpop.f32.mrb[0].mxu0
  %v1079 = vadd.f32 0.0, %v1078
  %v1080 = vpop.f32.mrb[0].mxu0
  %1081 = vmatprep.mubr.bf16.mxu0 0
  %1082 = vmatmul.mubr.bf16.gmra.mrb[0].mxu0 %v860
  %v1083 = vpop.f32.mrb[0].mxu0
  %v1084 = vadd.f32 0.0, %v1083
  %v1085 = vpop.f32.mrb[0].mxu0
  %v1086 = vpop.f32.mrb[0].mxu0
  %v1087 = vadd.f32 0.0, %v1086
  %v1088 = vpop.f32.mrb[0].mxu0
  %1089 = vmatprep.mubr.bf16.mxu0 0
  %1090 = vmatmul.mubr.bf16.gmra.mrb[0].mxu0 %v861
  %v1091 = vpop.f32.mrb[0].mxu0
  %v1092 = vadd.f32 0.0, %v1091
  %v1093 = vpop.f32.mrb[0].mxu0
  %v1094 = vpop.f32.mrb[0].mxu0
  %v1095 = vadd.f32 0.0, %v1094
  %v1096 = vpop.f32.mrb[0].mxu0
  %1097 = vmatprep.mubr.bf16.mxu0 0
  %1098 = vmatmul.mubr.bf16.gmra.mrb[0].mxu0 %v862
  %v1099 = vpop.f32.mrb[0].mxu0
  %v1100 = vadd.f32 0.0, %v1099
  %v1101 = vpop.f32.mrb[0].mxu0
  %v1102 = vpop.f32.mrb[0].mxu0
  %v1103 = vadd.f32 0.0, %v1102
  %v1104 = vpop.f32.mrb[0].mxu0
  %1105 = vmatprep.mubr.bf16.mxu0 0
  %1106 = vmatmul.mubr.bf16.gmra.mrb[0].mxu0 %v863
  %v1107 = vpop.f32.mrb[0].mxu0
  %v1108 = vadd.f32 0.0, %v1107
  %v1109 = vpop.f32.mrb[0].mxu0
  %v1110 = vpop.f32.mrb[0].mxu0
  %v1111 = vadd.f32 0.0, %v1110
  %v1112 = vpop.f32.mrb[0].mxu0
  %1113 = vmatprep.mubr.bf16.mxu0 0
  %1114 = vmatmul.mubr.bf16.gmra.mrb[0].mxu0 %v864
  %v1115 = vpop.f32.mrb[0].mxu0
  %v1116 = vadd.f32 0.0, %v1115
  %v1117 = vpop.f32.mrb[0].mxu0
  %v1118 = vpop.f32.mrb[0].mxu0
  %v1119 = vadd.f32 0.0, %v1118
  %v1120 = vpop.f32.mrb[0].mxu0
  %1121 = vmatprep.mubr.bf16.mxu0 0
  %1122 = vmatmul.mubr.bf16.gmra.mrb[0].mxu0 %v865
  %v1123 = vpop.f32.mrb[0].mxu0
  %v1124 = vadd.f32 0.0, %v1123
  %v1125 = vpop.f32.mrb[0].mxu0
  %v1126 = vpop.f32.mrb[0].mxu0
  %v1127 = vadd.f32 0.0, %v1126
  %v1128 = vpop.f32.mrb[0].mxu0
  %1129 = vmatprep.mubr.bf16.mxu0 0
  %1130 = vmatmul.mubr.bf16.gmra.mrb[0].mxu0 %v866
  %v1131 = vpop.f32.mrb[0].mxu0
  %v1132 = vadd.f32 0.0, %v1131
  %v1133 = vpop.f32.mrb[0].mxu0
  %v1134 = vpop.f32.mrb[0].mxu0
  %v1135 = vadd.f32 0.0, %v1134
  %v1136 = vpop.f32.mrb[0].mxu0
  %1137 = vmatprep.mubr.bf16.mxu0 0
  %1138 = vmatmul.mubr.bf16.gmra.mrb[0].mxu0 %v867
  %v1139 = vpop.f32.mrb[0].mxu0
  %v1140 = vadd.f32 0.0, %v1139
  %v1141 = vpop.f32.mrb[0].mxu0
  %v1142 = vpop.f32.mrb[0].mxu0
  %v1143 = vadd.f32 0.0, %v1142
  %v1144 = vpop.f32.mrb[0].mxu0
  %1145 = vmatprep.mubr.bf16.mxu0 0
  %1146 = vmatmul.mubr.bf16.gmra.mrb[0].mxu0 %v868
  %v1147 = vpop.f32.mrb[0].mxu0
  %v1148 = vadd.f32 0.0, %v1147
  %v1149 = vpop.f32.mrb[0].mxu0
  %v1150 = vpop.f32.mrb[0].mxu0
  %v1151 = vadd.f32 0.0, %v1150
  %v1152 = vpop.f32.mrb[0].mxu0
  %1153 = vmatprep.mubr.bf16.mxu0 0
  %1154 = vmatmul.mubr.bf16.gmra.mrb[0].mxu0 %v869
  %v1155 = vpop.f32.mrb[0].mxu0
  %v1156 = vadd.f32 0.0, %v1155
  %v1157 = vpop.f32.mrb[0].mxu0
  %v1158 = vpop.f32.mrb[0].mxu0
  %v1159 = vadd.f32 0.0, %v1158
  %v1160 = vpop.f32.mrb[0].mxu0
  %1161 = vmatprep.mubr.bf16.mxu0 0
  %1162 = vmatmul.mubr.bf16.gmra.mrb[0].mxu0 %v870
  %v1163 = vpop.f32.mrb[0].mxu0
  %v1164 = vadd.f32 0.0, %v1163
  %v1165 = vpop.f32.mrb[0].mxu0
  %v1166 = vpop.f32.mrb[0].mxu0
  %v1167 = vadd.f32 0.0, %v1166
  %v1168 = vpop.f32.mrb[0].mxu0
  %1169 = vmatprep.mubr.bf16.mxu0 0
  %1170 = vmatmul.mubr.bf16.gmra.mrb[0].mxu0 %v871
  %v1171 = vpop.f32.mrb[0].mxu0
  %v1172 = vadd.f32 0.0, %v1171
  %v1173 = vpop.f32.mrb[0].mxu0
  %v1174 = vpop.f32.mrb[0].mxu0
  %v1175 = vadd.f32 0.0, %v1174
  %v1176 = vpop.f32.mrb[0].mxu0
  %1177 = vmatprep.mubr.bf16.mxu0 0
  %1178 = vmatmul.mubr.bf16.gmra.mrb[0].mxu0 %v872
  %v1179 = vpop.f32.mrb[0].mxu0
  %v1180 = vadd.f32 0.0, %v1179
  %v1181 = vpop.f32.mrb[0].mxu0
  %v1182 = vpop.f32.mrb[0].mxu0
  %v1183 = vadd.f32 0.0, %v1182
  %v1184 = vpop.f32.mrb[0].mxu0
  %1185 = vmatprep.mubr.bf16.mxu0 0
  %1186 = vmatmul.mubr.bf16.gmra.mrb[0].mxu0 %v873
  %v1187 = vpop.f32.mrb[0].mxu0
  %v1188 = vadd.f32 0.0, %v1187
  %v1189 = vpop.f32.mrb[0].mxu0
  %v1190 = vpop.f32.mrb[0].mxu0
  %v1191 = vadd.f32 0.0, %v1190
  %v1192 = vpop.f32.mrb[0].mxu0
  %1193 = vmatprep.mubr.bf16.mxu0 0
  %1194 = vmatmul.mubr.bf16.gmra.mrb[0].mxu0 %v874
  %v1195 = vpop.f32.mrb[0].mxu0
  %v1196 = vadd.f32 0.0, %v1195
  %v1197 = vpop.f32.mrb[0].mxu0
  %v1198 = vpop.f32.mrb[0].mxu0
  %v1199 = vadd.f32 0.0, %v1198
  %v1200 = vpop.f32.mrb[0].mxu0
  %1201 = vmatprep.mubr.bf16.mxu0 0
  %1202 = vmatmul.mubr.bf16.gmra.mrb[0].mxu0 %v875
  %v1203 = vpop.f32.mrb[0].mxu0
  %v1204 = vadd.f32 0.0, %v1203
  %v1205 = vpop.f32.mrb[0].mxu0
  %v1206 = vpop.f32.mrb[0].mxu0
  %v1207 = vadd.f32 0.0, %v1206
  %v1208 = vpop.f32.mrb[0].mxu0
  %1209 = vmatprep.mubr.bf16.mxu0 0
  %1210 = vmatmul.mubr.bf16.gmra.mrb[0].mxu0 %v876
  %v1211 = vpop.f32.mrb[0].mxu0
  %v1212 = vadd.f32 0.0, %v1211
  %v1213 = vpop.f32.mrb[0].mxu0
  %v1214 = vpop.f32.mrb[0].mxu0
  %v1215 = vadd.f32 0.0, %v1214
  %v1216 = vpop.f32.mrb[0].mxu0
  %1217 = vmatprep.mubr.bf16.mxu0 0
  %1218 = vmatmul.mubr.bf16.gmra.mrb[0].mxu0 %v877
  %v1219 = vpop.f32.mrb[0].mxu0
  %v1220 = vadd.f32 0.0, %v1219
  %v1221 = vpop.f32.mrb[0].mxu0
  %v1222 = vpop.f32.mrb[0].mxu0
  %v1223 = vadd.f32 0.0, %v1222
  %v1224 = vpop.f32.mrb[0].mxu0
  %1225 = vmatprep.mubr.bf16.mxu0 0
  %1226 = vmatmul.mubr.bf16.gmra.mrb[0].mxu0 %v878
  %v1227 = vpop.f32.mrb[0].mxu0
  %v1228 = vadd.f32 0.0, %v1227
  %v1229 = vpop.f32.mrb[0].mxu0
  %v1230 = vpop.f32.mrb[0].mxu0
  %v1231 = vadd.f32 0.0, %v1230
  %v1232 = vpop.f32.mrb[0].mxu0
  %1233 = vmatprep.mubr.bf16.mxu0 0
  %1234 = vmatmul.mubr.bf16.gmra.mrb[0].mxu0 %v879
  %v1235 = vpop.f32.mrb[0].mxu0
  %v1236 = vadd.f32 0.0, %v1235
  %v1237 = vpop.f32.mrb[0].mxu0
  %v1238 = vpop.f32.mrb[0].mxu0
  %v1239 = vadd.f32 0.0, %v1238
  %v1240 = vpop.f32.mrb[0].mxu0
  %1241 = vmatprep.mubr.bf16.mxu0 0
  %1242 = vmatmul.mubr.bf16.gmra.mrb[0].mxu0 %v880
  %v1243 = vpop.f32.mrb[0].mxu0
  %v1244 = vadd.f32 0.0, %v1243
  %v1245 = vpop.f32.mrb[0].mxu0
  %v1246 = vpop.f32.mrb[0].mxu0
  %v1247 = vadd.f32 0.0, %v1246
  %v1248 = vpop.f32.mrb[0].mxu0
  %1249 = vdwg.mxu0
  %1250 = vst [vmem:[%s4] sm:$0xff] %v387
  %1251 = vst [vmem:[%s4 + $0x8] sm:$0xff] %v390
  %1252 = vst [vmem:[%s4 + $0x10] sm:$0xff] %v395
  %1253 = vst [vmem:[%s4 + $0x18] sm:$0xff] %v398
  %1254 = vst [vmem:[%s4 + $0x20] sm:$0xff] %v403
  %1255 = vst [vmem:[%s4 + $0x28] sm:$0xff] %v406
  %1256 = vst [vmem:[%s4 + $0x30] sm:$0xff] %v411
  %1257 = vst [vmem:[%s4 + $0x38] sm:$0xff] %v414
  %1258 = vst [vmem:[%s4 + $0x40] sm:$0xff] %v419
  %1259 = vst [vmem:[%s4 + $0x48] sm:$0xff] %v422
  %1260 = vst [vmem:[%s4 + $0x50] sm:$0xff] %v427
  %1261 = vst [vmem:[%s4 + $0x58] sm:$0xff] %v430
  %1262 = vst [vmem:[%s4 + $0x60] sm:$0xff] %v435
  %1263 = vst [vmem:[%s4 + $0x68] sm:$0xff] %v438
  %1264 = vst [vmem:[%s4 + $0x70] sm:$0xff] %v443
  %1265 = vst [vmem:[%s4 + $0x78] sm:$0xff] %v446
  %1266 = vst [vmem:[%s4 + $0x80] sm:$0xff] %v451
  %1267 = vst [vmem:[%s4 + $0x88] sm:$0xff] %v454
  %1268 = vst [vmem:[%s4 + $0x90] sm:$0xff] %v459
  %1269 = vst [vmem:[%s4 + $0x98] sm:$0xff] %v462
  %1270 = vst [vmem:[%s4 + $0xa0] sm:$0xff] %v467
  %1271 = vst [vmem:[%s4 + $0xa8] sm:$0xff] %v470
  %1272 = vst [vmem:[%s4 + $0xb0] sm:$0xff] %v475
  %1273 = vst [vmem:[%s4 + $0xb8] sm:$0xff] %v478
  %1274 = vst [vmem:[%s4 + $0xc0] sm:$0xff] %v483
  %1275 = vst [vmem:[%s4 + $0xc8] sm:$0xff] %v486
  %1276 = vst [vmem:[%s4 + $0xd0] sm:$0xff] %v491
  %1277 = vst [vmem:[%s4 + $0xd8] sm:$0xff] %v494
  %1278 = vst [vmem:[%s4 + $0xe0] sm:$0xff] %v499
  %1279 = vst [vmem:[%s4 + $0xe8] sm:$0xff] %v502
  %1280 = vst [vmem:[%s4 + $0xf0] sm:$0xff] %v507
  %1281 = vst [vmem:[%s4 + $0xf8] sm:$0xff] %v510
  %1282 = vst [vmem:[%s4 + $0x100] sm:$0xff] %v515
  %1283 = vst [vmem:[%s4 + $0x108] sm:$0xff] %v518
  %1284 = vst [vmem:[%s4 + $0x110] sm:$0xff] %v523
  %1285 = vst [vmem:[%s4 + $0x118] sm:$0xff] %v526
  %1286 = vst [vmem:[%s4 + $0x120] sm:$0xff] %v531
  %1287 = vst [vmem:[%s4 + $0x128] sm:$0xff] %v534
  %1288 = vst [vmem:[%s4 + $0x130] sm:$0xff] %v539
  %1289 = vst [vmem:[%s4 + $0x138] sm:$0xff] %v542
  %1290 = vst [vmem:[%s4 + $0x140] sm:$0xff] %v547
  %1291 = vst [vmem:[%s4 + $0x148] sm:$0xff] %v550
  %1292 = vst [vmem:[%s4 + $0x150] sm:$0xff] %v555
  %1293 = vst [vmem:[%s4 + $0x158] sm:$0xff] %v558
  %1294 = vst [vmem:[%s4 + $0x160] sm:$0xff] %v563
  %1295 = vst [vmem:[%s4 + $0x168] sm:$0xff] %v566
  %1296 = vst [vmem:[%s4 + $0x170] sm:$0xff] %v571
  %1297 = vst [vmem:[%s4 + $0x178] sm:$0xff] %v574
  %1298 = vst [vmem:[%s4 + $0x180] sm:$0xff] %v579
  %1299 = vst [vmem:[%s4 + $0x188] sm:$0xff] %v582
  %1300 = vst [vmem:[%s4 + $0x190] sm:$0xff] %v587
  %1301 = vst [vmem:[%s4 + $0x198] sm:$0xff] %v590
  %1302 = vst [vmem:[%s4 + $0x1a0] sm:$0xff] %v595
  %1303 = vst [vmem:[%s4 + $0x1a8] sm:$0xff] %v598
  %1304 = vst [vmem:[%s4 + $0x1b0] sm:$0xff] %v603
  %1305 = vst [vmem:[%s4 + $0x1b8] sm:$0xff] %v606
  %1306 = vst [vmem:[%s4 + $0x1c0] sm:$0xff] %v611
  %1307 = vst [vmem:[%s4 + $0x1c8] sm:$0xff] %v614
  %1308 = vst [vmem:[%s4 + $0x1d0] sm:$0xff] %v619
  %1309 = vst [vmem:[%s4 + $0x1d8] sm:$0xff] %v622
  %1310 = vst [vmem:[%s4 + $0x1e0] sm:$0xff] %v627
  %1311 = vst [vmem:[%s4 + $0x1e8] sm:$0xff] %v630
  %1312 = vst [vmem:[%s4 + $0x1f0] sm:$0xff] %v635
  %1313 = vst [vmem:[%s4 + $0x1f8] sm:$0xff] %v638
  %1314 = vst [vmem:[%s5] sm:$0xff] %v996
  %1315 = vst [vmem:[%s5 + $0x8] sm:$0xff] %v999
  %1316 = vst [vmem:[%s5 + $0x10] sm:$0xff] %v1004
  %1317 = vst [vmem:[%s5 + $0x18] sm:$0xff] %v1007
  %1318 = vst [vmem:[%s5 + $0x20] sm:$0xff] %v1012
  %1319 = vst [vmem:[%s5 + $0x28] sm:$0xff] %v1015
  %1320 = vst [vmem:[%s5 + $0x30] sm:$0xff] %v1020
  %1321 = vst [vmem:[%s5 + $0x38] sm:$0xff] %v1023
  %1322 = vst [vmem:[%s5 + $0x40] sm:$0xff] %v1028
  %1323 = vst [vmem:[%s5 + $0x48] sm:$0xff] %v1031
  %1324 = vst [vmem:[%s5 + $0x50] sm:$0xff] %v1036
  %1325 = vst [vmem:[%s5 + $0x58] sm:$0xff] %v1039
  %1326 = vst [vmem:[%s5 + $0x60] sm:$0xff] %v1044
  %1327 = vst [vmem:[%s5 + $0x68] sm:$0xff] %v1047
  %1328 = vst [vmem:[%s5 + $0x70] sm:$0xff] %v1052
  %1329 = vst [vmem:[%s5 + $0x78] sm:$0xff] %v1055
  %1330 = vst [vmem:[%s5 + $0x80] sm:$0xff] %v1060
  %1331 = vst [vmem:[%s5 + $0x88] sm:$0xff] %v1063
  %1332 = vst [vmem:[%s5 + $0x90] sm:$0xff] %v1068
  %1333 = vst [vmem:[%s5 + $0x98] sm:$0xff] %v1071
  %1334 = vst [vmem:[%s5 + $0xa0] sm:$0xff] %v1076
  %1335 = vst [vmem:[%s5 + $0xa8] sm:$0xff] %v1079
  %1336 = vst [vmem:[%s5 + $0xb0] sm:$0xff] %v1084
  %1337 = vst [vmem:[%s5 + $0xb8] sm:$0xff] %v1087
  %1338 = vst [vmem:[%s5 + $0xc0] sm:$0xff] %v1092
  %1339 = vst [vmem:[%s5 + $0xc8] sm:$0xff] %v1095
  %1340 = vst [vmem:[%s5 + $0xd0] sm:$0xff] %v1100
  %1341 = vst [vmem:[%s5 + $0xd8] sm:$0xff] %v1103
  %1342 = vst [vmem:[%s5 + $0xe0] sm:$0xff] %v1108
  %1343 = vst [vmem:[%s5 + $0xe8] sm:$0xff] %v1111
  %1344 = vst [vmem:[%s5 + $0xf0] sm:$0xff] %v1116
  %1345 = vst [vmem:[%s5 + $0xf8] sm:$0xff] %v1119
  %1346 = vst [vmem:[%s5 + $0x100] sm:$0xff] %v1124
  %1347 = vst [vmem:[%s5 + $0x108] sm:$0xff] %v1127
  %1348 = vst [vmem:[%s5 + $0x110] sm:$0xff] %v1132
  %1349 = vst [vmem:[%s5 + $0x118] sm:$0xff] %v1135
  %1350 = vst [vmem:[%s5 + $0x120] sm:$0xff] %v1140
  %1351 = vst [vmem:[%s5 + $0x128] sm:$0xff] %v1143
  %1352 = vst [vmem:[%s5 + $0x130] sm:$0xff] %v1148
  %1353 = vst [vmem:[%s5 + $0x138] sm:$0xff] %v1151
  %1354 = vst [vmem:[%s5 + $0x140] sm:$0xff] %v1156
  %1355 = vst [vmem:[%s5 + $0x148] sm:$0xff] %v1159
  %1356 = vst [vmem:[%s5 + $0x150] sm:$0xff] %v1164
  %1357 = vst [vmem:[%s5 + $0x158] sm:$0xff] %v1167
  %1358 = vst [vmem:[%s5 + $0x160] sm:$0xff] %v1172
  %1359 = vst [vmem:[%s5 + $0x168] sm:$0xff] %v1175
  %1360 = vst [vmem:[%s5 + $0x170] sm:$0xff] %v1180
  %1361 = vst [vmem:[%s5 + $0x178] sm:$0xff] %v1183
  %1362 = vst [vmem:[%s5 + $0x180] sm:$0xff] %v1188
  %1363 = vst [vmem:[%s5 + $0x188] sm:$0xff] %v1191
  %1364 = vst [vmem:[%s5 + $0x190] sm:$0xff] %v1196
  %1365 = vst [vmem:[%s5 + $0x198] sm:$0xff] %v1199
  %1366 = vst [vmem:[%s5 + $0x1a0] sm:$0xff] %v1204
  %1367 = vst [vmem:[%s5 + $0x1a8] sm:$0xff] %v1207
  %1368 = vst [vmem:[%s5 + $0x1b0] sm:$0xff] %v1212
  %1369 = vst [vmem:[%s5 + $0x1b8] sm:$0xff] %v1215
  %1370 = vst [vmem:[%s5 + $0x1c0] sm:$0xff] %v1220
  %1371 = vst [vmem:[%s5 + $0x1c8] sm:$0xff] %v1223
  %1372 = vst [vmem:[%s5 + $0x1d0] sm:$0xff] %v1228
  %1373 = vst [vmem:[%s5 + $0x1d8] sm:$0xff] %v1231
  %1374 = vst [vmem:[%s5 + $0x1e0] sm:$0xff] %v1236
  %1375 = vst [vmem:[%s5 + $0x1e8] sm:$0xff] %v1239
  %1376 = vst [vmem:[%s5 + $0x1f0] sm:$0xff] %v1244
  %1377 = vst [vmem:[%s5 + $0x1f8] sm:$0xff] %v1247
  %v1378 = vld [vmem:[%s6] sm:$0x1]
  %v1379 = vadd.f32 %v387, %v390
  %v1380 = vadd.f32 %v1379, %v395
  %v1381 = vadd.f32 %v1380, %v398
  %v1382 = vadd.f32 %v1381, %v403
  %v1383 = vadd.f32 %v1382, %v406
  %v1384 = vadd.f32 %v1383, %v411
  %v1385 = vadd.f32 %v1384, %v414
  %v1386 = vadd.f32 %v1385, %v419
  %v1387 = vadd.f32 %v1386, %v422
  %v1388 = vadd.f32 %v1387, %v427
  %v1389 = vadd.f32 %v1388, %v430
  %v1390 = vadd.f32 %v1389, %v435
  %v1391 = vadd.f32 %v1390, %v438
  %v1392 = vadd.f32 %v1391, %v443
  %v1393 = vadd.f32 %v1392, %v446
  %v1394 = vadd.f32 %v1393, %v451
  %v1395 = vadd.f32 %v1394, %v454
  %v1396 = vadd.f32 %v1395, %v459
  %v1397 = vadd.f32 %v1396, %v462
  %v1398 = vadd.f32 %v1397, %v467
  %v1399 = vadd.f32 %v1398, %v470
  %v1400 = vadd.f32 %v1399, %v475
  %v1401 = vadd.f32 %v1400, %v478
  %v1402 = vadd.f32 %v1401, %v483
  %v1403 = vadd.f32 %v1402, %v486
  %v1404 = vadd.f32 %v1403, %v491
  %v1405 = vadd.f32 %v1404, %v494
  %v1406 = vadd.f32 %v1405, %v499
  %v1407 = vadd.f32 %v1406, %v502
  %v1408 = vadd.f32 %v1407, %v507
  %v1409 = vadd.f32 %v1408, %v510
  %v1410 = vadd.f32 %v1409, %v515
  %v1411 = vadd.f32 %v1410, %v518
  %v1412 = vadd.f32 %v1411, %v523
  %v1413 = vadd.f32 %v1412, %v526
  %v1414 = vadd.f32 %v1413, %v531
  %v1415 = vadd.f32 %v1414, %v534
  %v1416 = vadd.f32 %v1415, %v539
  %v1417 = vadd.f32 %v1416, %v542
  %v1418 = vadd.f32 %v1417, %v547
  %v1419 = vadd.f32 %v1418, %v550
  %v1420 = vadd.f32 %v1419, %v555
  %v1421 = vadd.f32 %v1420, %v558
  %v1422 = vadd.f32 %v1421, %v563
  %v1423 = vadd.f32 %v1422, %v566
  %v1424 = vadd.f32 %v1423, %v571
  %v1425 = vadd.f32 %v1424, %v574
  %v1426 = vadd.f32 %v1425, %v579
  %v1427 = vadd.f32 %v1426, %v582
  %v1428 = vadd.f32 %v1427, %v587
  %v1429 = vadd.f32 %v1428, %v590
  %v1430 = vadd.f32 %v1429, %v595
  %v1431 = vadd.f32 %v1430, %v598
  %v1432 = vadd.f32 %v1431, %v603
  %v1433 = vadd.f32 %v1432, %v606
  %v1434 = vadd.f32 %v1433, %v611
  %v1435 = vadd.f32 %v1434, %v614
  %v1436 = vadd.f32 %v1435, %v619
  %v1437 = vadd.f32 %v1436, %v622
  %v1438 = vadd.f32 %v1437, %v627
  %v1439 = vadd.f32 %v1438, %v630
  %v1440 = vadd.f32 %v1439, %v635
  %v1441 = vadd.f32 %v1440, %v638
  %v1442 = vrot.slane %v1441, 4
  %v1443 = vadd.f32 %v1441, %v1442
  %v1444 = vrot.slane %v1443, 2
  %v1445 = vadd.f32 %v1443, %v1444
  %v1446 = vrot.slane %v1445, 1
  %v1447 = vadd.f32 %v1445, %v1446
  %v1448 = vadd.f32 %v1378, %v1447
  %1449 = vst [vmem:[%s6] sm:$0x1] %v1448
  %v1450 = vld [vmem:[%s7] sm:$0x1]
  %v1451 = vmul.f32 %v387, %v387
  %v1452 = vmul.f32 %v390, %v390
  %v1453 = vmul.f32 %v395, %v395
  %v1454 = vmul.f32 %v398, %v398
  %v1455 = vmul.f32 %v403, %v403
  %v1456 = vmul.f32 %v406, %v406
  %v1457 = vmul.f32 %v411, %v411
  %v1458 = vmul.f32 %v414, %v414
  %v1459 = vmul.f32 %v419, %v419
  %v1460 = vmul.f32 %v422, %v422
  %v1461 = vmul.f32 %v427, %v427
  %v1462 = vmul.f32 %v430, %v430
  %v1463 = vmul.f32 %v435, %v435
  %v1464 = vmul.f32 %v438, %v438
  %v1465 = vmul.f32 %v443, %v443
  %v1466 = vmul.f32 %v446, %v446
  %v1467 = vmul.f32 %v451, %v451
  %v1468 = vmul.f32 %v454, %v454
  %v1469 = vmul.f32 %v459, %v459
  %v1470 = vmul.f32 %v462, %v462
  %v1471 = vmul.f32 %v467, %v467
  %v1472 = vmul.f32 %v470, %v470
  %v1473 = vmul.f32 %v475, %v475
  %v1474 = vmul.f32 %v478, %v478
  %v1475 = vmul.f32 %v483, %v483
  %v1476 = vmul.f32 %v486, %v486
  %v1477 = vmul.f32 %v491, %v491
  %v1478 = vmul.f32 %v494, %v494
  %v1479 = vmul.f32 %v499, %v499
  %v1480 = vmul.f32 %v502, %v502
  %v1481 = vmul.f32 %v507, %v507
  %v1482 = vmul.f32 %v510, %v510
  %v1483 = vmul.f32 %v515, %v515
  %v1484 = vmul.f32 %v518, %v518
  %v1485 = vmul.f32 %v523, %v523
  %v1486 = vmul.f32 %v526, %v526
  %v1487 = vmul.f32 %v531, %v531
  %v1488 = vmul.f32 %v534, %v534
  %v1489 = vmul.f32 %v539, %v539
  %v1490 = vmul.f32 %v542, %v542
  %v1491 = vmul.f32 %v547, %v547
  %v1492 = vmul.f32 %v550, %v550
  %v1493 = vmul.f32 %v555, %v555
  %v1494 = vmul.f32 %v558, %v558
  %v1495 = vmul.f32 %v563, %v563
  %v1496 = vmul.f32 %v566, %v566
  %v1497 = vmul.f32 %v571, %v571
  %v1498 = vmul.f32 %v574, %v574
  %v1499 = vmul.f32 %v579, %v579
  %v1500 = vmul.f32 %v582, %v582
  %v1501 = vmul.f32 %v587, %v587
  %v1502 = vmul.f32 %v590, %v590
  %v1503 = vmul.f32 %v595, %v595
  %v1504 = vmul.f32 %v598, %v598
  %v1505 = vmul.f32 %v603, %v603
  %v1506 = vmul.f32 %v606, %v606
  %v1507 = vmul.f32 %v611, %v611
  %v1508 = vmul.f32 %v614, %v614
  %v1509 = vmul.f32 %v619, %v619
  %v1510 = vmul.f32 %v622, %v622
  %v1511 = vmul.f32 %v627, %v627
  %v1512 = vmul.f32 %v630, %v630
  %v1513 = vmul.f32 %v635, %v635
  %v1514 = vmul.f32 %v638, %v638
  %v1515 = vadd.f32 %v1451, %v1452
  %v1516 = vadd.f32 %v1515, %v1453
  %v1517 = vadd.f32 %v1516, %v1454
  %v1518 = vadd.f32 %v1517, %v1455
  %v1519 = vadd.f32 %v1518, %v1456
  %v1520 = vadd.f32 %v1519, %v1457
  %v1521 = vadd.f32 %v1520, %v1458
  %v1522 = vadd.f32 %v1521, %v1459
  %v1523 = vadd.f32 %v1522, %v1460
  %v1524 = vadd.f32 %v1523, %v1461
  %v1525 = vadd.f32 %v1524, %v1462
  %v1526 = vadd.f32 %v1525, %v1463
  %v1527 = vadd.f32 %v1526, %v1464
  %v1528 = vadd.f32 %v1527, %v1465
  %v1529 = vadd.f32 %v1528, %v1466
  %v1530 = vadd.f32 %v1529, %v1467
  %v1531 = vadd.f32 %v1530, %v1468
  %v1532 = vadd.f32 %v1531, %v1469
  %v1533 = vadd.f32 %v1532, %v1470
  %v1534 = vadd.f32 %v1533, %v1471
  %v1535 = vadd.f32 %v1534, %v1472
  %v1536 = vadd.f32 %v1535, %v1473
  %v1537 = vadd.f32 %v1536, %v1474
  %v1538 = vadd.f32 %v1537, %v1475
  %v1539 = vadd.f32 %v1538, %v1476
  %v1540 = vadd.f32 %v1539, %v1477
  %v1541 = vadd.f32 %v1540, %v1478
  %v1542 = vadd.f32 %v1541, %v1479
  %v1543 = vadd.f32 %v1542, %v1480
  %v1544 = vadd.f32 %v1543, %v1481
  %v1545 = vadd.f32 %v1544, %v1482
  %v1546 = vadd.f32 %v1545, %v1483
  %v1547 = vadd.f32 %v1546, %v1484
  %v1548 = vadd.f32 %v1547, %v1485
  %v1549 = vadd.f32 %v1548, %v1486
  %v1550 = vadd.f32 %v1549, %v1487
  %v1551 = vadd.f32 %v1550, %v1488
  %v1552 = vadd.f32 %v1551, %v1489
  %v1553 = vadd.f32 %v1552, %v1490
  %v1554 = vadd.f32 %v1553, %v1491
  %v1555 = vadd.f32 %v1554, %v1492
  %v1556 = vadd.f32 %v1555, %v1493
  %v1557 = vadd.f32 %v1556, %v1494
  %v1558 = vadd.f32 %v1557, %v1495
  %v1559 = vadd.f32 %v1558, %v1496
  %v1560 = vadd.f32 %v1559, %v1497
  %v1561 = vadd.f32 %v1560, %v1498
  %v1562 = vadd.f32 %v1561, %v1499
  %v1563 = vadd.f32 %v1562, %v1500
  %v1564 = vadd.f32 %v1563, %v1501
  %v1565 = vadd.f32 %v1564, %v1502
  %v1566 = vadd.f32 %v1565, %v1503
  %v1567 = vadd.f32 %v1566, %v1504
  %v1568 = vadd.f32 %v1567, %v1505
  %v1569 = vadd.f32 %v1568, %v1506
  %v1570 = vadd.f32 %v1569, %v1507
  %v1571 = vadd.f32 %v1570, %v1508
  %v1572 = vadd.f32 %v1571, %v1509
  %v1573 = vadd.f32 %v1572, %v1510
  %v1574 = vadd.f32 %v1573, %v1511
  %v1575 = vadd.f32 %v1574, %v1512
  %v1576 = vadd.f32 %v1575, %v1513
  %v1577 = vadd.f32 %v1576, %v1514
  %v1578 = vrot.slane %v1577, 4
  %v1579 = vadd.f32 %v1577, %v1578
  %v1580 = vrot.slane %v1579, 2
  %v1581 = vadd.f32 %v1579, %v1580
  %v1582 = vrot.slane %v1581, 1
  %v1583 = vadd.f32 %v1581, %v1582
  %v1584 = vadd.f32 %v1450, %v1583
  %1585 = vst [vmem:[%s7] sm:$0x1] %v1584
  %v1586 = vld [vmem:[%s8] sm:$0x1]
  %v1587 = vadd.f32 %v996, %v999
  %v1588 = vadd.f32 %v1587, %v1004
  %v1589 = vadd.f32 %v1588, %v1007
  %v1590 = vadd.f32 %v1589, %v1012
  %v1591 = vadd.f32 %v1590, %v1015
  %v1592 = vadd.f32 %v1591, %v1020
  %v1593 = vadd.f32 %v1592, %v1023
  %v1594 = vadd.f32 %v1593, %v1028
  %v1595 = vadd.f32 %v1594, %v1031
  %v1596 = vadd.f32 %v1595, %v1036
  %v1597 = vadd.f32 %v1596, %v1039
  %v1598 = vadd.f32 %v1597, %v1044
  %v1599 = vadd.f32 %v1598, %v1047
  %v1600 = vadd.f32 %v1599, %v1052
  %v1601 = vadd.f32 %v1600, %v1055
  %v1602 = vadd.f32 %v1601, %v1060
  %v1603 = vadd.f32 %v1602, %v1063
  %v1604 = vadd.f32 %v1603, %v1068
  %v1605 = vadd.f32 %v1604, %v1071
  %v1606 = vadd.f32 %v1605, %v1076
  %v1607 = vadd.f32 %v1606, %v1079
  %v1608 = vadd.f32 %v1607, %v1084
  %v1609 = vadd.f32 %v1608, %v1087
  %v1610 = vadd.f32 %v1609, %v1092
  %v1611 = vadd.f32 %v1610, %v1095
  %v1612 = vadd.f32 %v1611, %v1100
  %v1613 = vadd.f32 %v1612, %v1103
  %v1614 = vadd.f32 %v1613, %v1108
  %v1615 = vadd.f32 %v1614, %v1111
  %v1616 = vadd.f32 %v1615, %v1116
  %v1617 = vadd.f32 %v1616, %v1119
  %v1618 = vadd.f32 %v1617, %v1124
  %v1619 = vadd.f32 %v1618, %v1127
  %v1620 = vadd.f32 %v1619, %v1132
  %v1621 = vadd.f32 %v1620, %v1135
  %v1622 = vadd.f32 %v1621, %v1140
  %v1623 = vadd.f32 %v1622, %v1143
  %v1624 = vadd.f32 %v1623, %v1148
  %v1625 = vadd.f32 %v1624, %v1151
  %v1626 = vadd.f32 %v1625, %v1156
  %v1627 = vadd.f32 %v1626, %v1159
  %v1628 = vadd.f32 %v1627, %v1164
  %v1629 = vadd.f32 %v1628, %v1167
  %v1630 = vadd.f32 %v1629, %v1172
  %v1631 = vadd.f32 %v1630, %v1175
  %v1632 = vadd.f32 %v1631, %v1180
  %v1633 = vadd.f32 %v1632, %v1183
  %v1634 = vadd.f32 %v1633, %v1188
  %v1635 = vadd.f32 %v1634, %v1191
  %v1636 = vadd.f32 %v1635, %v1196
  %v1637 = vadd.f32 %v1636, %v1199
  %v1638 = vadd.f32 %v1637, %v1204
  %v1639 = vadd.f32 %v1638, %v1207
  %v1640 = vadd.f32 %v1639, %v1212
  %v1641 = vadd.f32 %v1640, %v1215
  %v1642 = vadd.f32 %v1641, %v1220
  %v1643 = vadd.f32 %v1642, %v1223
  %v1644 = vadd.f32 %v1643, %v1228
  %v1645 = vadd.f32 %v1644, %v1231
  %v1646 = vadd.f32 %v1645, %v1236
  %v1647 = vadd.f32 %v1646, %v1239
  %v1648 = vadd.f32 %v1647, %v1244
  %v1649 = vadd.f32 %v1648, %v1247
  %v1650 = vrot.slane %v1649, 4
  %v1651 = vadd.f32 %v1649, %v1650
  %v1652 = vrot.slane %v1651, 2
  %v1653 = vadd.f32 %v1651, %v1652
  %v1654 = vrot.slane %v1653, 1
  %v1655 = vadd.f32 %v1653, %v1654
  %v1656 = vadd.f32 %v1586, %v1655
  %1657 = vst [vmem:[%s8] sm:$0x1] %v1656
  %v1658 = vld [vmem:[%s9] sm:$0x1]
  %v1659 = vmul.f32 %v996, %v996
  %v1660 = vmul.f32 %v999, %v999
  %v1661 = vmul.f32 %v1004, %v1004
  %v1662 = vmul.f32 %v1007, %v1007
  %v1663 = vmul.f32 %v1012, %v1012
  %v1664 = vmul.f32 %v1015, %v1015
  %v1665 = vmul.f32 %v1020, %v1020
  %v1666 = vmul.f32 %v1023, %v1023
  %v1667 = vmul.f32 %v1028, %v1028
  %v1668 = vmul.f32 %v1031, %v1031
  %v1669 = vmul.f32 %v1036, %v1036
  %v1670 = vmul.f32 %v1039, %v1039
  %v1671 = vmul.f32 %v1044, %v1044
  %v1672 = vmul.f32 %v1047, %v1047
  %v1673 = vmul.f32 %v1052, %v1052
  %v1674 = vmul.f32 %v1055, %v1055
  %v1675 = vmul.f32 %v1060, %v1060
  %v1676 = vmul.f32 %v1063, %v1063
  %v1677 = vmul.f32 %v1068, %v1068
  %v1678 = vmul.f32 %v1071, %v1071
  %v1679 = vmul.f32 %v1076, %v1076
  %v1680 = vmul.f32 %v1079, %v1079
  %v1681 = vmul.f32 %v1084, %v1084
  %v1682 = vmul.f32 %v1087, %v1087
  %v1683 = vmul.f32 %v1092, %v1092
  %v1684 = vmul.f32 %v1095, %v1095
  %v1685 = vmul.f32 %v1100, %v1100
  %v1686 = vmul.f32 %v1103, %v1103
  %v1687 = vmul.f32 %v1108, %v1108
  %v1688 = vmul.f32 %v1111, %v1111
  %v1689 = vmul.f32 %v1116, %v1116
  %v1690 = vmul.f32 %v1119, %v1119
  %v1691 = vmul.f32 %v1124, %v1124
  %v1692 = vmul.f32 %v1127, %v1127
  %v1693 = vmul.f32 %v1132, %v1132
  %v1694 = vmul.f32 %v1135, %v1135
  %v1695 = vmul.f32 %v1140, %v1140
  %v1696 = vmul.f32 %v1143, %v1143
  %v1697 = vmul.f32 %v1148, %v1148
  %v1698 = vmul.f32 %v1151, %v1151
  %v1699 = vmul.f32 %v1156, %v1156
  %v1700 = vmul.f32 %v1159, %v1159
  %v1701 = vmul.f32 %v1164, %v1164
  %v1702 = vmul.f32 %v1167, %v1167
  %v1703 = vmul.f32 %v1172, %v1172
  %v1704 = vmul.f32 %v1175, %v1175
  %v1705 = vmul.f32 %v1180, %v1180
  %v1706 = vmul.f32 %v1183, %v1183
  %v1707 = vmul.f32 %v1188, %v1188
  %v1708 = vmul.f32 %v1191, %v1191
  %v1709 = vmul.f32 %v1196, %v1196
  %v1710 = vmul.f32 %v1199, %v1199
  %v1711 = vmul.f32 %v1204, %v1204
  %v1712 = vmul.f32 %v1207, %v1207
  %v1713 = vmul.f32 %v1212, %v1212
  %v1714 = vmul.f32 %v1215, %v1215
  %v1715 = vmul.f32 %v1220, %v1220
  %v1716 = vmul.f32 %v1223, %v1223
  %v1717 = vmul.f32 %v1228, %v1228
  %v1718 = vmul.f32 %v1231, %v1231
  %v1719 = vmul.f32 %v1236, %v1236
  %v1720 = vmul.f32 %v1239, %v1239
  %v1721 = vmul.f32 %v1244, %v1244
  %v1722 = vmul.f32 %v1247, %v1247
  %v1723 = vadd.f32 %v1659, %v1660
  %v1724 = vadd.f32 %v1723, %v1661
  %v1725 = vadd.f32 %v1724, %v1662
  %v1726 = vadd.f32 %v1725, %v1663
  %v1727 = vadd.f32 %v1726, %v1664
  %v1728 = vadd.f32 %v1727, %v1665
  %v1729 = vadd.f32 %v1728, %v1666
  %v1730 = vadd.f32 %v1729, %v1667
  %v1731 = vadd.f32 %v1730, %v1668
  %v1732 = vadd.f32 %v1731, %v1669
  %v1733 = vadd.f32 %v1732, %v1670
  %v1734 = vadd.f32 %v1733, %v1671
  %v1735 = vadd.f32 %v1734, %v1672
  %v1736 = vadd.f32 %v1735, %v1673
  %v1737 = vadd.f32 %v1736, %v1674
  %v1738 = vadd.f32 %v1737, %v1675
  %v1739 = vadd.f32 %v1738, %v1676
  %v1740 = vadd.f32 %v1739, %v1677
  %v1741 = vadd.f32 %v1740, %v1678
  %v1742 = vadd.f32 %v1741, %v1679
  %v1743 = vadd.f32 %v1742, %v1680
  %v1744 = vadd.f32 %v1743, %v1681
  %v1745 = vadd.f32 %v1744, %v1682
  %v1746 = vadd.f32 %v1745, %v1683
  %v1747 = vadd.f32 %v1746, %v1684
  %v1748 = vadd.f32 %v1747, %v1685
  %v1749 = vadd.f32 %v1748, %v1686
  %v1750 = vadd.f32 %v1749, %v1687
  %v1751 = vadd.f32 %v1750, %v1688
  %v1752 = vadd.f32 %v1751, %v1689
  %v1753 = vadd.f32 %v1752, %v1690
  %v1754 = vadd.f32 %v1753, %v1691
  %v1755 = vadd.f32 %v1754, %v1692
  %v1756 = vadd.f32 %v1755, %v1693
  %v1757 = vadd.f32 %v1756, %v1694
  %v1758 = vadd.f32 %v1757, %v1695
  %v1759 = vadd.f32 %v1758, %v1696
  %v1760 = vadd.f32 %v1759, %v1697
  %v1761 = vadd.f32 %v1760, %v1698
  %v1762 = vadd.f32 %v1761, %v1699
  %v1763 = vadd.f32 %v1762, %v1700
  %v1764 = vadd.f32 %v1763, %v1701
  %v1765 = vadd.f32 %v1764, %v1702
  %v1766 = vadd.f32 %v1765, %v1703
  %v1767 = vadd.f32 %v1766, %v1704
  %v1768 = vadd.f32 %v1767, %v1705
  %v1769 = vadd.f32 %v1768, %v1706
  %v1770 = vadd.f32 %v1769, %v1707
  %v1771 = vadd.f32 %v1770, %v1708
  %v1772 = vadd.f32 %v1771, %v1709
  %v1773 = vadd.f32 %v1772, %v1710
  %v1774 = vadd.f32 %v1773, %v1711
  %v1775 = vadd.f32 %v1774, %v1712
  %v1776 = vadd.f32 %v1775, %v1713
  %v1777 = vadd.f32 %v1776, %v1714
  %v1778 = vadd.f32 %v1777, %v1715
  %v1779 = vadd.f32 %v1778, %v1716
  %v1780 = vadd.f32 %v1779, %v1717
  %v1781 = vadd.f32 %v1780, %v1718
  %v1782 = vadd.f32 %v1781, %v1719
  %v1783 = vadd.f32 %v1782, %v1720
  %v1784 = vadd.f32 %v1783, %v1721
  %v1785 = vadd.f32 %v1784, %v1722
  %v1786 = vrot.slane %v1785, 4
  %v1787 = vadd.f32 %v1785, %v1786
  %v1788 = vrot.slane %v1787, 2
  %v1789 = vadd.f32 %v1787, %v1788
  %v1790 = vrot.slane %v1789, 1
  %v1791 = vadd.f32 %v1789, %v1790
  %v1792 = vadd.f32 %v1658, %v1791
  %1793 = vst [vmem:[%s9] sm:$0x1] %v1792
  // Predicated region
  $region22: #{residual_block_forward.6} parent=0 // pred_check
    _
  $region23: #{residual_block_forward.6} parent=0 // pred_check_branch
    %1795 = sbr.rel (0) target = $region25
  $region24: #{residual_block_forward.6} parent=0 // pred_region
    _
  $region25: #{residual_block_forward.6} parent=0 // pred_fallthru
    _
  // Predicated region
  $region26: #{residual_block_forward.6} parent=0 // pred_check
    _
  $region27: #{residual_block_forward.6} parent=0 // pred_check_branch
    %1797 = sbr.rel (0) target = $region29
  $region28: #{residual_block_forward.6} parent=0 // pred_region
    _
  $region29: #{residual_block_forward.6} parent=0 // pred_fallthru
    _
  // Predicated region
  $region30: #{residual_block_forward.6} parent=0 // pred_check
    _
  $region31: #{residual_block_forward.6} parent=0 // pred_check_branch
    %1799 = sbr.rel (0) target = $region33
  $region32: #{residual_block_forward.6} parent=0 // pred_region
    _
  $region33: #{residual_block_forward.6} parent=0 // pred_fallthru
    _
  // Predicated region
  $region34: #{residual_block_forward.6} parent=0 // pred_check
    _
  $region35: #{residual_block_forward.6} parent=0 // pred_check_branch
    %1801 = sbr.rel (0) target = $region37
  $region36: #{residual_block_forward.6} parent=0 // pred_region
    _
  $region37: #{residual_block_forward.6} parent=0 // pred_fallthru
    _
  // Predicated region
  $region38: #{residual_block_forward.6} parent=0 // pred_check
    _
  $region39: #{residual_block_forward.6} parent=0 // pred_check_branch
    %1803 = sbr.rel (0) target = $region41
  $region40: #{residual_block_forward.6} parent=0 // pred_region
    _
  $region41: #{residual_block_forward.6} parent=0 // pred_fallthru
    _
  // Predicated region
  $region42: #{residual_block_forward.6} parent=0 // pred_check
    _
  $region43: #{residual_block_forward.6} parent=0 // pred_check_branch
    %1805 = sbr.rel (0) target = $region45
  $region44: #{residual_block_forward.6} parent=0 // pred_region
    _
  $region45: #{residual_block_forward.6} parent=0 // pred_fallthru
    _
  // Predicated region
  $region46: #{residual_block_forward.6} parent=0 // pred_check
    _
  $region47: #{residual_block_forward.6} parent=0 // pred_check_branch
    %1807 = sbr.rel (0) target = $region49
  $region48: #{residual_block_forward.6} parent=0 // pred_region
    _
  $region49: #{residual_block_forward.6} parent=0 // pred_fallthru
    _
  // Predicated region
  $region50: #{residual_block_forward.6} parent=0 // pred_check
    _
  $region51: #{residual_block_forward.6} parent=0 // pred_check_branch
    %1809 = sbr.rel (0) target = $region53
  $region52: #{residual_block_forward.6} parent=0 // pred_region
    _
  $region53: #{residual_block_forward.6} parent=0 // pred_fallthru
    _
  // Predicated region
  $region54: #{residual_block_forward.6} parent=0 // pred_check
    _
  $region55: #{residual_block_forward.6} parent=0 // pred_check_branch
    %1811 = sbr.rel (0) target = $region57
  $region56: #{residual_block_forward.6} parent=0 // pred_region
    _
  $region57: #{residual_block_forward.6} parent=0 // pred_fallthru
    _
  // Predicated region
  $region58: #{residual_block_forward.6} parent=0 // pred_check
    _
  $region59: #{residual_block_forward.6} parent=0 // pred_check_branch
    %1813 = sbr.rel (0) target = $region61
  $region60: #{residual_block_forward.6} parent=0 // pred_region
    _
  $region61: #{residual_block_forward.6} parent=0 // pred_fallthru
    _
  // Predicated region
  $region62: #{residual_block_forward.6} parent=0 // pred_check
    _
  $region63: #{residual_block_forward.6} parent=0 // pred_check_branch
    %1815 = sbr.rel (0) target = $region65
  $region64: #{residual_block_forward.6} parent=0 // pred_region
    _
  $region65: #{residual_block_forward.6} parent=0 // pred_fallthru
    _
  // Predicated region
  $region66: #{residual_block_forward.6} parent=0 // pred_check
    _
  $region67: #{residual_block_forward.6} parent=0 // pred_check_branch
    %1817 = sbr.rel (0) target = $region69
  $region68: #{residual_block_forward.6} parent=0 // pred_region
    _
  $region69: #{residual_block_forward.6} parent=0 // pred_fallthru
    _

</llo_original>
